<compile_context>
chip_gen: v7x
topology: tpu7x:2x2x1
jax: 0.10.0
libtpu: 0.0.40
codegen_flags: <defaults>
</compile_context>

<pallas_src>
import math

import jax
import jax.numpy as jnp
from jax.experimental import pallas as pl
from jax.experimental.pallas import tpu as pltpu

BN_EPS = 1e-5


# ----------------------------------------------------------------------------
# In-kernel helpers
# ----------------------------------------------------------------------------
def _bn_cols(acc, bn_ref, eps):
    """Training-mode BatchNorm2d over the lane axis (N*H*W) of an [OC, M] tile.

    bn_ref is the packed [OC, 2] (gamma, beta) operand.  Biased variance,
    matching the PyTorch training-mode forward.
    """
    mean = jnp.mean(acc, axis=1, keepdims=True)
    cent = acc - mean
    var = jnp.mean(cent * cent, axis=1, keepdims=True)
    gb = bn_ref[...]
    return cent * jax.lax.rsqrt(var + eps) * gb[:, 0:1] + gb[:, 1:2]


def _make_conv_kernel(*, has_bias, has_bn, act, bn_eps=BN_EPS):
    """out[OC, M] = act( BN?( W[OC,K] @ patches[K,M] (+ bias) ) ).

    Ref order: w, patches, [bias], [bn packed], out.
    W / patches are bf16 (MXU operands), accumulation and epilogue are f32.
    """

    def kernel(*refs):
        it = iter(refs)
        w_ref, x_ref = next(it), next(it)
        bias_ref = next(it) if has_bias else None
        bn_ref = next(it) if has_bn else None
        o_ref = next(it)

        acc = jnp.dot(w_ref[...], x_ref[...], preferred_element_type=jnp.float32)
        if has_bias:
            acc = acc + bias_ref[...]
        if has_bn:
            acc = _bn_cols(acc, bn_ref, bn_eps)
        if act == "relu":
            acc = jnp.maximum(acc, 0.0)
        elif act == "tanh":
            acc = jnp.tanh(acc)
        o_ref[...] = acc.astype(o_ref.dtype)

    return kernel


def _make_resblock_kernel(*, inner_bn, post_bn, has_b1, has_b2, vq,
                          bn_eps=BN_EPS):
    """A whole PyTorch ResBlock (+ optional following BatchNorm2d, + optional VQ
    nearest-embedding epilogue) as ONE kernel:

        h   = ReLU( BN1?( W1 @ ReLU(patches3) (+ b1) ) )      # Conv3x3 path
        out = BNp?( W2 @ h (+ b2) + x )                       # Conv1x1 + skip
        [vq] argmin_j ||out[:, m] - E[:, j]|| ;  z_q = E[:, argmin]

    Ref order: w1, patches3, w2, x2d, [b1], [bn1], [b2], [bn_post],
               [emb_kd, emb_dk], out, [z_q, argmin].
    """

    def kernel(*refs):
        it = iter(refs)
        w1_ref, p3_ref, w2_ref, x_ref = next(it), next(it), next(it), next(it)
        b1_ref = next(it) if has_b1 else None
        bn1_ref = next(it) if inner_bn else None
        b2_ref = next(it) if has_b2 else None
        bnp_ref = next(it) if post_bn else None
        ekd_ref = next(it) if vq else None
        edk_ref = next(it) if vq else None
        o_ref = next(it)
        zq_ref = next(it) if vq else None
        am_ref = next(it) if vq else None

        # ResBlock entry ReLU fused: relu(im2col(x)) == im2col(relu(x)).
        xr = jnp.maximum(p3_ref[...], 0)
        h = jnp.dot(w1_ref[...], xr, preferred_element_type=jnp.float32)
        if has_b1:
            h = h + b1_ref[...]
        if inner_bn:
            h = _bn_cols(h, bn1_ref, bn_eps)
        h = jnp.maximum(h, 0.0)

        # 1x1 conv: no im2col needed, intermediate h never leaves the kernel.
        out = jnp.dot(w2_ref[...], h.astype(jnp.bfloat16),
                      preferred_element_type=jnp.float32)
        if has_b2:
            out = out + b2_ref[...]
        out = out + x_ref[...].astype(jnp.float32)      # residual skip
        if post_bn:
            out = _bn_cols(out, bnp_ref, bn_eps)
        o_ref[...] = out.astype(o_ref.dtype)

        if vq:
            # Nearest-embedding epilogue: z_e ("out") is already resident in
            # [d, M] layout.  Squared distances via ||w||^2 + ||z||^2 - 2 w.z;
            # the gather is a one-hot matmul on the MXU (no dynamic gather).
            wkd = ekd_ref[...]                                  # [k, d] f32
            wdk = edk_ref[...]                                  # [d, k] f32
            k = wkd.shape[0]
            wz = jnp.dot(wkd, out, preferred_element_type=jnp.float32)  # [k, M]
            w2n = jnp.sum(wkd * wkd, axis=1, keepdims=True)             # [k, 1]
            z2n = jnp.sum(out * out, axis=0, keepdims=True)             # [1, M]
            d2 = w2n + z2n - 2.0 * wz
            idx = jax.lax.broadcasted_iota(jnp.int32, d2.shape, 0
                                           ).astype(jnp.float32)
            dmin = jnp.min(d2, axis=0, keepdims=True)
            amin = jnp.min(jnp.where(d2 <= dmin, idx, float(k)),
                           axis=0, keepdims=True)        # first-min tiebreak
            am_ref[...] = amin.astype(jnp.int32)
            onehot = (idx == amin).astype(jnp.float32)                  # [k, M]
            zq_ref[...] = jnp.dot(wdk, onehot,
                                  preferred_element_type=jnp.float32)

    return kernel


# ----------------------------------------------------------------------------
# Pallas wrappers
# ----------------------------------------------------------------------------
def _dec_ct2_tiles():
    """v5e/v6e: one TensorCore -> a grid is pure per-step overhead, run a single
    VMEM-resident block.  v7x: two TensorCores -> exactly two parallel lane
    tiles so both cores get work on the only sizeable GEMM (M = 2048)."""
    try:
        kind = jax.devices()[0].device_kind.lower()
    except Exception:
        return 1
    return 2 if "v7" in kind else 1


_DEC_CT2_TILES = _dec_ct2_tiles()


def fused_conv(wmat, patches, *, bias=None, bn=None, act=None,
               out_dtype=jnp.bfloat16, tiles=1):
    """out[OC, M] = act(BN?(W[OC,K] @ patches[K,M] (+ bias)))."""
    OC, K = wmat.shape
    K2, M = patches.shape
    assert K == K2, (wmat.shape, patches.shape)

    inputs = [wmat, patches]
    if bias is not None:
        inputs.append(bias)                    # [OC, 1] f32 (pre-shaped at init)
    if bn is not None:
        inputs.append(bn)                      # [OC, 2] packed gamma/beta
    kernel = _make_conv_kernel(has_bias=bias is not None,
                               has_bn=bn is not None, act=act)
    out_shape = jax.ShapeDtypeStruct((OC, M), out_dtype)

    if bn is None and tiles > 1 and M % (tiles * 128) == 0:
        tm = M // tiles
        full = lambda j: (0, 0)
        tile = lambda j: (0, j)
        in_specs = [pl.BlockSpec((OC, K), full),       # weight: resident
                    pl.BlockSpec((K, tm), tile)]       # patches: lane tiles
        if bias is not None:
            in_specs.append(pl.BlockSpec((OC, 1), full))
        return pl.pallas_call(
            kernel,
            out_shape=out_shape,
            grid=(tiles,),
            in_specs=in_specs,
            out_specs=pl.BlockSpec((OC, tm), tile),
            compiler_params=pltpu.CompilerParams(
                dimension_semantics=("parallel",)),
        )(*inputs)

    # Single block: the whole GEMM easily fits in VMEM (largest ~1 MB).
    return pl.pallas_call(kernel, out_shape=out_shape)(*inputs)


def fused_resblock(rp, x, *, post_bn=None, vq_emb=None,
                   out_dtype=jnp.bfloat16):
    """One Pallas kernel for an entire ResBlock (+ optional post-BN / VQ).

    x: [C, N, H, W] bf16.  Biases that feed a training-mode BN are dropped
    (mathematical no-op).
    """
    C, N, H, W = x.shape
    M = N * H * W
    x2d = x.reshape(C, M)
    p3, _, _ = im2col_cnhw(x, 3, 3, 1, 1)

    inner_bn = "bn" in rp
    has_b1 = not inner_bn              # bias before the internal BN is a no-op
    has_b2 = post_bn is None           # bias before the fused post-BN is a no-op

    inputs = [rp["c1"]["w"], p3, rp["c2"]["w"], x2d]
    if has_b1:
        inputs.append(rp["c1"]["b"])
    if inner_bn:
        inputs.append(rp["bn"])
    if has_b2:
        inputs.append(rp["c2"]["b"])
    if post_bn is not None:
        inputs.append(post_bn)
    vq = vq_emb is not None
    if vq:
        inputs += [vq_emb["kd"], vq_emb["dk"]]

    kernel = _make_resblock_kernel(inner_bn=inner_bn,
                                   post_bn=post_bn is not None,
                                   has_b1=has_b1, has_b2=has_b2, vq=vq)
    if vq:
        out_shape = (jax.ShapeDtypeStruct((C, M), jnp.float32),   # z_e
                     jax.ShapeDtypeStruct((C, M), jnp.float32),   # z_q (emb)
                     jax.ShapeDtypeStruct((1, M), jnp.int32))     # argmin
        z_e, z_q, am = pl.pallas_call(kernel, out_shape=out_shape)(*inputs)
        return z_e.reshape(C, N, H, W), z_q.reshape(C, N, H, W), am[0]

    out = pl.pallas_call(
        kernel, out_shape=jax.ShapeDtypeStruct((C, M), out_dtype))(*inputs)
    return out.reshape(C, N, H, W)


# ----------------------------------------------------------------------------
# im2col in channel-major [C, N, H, W] layout (single XLA fusion, bf16)
# ----------------------------------------------------------------------------
def im2col_cnhw(x, kh, kw, stride, pad):
    """x: [C, N, H, W] -> (patches [C*kh*kw, N*OH*OW], OH, OW).

    Row ordering (c major, then kh, kw) matches torch_weight.reshape(OC, -1).
    """
    C, N, H, W = x.shape
    if pad:
        x = jnp.pad(x, ((0, 0), (0, 0), (pad, pad), (pad, pad)))
    OH = (H + 2 * pad - kh) // stride + 1
    OW = (W + 2 * pad - kw) // stride + 1
    cols = []
    for di in range(kh):
        for dj in range(kw):
            cols.append(x[:, :,
                          di:di + stride * (OH - 1) + 1:stride,
                          dj:dj + stride * (OW - 1) + 1:stride])
    patches = jnp.stack(cols, axis=1)                # [C, kh*kw, N, OH, OW]
    return patches.reshape(C * kh * kw, N * OH * OW), OH, OW


def im2col_convT_cnhw(x, kh, kw, stride, pad):
    """ConvTranspose2d(k, stride, pad) == dilate-by-stride + pad(k-1-pad) +
    stride-1 conv with the flipped/transposed kernel (weights already stored in
    that forward-conv layout)."""
    eh, ew = kh - 1 - pad, kw - 1 - pad
    cfg = ((0, 0, 0), (0, 0, 0), (eh, eh, stride - 1), (ew, ew, stride - 1))
    xd = jax.lax.pad(x, jnp.array(0.0, dtype=x.dtype), cfg)
    return im2col_cnhw(xd, kh, kw, 1, 0)


# ----------------------------------------------------------------------------
# Parameters (synthetic, stored directly in GEMM-ready bf16 layout)
# ----------------------------------------------------------------------------
def init_params(key, d, num_channels=3, k_emb=10):
    keys = iter(jax.random.split(key, 32))

    def nrm(shape, scale=0.02):
        return jax.random.normal(next(keys), shape, jnp.float32) * scale

    def conv(oc, ic, ksz):
        # PyTorch VQ_CVAE init: Conv2d weight ~ N(0, 0.02), bias = 0.
        return {"w": nrm((oc, ic * ksz * ksz)).astype(jnp.bfloat16),
                "b": jnp.zeros((oc, 1), jnp.float32)}

    def convT(ic, oc, ksz):
        # ConvTranspose2d keeps PyTorch default (uniform) init.
        bound = 1.0 / math.sqrt(ic * ksz * ksz)
        return {"w": jax.random.uniform(next(keys), (oc, ic * ksz * ksz),
                                        jnp.float32, -bound, bound
                                        ).astype(jnp.bfloat16),
                "b": jax.random.uniform(next(keys), (oc, 1), jnp.float32,
                                        -bound, bound)}

    def bn(c, gamma=1.0):
        # packed [c, 2]: col 0 = gamma, col 1 = beta
        return jnp.stack([jnp.full((c,), gamma, jnp.float32),
                          jnp.zeros((c,), jnp.float32)], axis=1)

    def resblock(c, with_bn):
        r = {"c1": conv(c, c, 3), "c2": conv(c, c, 1)}
        if with_bn:
            r["bn"] = bn(c)
        return r

    emb = nrm((d, k_emb))                       # codebook (emb_dim, num_emb)
    return {
        # encoder
        "enc_c1": conv(d, num_channels, 4), "enc_bn1": bn(d),
        "enc_c2": conv(d, d, 4),            "enc_bn2": bn(d),
        "enc_rb1": resblock(d, True),       "enc_bn3": bn(d),
        "enc_rb2": resblock(d, True),       "enc_bn4": bn(d, gamma=1.0 / 40.0),
        # codebook, both orientations built once at init (no per-call transpose)
        "emb": {"dk": emb, "kd": emb.T},
        # decoder (ResBlocks without BN, per the PyTorch module)
        "dec_rb1": resblock(d, False),      "dec_bn1": bn(d),
        "dec_rb2": resblock(d, False),
        "dec_ct1": convT(d, d, 4),          "dec_bn2": bn(d),
        "dec_ct2": convT(d, num_channels, 4),
    }


# ----------------------------------------------------------------------------
# Forward pass
# ----------------------------------------------------------------------------
def vq_cvae_forward(p, x_nchw):
    """Returns (recon, z_e, emb, argmin) like VQ_CVAE.forward."""
    d = p["enc_c1"]["w"].shape[0]
    B, num_channels, _, _ = x_nchw.shape
    # internal channel-major [C, N, H, W] bf16 activations
    x = jnp.transpose(x_nchw, (1, 0, 2, 3)).astype(jnp.bfloat16)

    # ---------------------------- encoder ----------------------------
    pt, oh, ow = im2col_cnhw(x, 4, 4, 2, 1)
    h = fused_conv(p["enc_c1"]["w"], pt, bn=p["enc_bn1"], act="relu")
    h = h.reshape(d, B, oh, ow)

    pt, oh, ow = im2col_cnhw(h, 4, 4, 2, 1)
    h = fused_conv(p["enc_c2"]["w"], pt, bn=p["enc_bn2"], act="relu")
    h = h.reshape(d, B, oh, ow)

    # ResBlock(d, d, bn=True) + following BatchNorm2d, fused into one kernel
    h = fused_resblock(p["enc_rb1"], h, post_bn=p["enc_bn3"])
    # ResBlock + BatchNorm2d + VQ nearest-embedding, all in one kernel
    z_e, z_q, amin = fused_resblock(p["enc_rb2"], h, post_bn=p["enc_bn4"],
                                    vq_emb=p["emb"])
    f = z_e.shape[-1]

    # ---------------------------- decoder ----------------------------
    h = fused_resblock(p["dec_rb1"], z_q.astype(jnp.bfloat16),
                       post_bn=p["dec_bn1"])
    h = fused_resblock(p["dec_rb2"], h)

    # ConvTranspose2d(d, d, 4, 2, 1) + BN + ReLU (one kernel)
    pt, oh, ow = im2col_convT_cnhw(h, 4, 4, 2, 1)
    h = fused_conv(p["dec_ct1"]["w"], pt, bn=p["dec_bn2"], act="relu")
    h = h.reshape(d, B, oh, ow)

    # ConvTranspose2d(d, 3, 4, 2, 1) + bias + tanh (one kernel; 2 lane tiles
    # only on v7x, single block on v5e/v6e)
    pt, oh, ow = im2col_convT_cnhw(h, 4, 4, 2, 1)
    recon = fused_conv(p["dec_ct2"]["w"], pt, bias=p["dec_ct2"]["b"],
                       act="tanh", out_dtype=jnp.float32,
                       tiles=_DEC_CT2_TILES)
    recon = recon.reshape(num_channels, B, oh, ow)

    # back to NCHW at the module boundary
    return (jnp.transpose(recon, (1, 0, 2, 3)),
            jnp.transpose(z_e, (1, 0, 2, 3)),
            jnp.transpose(z_q, (1, 0, 2, 3)),
            amin.reshape(B, f, f))


# ----------------------------------------------------------------------------
if __name__ == "__main__":
    D = 16          # VQ_CVAE(d=16, k=10)
    K_EMB = 10
    B = 2
    NUM_CH = 3
    HW = 32
    F = HW // 4     # two stride-2 convs

    key = jax.random.PRNGKey(0)
    k_params, k_x = jax.random.split(key)
    params = init_params(k_params, D, num_channels=NUM_CH, k_emb=K_EMB)
    x = jax.random.normal(k_x, (B, NUM_CH, HW, HW), jnp.float32)

    fwd = jax.jit(vq_cvae_forward)
    recon, z_e, emb, argmin = fwd(params, x)
    jax.block_until_ready((recon, z_e, emb, argmin))

    assert recon.shape == (B, NUM_CH, HW, HW)
    assert z_e.shape == (B, D, F, F)
    assert emb.shape == (B, D, F, F)
    assert argmin.shape == (B, F, F)
    assert recon.dtype == jnp.float32 and z_e.dtype == jnp.float32
    assert bool(jnp.all(jnp.isfinite(recon)))
    assert bool(jnp.all(jnp.abs(recon) <= 1.0))          # tanh output
    assert bool(jnp.all((argmin >= 0) & (argmin < K_EMB)))

    # quantized output must be codebook columns selected by argmin
    gathered = params["emb"]["dk"][:, argmin.reshape(-1)].T.reshape(B, F, F, D)
    gathered = jnp.transpose(gathered, (0, 3, 1, 2))
    assert bool(jnp.allclose(emb, gathered, atol=1e-4))

    # argmin must point at (one of) the nearest codebook entries for each z_e
    ze_flat = jnp.transpose(z_e, (0, 2, 3, 1)).reshape(-1, D)       # [B*F*F, D]
    dists = jnp.sum((ze_flat[:, :, None] - params["emb"]["dk"][None]) ** 2,
                    axis=1)                                          # [B*F*F, k]
    chosen = dists[jnp.arange(dists.shape[0]), argmin.reshape(-1)]
    assert bool(jnp.all(jnp.min(dists, axis=1) >= chosen - 1e-5))

    print("KERNEL_OK")
</pallas_src>

<mosaic_0001>
module attributes {stable_mosaic.version = 11 : i64} {
  func.func @kernel(%arg0: memref<16x48xbf16, #tpu.memory_space<vmem>>, %arg1: memref<48x512xbf16, #tpu.memory_space<vmem>>, %arg2: memref<16x2xf32, #tpu.memory_space<vmem>>, %arg3: memref<16x512xbf16, #tpu.memory_space<vmem>>) attributes {dimension_semantics = [], scalar_prefetch = 0 : i64, scratch_operands = 0 : i64, tpu.core_type = #tpu.core_type<tc>} {
    %c0 = arith.constant 0 : index
    %c0_0 = arith.constant 0 : index
    %0 = vector.load %arg0[%c0, %c0_0] : memref<16x48xbf16, #tpu.memory_space<vmem>>, vector<16x48xbf16>
    %c0_1 = arith.constant 0 : index
    %c0_2 = arith.constant 0 : index
    %1 = vector.load %arg1[%c0_1, %c0_2] : memref<48x512xbf16, #tpu.memory_space<vmem>>, vector<48x512xbf16>
    %cst = arith.constant dense<0.000000e+00> : vector<16x512xf32>
    %2 = tpu.matmul %0, %1, %cst {dimension_numbers = #tpu.dot_dimension_numbers<[1], [0], [0], [1], [0, 0, 1, 1], [], []>} : vector<16x48xbf16>, vector<48x512xbf16>, vector<16x512xf32> -> vector<16x512xf32>
    %cst_3 = arith.constant dense<0.000000e+00> : vector<16xf32>
    %3 = vector.multi_reduction <add>, %2, %cst_3 [1] : vector<16x512xf32> to vector<16xf32>
    %4 = vector.shape_cast %3 : vector<16xf32> to vector<16x1xf32>
    %cst_4 = arith.constant 5.120000e+02 : f32
    %5 = vector.broadcast %cst_4 : f32 to vector<16x1xf32>
    %6 = arith.divf %4, %5 : vector<16x1xf32>
    %7 = vector.broadcast %6 : vector<16x1xf32> to vector<16x512xf32>
    %8 = arith.subf %2, %7 : vector<16x512xf32>
    %9 = arith.mulf %8, %8 : vector<16x512xf32>
    %cst_5 = arith.constant dense<0.000000e+00> : vector<16xf32>
    %10 = vector.multi_reduction <add>, %9, %cst_5 [1] : vector<16x512xf32> to vector<16xf32>
    %11 = vector.shape_cast %10 : vector<16xf32> to vector<16x1xf32>
    %cst_6 = arith.constant 5.120000e+02 : f32
    %12 = vector.broadcast %cst_6 : f32 to vector<16x1xf32>
    %13 = arith.divf %11, %12 : vector<16x1xf32>
    %c0_7 = arith.constant 0 : index
    %c0_8 = arith.constant 0 : index
    %14 = vector.load %arg2[%c0_7, %c0_8] : memref<16x2xf32, #tpu.memory_space<vmem>>, vector<16x2xf32>
    %cst_9 = arith.constant 9.99999974E-6 : f32
    %15 = vector.broadcast %cst_9 : f32 to vector<16x1xf32>
    %16 = arith.addf %13, %15 : vector<16x1xf32>
    %17 = math.rsqrt %16 : vector<16x1xf32>
    %18 = vector.broadcast %17 : vector<16x1xf32> to vector<16x512xf32>
    %19 = arith.mulf %8, %18 : vector<16x512xf32>
    %20 = vector.extract_strided_slice %14 {offsets = [0, 0], sizes = [16, 1], strides = [1, 1]} : vector<16x2xf32> to vector<16x1xf32>
    %21 = vector.broadcast %20 : vector<16x1xf32> to vector<16x512xf32>
    %22 = arith.mulf %19, %21 : vector<16x512xf32>
    %23 = vector.extract_strided_slice %14 {offsets = [0, 1], sizes = [16, 1], strides = [1, 1]} : vector<16x2xf32> to vector<16x1xf32>
    %24 = vector.broadcast %23 : vector<16x1xf32> to vector<16x512xf32>
    %25 = arith.addf %22, %24 : vector<16x512xf32>
    %cst_10 = arith.constant 0.000000e+00 : f32
    %26 = vector.broadcast %cst_10 : f32 to vector<16x512xf32>
    %27 = arith.maximumf %25, %26 : vector<16x512xf32>
    %28 = arith.truncf %27 : vector<16x512xf32> to vector<16x512xbf16>
    %c0_11 = arith.constant 0 : index
    %c0_12 = arith.constant 0 : index
    %29 = vector.load %arg3[%c0_11, %c0_12] : memref<16x512xbf16, #tpu.memory_space<vmem>>, vector<16x512xbf16>
    tpu.vector_store %arg3[%c0_11, %c0_12], %28 {strides = array<i32>} : memref<16x512xbf16, #tpu.memory_space<vmem>>, vector<16x512xbf16>,
    return
  }
}

module attributes {stable_mosaic.version = 11 : i64} {
  func.func @kernel(%arg0: memref<16x256xbf16, #tpu.memory_space<vmem>>, %arg1: memref<256x128xbf16, #tpu.memory_space<vmem>>, %arg2: memref<16x2xf32, #tpu.memory_space<vmem>>, %arg3: memref<16x128xbf16, #tpu.memory_space<vmem>>) attributes {dimension_semantics = [], scalar_prefetch = 0 : i64, scratch_operands = 0 : i64, tpu.core_type = #tpu.core_type<tc>} {
    %c0 = arith.constant 0 : index
    %c0_0 = arith.constant 0 : index
    %0 = vector.load %arg0[%c0, %c0_0] : memref<16x256xbf16, #tpu.memory_space<vmem>>, vector<16x256xbf16>
    %c0_1 = arith.constant 0 : index
    %c0_2 = arith.constant 0 : index
    %1 = vector.load %arg1[%c0_1, %c0_2] : memref<256x128xbf16, #tpu.memory_space<vmem>>, vector<256x128xbf16>
    %cst = arith.constant dense<0.000000e+00> : vector<16x128xf32>
    %2 = tpu.matmul %0, %1, %cst {dimension_numbers = #tpu.dot_dimension_numbers<[1], [0], [0], [1], [0, 0, 1, 1], [], []>} : vector<16x256xbf16>, vector<256x128xbf16>, vector<16x128xf32> -> vector<16x128xf32>
    %cst_3 = arith.constant dense<0.000000e+00> : vector<16xf32>
    %3 = vector.multi_reduction <add>, %2, %cst_3 [1] : vector<16x128xf32> to vector<16xf32>
    %4 = vector.shape_cast %3 : vector<16xf32> to vector<16x1xf32>
    %cst_4 = arith.constant 1.280000e+02 : f32
    %5 = vector.broadcast %cst_4 : f32 to vector<16x1xf32>
    %6 = arith.divf %4, %5 : vector<16x1xf32>
    %7 = vector.broadcast %6 : vector<16x1xf32> to vector<16x128xf32>
    %8 = arith.subf %2, %7 : vector<16x128xf32>
    %9 = arith.mulf %8, %8 : vector<16x128xf32>
    %cst_5 = arith.constant dense<0.000000e+00> : vector<16xf32>
    %10 = vector.multi_reduction <add>, %9, %cst_5 [1] : vector<16x128xf32> to vector<16xf32>
    %11 = vector.shape_cast %10 : vector<16xf32> to vector<16x1xf32>
    %cst_6 = arith.constant 1.280000e+02 : f32
    %12 = vector.broadcast %cst_6 : f32 to vector<16x1xf32>
    %13 = arith.divf %11, %12 : vector<16x1xf32>
    %c0_7 = arith.constant 0 : index
    %c0_8 = arith.constant 0 : index
    %14 = vector.load %arg2[%c0_7, %c0_8] : memref<16x2xf32, #tpu.memory_space<vmem>>, vector<16x2xf32>
    %cst_9 = arith.constant 9.99999974E-6 : f32
    %15 = vector.broadcast %cst_9 : f32 to vector<16x1xf32>
    %16 = arith.addf %13, %15 : vector<16x1xf32>
    %17 = math.rsqrt %16 : vector<16x1xf32>
    %18 = vector.broadcast %17 : vector<16x1xf32> to vector<16x128xf32>
    %19 = arith.mulf %8, %18 : vector<16x128xf32>
    %20 = vector.extract_strided_slice %14 {offsets = [0, 0], sizes = [16, 1], strides = [1, 1]} : vector<16x2xf32> to vector<16x1xf32>
    %21 = vector.broadcast %20 : vector<16x1xf32> to vector<16x128xf32>
    %22 = arith.mulf %19, %21 : vector<16x128xf32>
    %23 = vector.extract_strided_slice %14 {offsets = [0, 1], sizes = [16, 1], strides = [1, 1]} : vector<16x2xf32> to vector<16x1xf32>
    %24 = vector.broadcast %23 : vector<16x1xf32> to vector<16x128xf32>
    %25 = arith.addf %22, %24 : vector<16x128xf32>
    %cst_10 = arith.constant 0.000000e+00 : f32
    %26 = vector.broadcast %cst_10 : f32 to vector<16x128xf32>
    %27 = arith.maximumf %25, %26 : vector<16x128xf32>
    %28 = arith.truncf %27 : vector<16x128xf32> to vector<16x128xbf16>
    %c0_11 = arith.constant 0 : index
    %c0_12 = arith.constant 0 : index
    %29 = vector.load %arg3[%c0_11, %c0_12] : memref<16x128xbf16, #tpu.memory_space<vmem>>, vector<16x128xbf16>
    tpu.vector_store %arg3[%c0_11, %c0_12], %28 {strides = array<i32>} : memref<16x128xbf16, #tpu.memory_space<vmem>>, vector<16x128xbf16>,
    return
  }
}

module attributes {stable_mosaic.version = 11 : i64} {
  func.func @kernel(%arg0: memref<16x144xbf16, #tpu.memory_space<vmem>>, %arg1: memref<144x128xbf16, #tpu.memory_space<vmem>>, %arg2: memref<16x16xbf16, #tpu.memory_space<vmem>>, %arg3: memref<16x128xbf16, #tpu.memory_space<vmem>>, %arg4: memref<16x2xf32, #tpu.memory_space<vmem>>, %arg5: memref<16x2xf32, #tpu.memory_space<vmem>>, %arg6: memref<16x128xbf16, #tpu.memory_space<vmem>>) attributes {dimension_semantics = [], scalar_prefetch = 0 : i64, scratch_operands = 0 : i64, tpu.core_type = #tpu.core_type<tc>} {
    %c0 = arith.constant 0 : index
    %c0_0 = arith.constant 0 : index
    %0 = vector.load %arg1[%c0, %c0_0] : memref<144x128xbf16, #tpu.memory_space<vmem>>, vector<144x128xbf16>
    %cst = arith.constant 0.000000e+00 : bf16
    %1 = vector.broadcast %cst : bf16 to vector<144x128xbf16>
    %2 = arith.maximumf %0, %1 : vector<144x128xbf16>
    %c0_1 = arith.constant 0 : index
    %c0_2 = arith.constant 0 : index
    %3 = vector.load %arg0[%c0_1, %c0_2] : memref<16x144xbf16, #tpu.memory_space<vmem>>, vector<16x144xbf16>
    %cst_3 = arith.constant dense<0.000000e+00> : vector<16x128xf32>
    %4 = tpu.matmul %3, %2, %cst_3 {dimension_numbers = #tpu.dot_dimension_numbers<[1], [0], [0], [1], [0, 0, 1, 1], [], []>} : vector<16x144xbf16>, vector<144x128xbf16>, vector<16x128xf32> -> vector<16x128xf32>
    %cst_4 = arith.constant dense<0.000000e+00> : vector<16xf32>
    %5 = vector.multi_reduction <add>, %4, %cst_4 [1] : vector<16x128xf32> to vector<16xf32>
    %6 = vector.shape_cast %5 : vector<16xf32> to vector<16x1xf32>
    %cst_5 = arith.constant 1.280000e+02 : f32
    %7 = vector.broadcast %cst_5 : f32 to vector<16x1xf32>
    %8 = arith.divf %6, %7 : vector<16x1xf32>
    %9 = vector.broadcast %8 : vector<16x1xf32> to vector<16x128xf32>
    %10 = arith.subf %4, %9 : vector<16x128xf32>
    %11 = arith.mulf %10, %10 : vector<16x128xf32>
    %cst_6 = arith.constant dense<0.000000e+00> : vector<16xf32>
    %12 = vector.multi_reduction <add>, %11, %cst_6 [1] : vector<16x128xf32> to vector<16xf32>
    %13 = vector.shape_cast %12 : vector<16xf32> to vector<16x1xf32>
    %cst_7 = arith.constant 1.280000e+02 : f32
    %14 = vector.broadcast %cst_7 : f32 to vector<16x1xf32>
    %15 = arith.divf %13, %14 : vector<16x1xf32>
    %c0_8 = arith.constant 0 : index
    %c0_9 = arith.constant 0 : index
    %16 = vector.load %arg4[%c0_8, %c0_9] : memref<16x2xf32, #tpu.memory_space<vmem>>, vector<16x2xf32>
    %cst_10 = arith.constant 9.99999974E-6 : f32
    %17 = vector.broadcast %cst_10 : f32 to vector<16x1xf32>
    %18 = arith.addf %15, %17 : vector<16x1xf32>
    %19 = math.rsqrt %18 : vector<16x1xf32>
    %20 = vector.broadcast %19 : vector<16x1xf32> to vector<16x128xf32>
    %21 = arith.mulf %10, %20 : vector<16x128xf32>
    %22 = vector.extract_strided_slice %16 {offsets = [0, 0], sizes = [16, 1], strides = [1, 1]} : vector<16x2xf32> to vector<16x1xf32>
    %23 = vector.broadcast %22 : vector<16x1xf32> to vector<16x128xf32>
    %24 = arith.mulf %21, %23 : vector<16x128xf32>
    %25 = vector.extract_strided_slice %16 {offsets = [0, 1], sizes = [16, 1], strides = [1, 1]} : vector<16x2xf32> to vector<16x1xf32>
    %26 = vector.broadcast %25 : vector<16x1xf32> to vector<16x128xf32>
    %27 = arith.addf %24, %26 : vector<16x128xf32>
    %cst_11 = arith.constant 0.000000e+00 : f32
    %28 = vector.broadcast %cst_11 : f32 to vector<16x128xf32>
    %29 = arith.maximumf %27, %28 : vector<16x128xf32>
    %c0_12 = arith.constant 0 : index
    %c0_13 = arith.constant 0 : index
    %30 = vector.load %arg2[%c0_12, %c0_13] : memref<16x16xbf16, #tpu.memory_space<vmem>>, vector<16x16xbf16>
    %31 = arith.truncf %29 : vector<16x128xf32> to vector<16x128xbf16>
    %cst_14 = arith.constant dense<0.000000e+00> : vector<16x128xf32>
    %32 = tpu.matmul %30, %31, %cst_14 {dimension_numbers = #tpu.dot_dimension_numbers<[1], [0], [0], [1], [0, 0, 1, 1], [], []>} : vector<16x16xbf16>, vector<16x128xbf16>, vector<16x128xf32> -> vector<16x128xf32>
    %c0_15 = arith.constant 0 : index
    %c0_16 = arith.constant 0 : index
    %33 = vector.load %arg3[%c0_15, %c0_16] : memref<16x128xbf16, #tpu.memory_space<vmem>>, vector<16x128xbf16>
    %34 = arith.extf %33 : vector<16x128xbf16> to vector<16x128xf32>
    %35 = arith.addf %32, %34 : vector<16x128xf32>
    %cst_17 = arith.constant dense<0.000000e+00> : vector<16xf32>
    %36 = vector.multi_reduction <add>, %35, %cst_17 [1] : vector<16x128xf32> to vector<16xf32>
    %37 = vector.shape_cast %36 : vector<16xf32> to vector<16x1xf32>
    %cst_18 = arith.constant 1.280000e+02 : f32
    %38 = vector.broadcast %cst_18 : f32 to vector<16x1xf32>
    %39 = arith.divf %37, %38 : vector<16x1xf32>
    %40 = vector.broadcast %39 : vector<16x1xf32> to vector<16x128xf32>
    %41 = arith.subf %35, %40 : vector<16x128xf32>
    %42 = arith.mulf %41, %41 : vector<16x128xf32>
    %cst_19 = arith.constant dense<0.000000e+00> : vector<16xf32>
    %43 = vector.multi_reduction <add>, %42, %cst_19 [1] : vector<16x128xf32> to vector<16xf32>
    %44 = vector.shape_cast %43 : vector<16xf32> to vector<16x1xf32>
    %cst_20 = arith.constant 1.280000e+02 : f32
    %45 = vector.broadcast %cst_20 : f32 to vector<16x1xf32>
    %46 = arith.divf %44, %45 : vector<16x1xf32>
    %c0_21 = arith.constant 0 : index
    %c0_22 = arith.constant 0 : index
    %47 = vector.load %arg5[%c0_21, %c0_22] : memref<16x2xf32, #tpu.memory_space<vmem>>, vector<16x2xf32>
    %cst_23 = arith.constant 9.99999974E-6 : f32
    %48 = vector.broadcast %cst_23 : f32 to vector<16x1xf32>
    %49 = arith.addf %46, %48 : vector<16x1xf32>
    %50 = math.rsqrt %49 : vector<16x1xf32>
    %51 = vector.broadcast %50 : vector<16x1xf32> to vector<16x128xf32>
    %52 = arith.mulf %41, %51 : vector<16x128xf32>
    %53 = vector.extract_strided_slice %47 {offsets = [0, 0], sizes = [16, 1], strides = [1, 1]} : vector<16x2xf32> to vector<16x1xf32>
    %54 = vector.broadcast %53 : vector<16x1xf32> to vector<16x128xf32>
    %55 = arith.mulf %52, %54 : vector<16x128xf32>
    %56 = vector.extract_strided_slice %47 {offsets = [0, 1], sizes = [16, 1], strides = [1, 1]} : vector<16x2xf32> to vector<16x1xf32>
    %57 = vector.broadcast %56 : vector<16x1xf32> to vector<16x128xf32>
    %58 = arith.addf %55, %57 : vector<16x128xf32>
    %59 = arith.truncf %58 : vector<16x128xf32> to vector<16x128xbf16>
    %c0_24 = arith.constant 0 : index
    %c0_25 = arith.constant 0 : index
    %60 = vector.load %arg6[%c0_24, %c0_25] : memref<16x128xbf16, #tpu.memory_space<vmem>>, vector<16x128xbf16>
    tpu.vector_store %arg6[%c0_24, %c0_25], %59 {strides = array<i32>} : memref<16x128xbf16, #tpu.memory_space<vmem>>, vector<16x128xbf16>,
    return
  }
}

module attributes {stable_mosaic.version = 11 : i64} {
  func.func @kernel(%arg0: memref<16x144xbf16, #tpu.memory_space<vmem>>, %arg1: memref<144x128xbf16, #tpu.memory_space<vmem>>, %arg2: memref<16x16xbf16, #tpu.memory_space<vmem>>, %arg3: memref<16x128xbf16, #tpu.memory_space<vmem>>, %arg4: memref<16x2xf32, #tpu.memory_space<vmem>>, %arg5: memref<16x2xf32, #tpu.memory_space<vmem>>, %arg6: memref<10x16xf32, #tpu.memory_space<vmem>>, %arg7: memref<16x10xf32, #tpu.memory_space<vmem>>, %arg8: memref<16x128xf32, #tpu.memory_space<vmem>>, %arg9: memref<16x128xf32, #tpu.memory_space<vmem>>, %arg10: memref<1x128xi32, #tpu.memory_space<vmem>>) attributes {dimension_semantics = [], scalar_prefetch = 0 : i64, scratch_operands = 0 : i64, tpu.core_type = #tpu.core_type<tc>} {
    %c0 = arith.constant 0 : index
    %c0_0 = arith.constant 0 : index
    %0 = vector.load %arg1[%c0, %c0_0] : memref<144x128xbf16, #tpu.memory_space<vmem>>, vector<144x128xbf16>
    %cst = arith.constant 0.000000e+00 : bf16
    %1 = vector.broadcast %cst : bf16 to vector<144x128xbf16>
    %2 = arith.maximumf %0, %1 : vector<144x128xbf16>
    %c0_1 = arith.constant 0 : index
    %c0_2 = arith.constant 0 : index
    %3 = vector.load %arg0[%c0_1, %c0_2] : memref<16x144xbf16, #tpu.memory_space<vmem>>, vector<16x144xbf16>
    %cst_3 = arith.constant dense<0.000000e+00> : vector<16x128xf32>
    %4 = tpu.matmul %3, %2, %cst_3 {dimension_numbers = #tpu.dot_dimension_numbers<[1], [0], [0], [1], [0, 0, 1, 1], [], []>} : vector<16x144xbf16>, vector<144x128xbf16>, vector<16x128xf32> -> vector<16x128xf32>
    %cst_4 = arith.constant dense<0.000000e+00> : vector<16xf32>
    %5 = vector.multi_reduction <add>, %4, %cst_4 [1] : vector<16x128xf32> to vector<16xf32>
    %6 = vector.shape_cast %5 : vector<16xf32> to vector<16x1xf32>
    %cst_5 = arith.constant 1.280000e+02 : f32
    %7 = vector.broadcast %cst_5 : f32 to vector<16x1xf32>
    %8 = arith.divf %6, %7 : vector<16x1xf32>
    %9 = vector.broadcast %8 : vector<16x1xf32> to vector<16x128xf32>
    %10 = arith.subf %4, %9 : vector<16x128xf32>
    %11 = arith.mulf %10, %10 : vector<16x128xf32>
    %cst_6 = arith.constant dense<0.000000e+00> : vector<16xf32>
    %12 = vector.multi_reduction <add>, %11, %cst_6 [1] : vector<16x128xf32> to vector<16xf32>
    %13 = vector.shape_cast %12 : vector<16xf32> to vector<16x1xf32>
    %cst_7 = arith.constant 1.280000e+02 : f32
    %14 = vector.broadcast %cst_7 : f32 to vector<16x1xf32>
    %15 = arith.divf %13, %14 : vector<16x1xf32>
    %c0_8 = arith.constant 0 : index
    %c0_9 = arith.constant 0 : index
    %16 = vector.load %arg4[%c0_8, %c0_9] : memref<16x2xf32, #tpu.memory_space<vmem>>, vector<16x2xf32>
    %cst_10 = arith.constant 9.99999974E-6 : f32
    %17 = vector.broadcast %cst_10 : f32 to vector<16x1xf32>
    %18 = arith.addf %15, %17 : vector<16x1xf32>
    %19 = math.rsqrt %18 : vector<16x1xf32>
    %20 = vector.broadcast %19 : vector<16x1xf32> to vector<16x128xf32>
    %21 = arith.mulf %10, %20 : vector<16x128xf32>
    %22 = vector.extract_strided_slice %16 {offsets = [0, 0], sizes = [16, 1], strides = [1, 1]} : vector<16x2xf32> to vector<16x1xf32>
    %23 = vector.broadcast %22 : vector<16x1xf32> to vector<16x128xf32>
    %24 = arith.mulf %21, %23 : vector<16x128xf32>
    %25 = vector.extract_strided_slice %16 {offsets = [0, 1], sizes = [16, 1], strides = [1, 1]} : vector<16x2xf32> to vector<16x1xf32>
    %26 = vector.broadcast %25 : vector<16x1xf32> to vector<16x128xf32>
    %27 = arith.addf %24, %26 : vector<16x128xf32>
    %cst_11 = arith.constant 0.000000e+00 : f32
    %28 = vector.broadcast %cst_11 : f32 to vector<16x128xf32>
    %29 = arith.maximumf %27, %28 : vector<16x128xf32>
    %c0_12 = arith.constant 0 : index
    %c0_13 = arith.constant 0 : index
    %30 = vector.load %arg2[%c0_12, %c0_13] : memref<16x16xbf16, #tpu.memory_space<vmem>>, vector<16x16xbf16>
    %31 = arith.truncf %29 : vector<16x128xf32> to vector<16x128xbf16>
    %cst_14 = arith.constant dense<0.000000e+00> : vector<16x128xf32>
    %32 = tpu.matmul %30, %31, %cst_14 {dimension_numbers = #tpu.dot_dimension_numbers<[1], [0], [0], [1], [0, 0, 1, 1], [], []>} : vector<16x16xbf16>, vector<16x128xbf16>, vector<16x128xf32> -> vector<16x128xf32>
    %c0_15 = arith.constant 0 : index
    %c0_16 = arith.constant 0 : index
    %33 = vector.load %arg3[%c0_15, %c0_16] : memref<16x128xbf16, #tpu.memory_space<vmem>>, vector<16x128xbf16>
    %34 = arith.extf %33 : vector<16x128xbf16> to vector<16x128xf32>
    %35 = arith.addf %32, %34 : vector<16x128xf32>
    %cst_17 = arith.constant dense<0.000000e+00> : vector<16xf32>
    %36 = vector.multi_reduction <add>, %35, %cst_17 [1] : vector<16x128xf32> to vector<16xf32>
    %37 = vector.shape_cast %36 : vector<16xf32> to vector<16x1xf32>
    %cst_18 = arith.constant 1.280000e+02 : f32
    %38 = vector.broadcast %cst_18 : f32 to vector<16x1xf32>
    %39 = arith.divf %37, %38 : vector<16x1xf32>
    %40 = vector.broadcast %39 : vector<16x1xf32> to vector<16x128xf32>
    %41 = arith.subf %35, %40 : vector<16x128xf32>
    %42 = arith.mulf %41, %41 : vector<16x128xf32>
    %cst_19 = arith.constant dense<0.000000e+00> : vector<16xf32>
    %43 = vector.multi_reduction <add>, %42, %cst_19 [1] : vector<16x128xf32> to vector<16xf32>
    %44 = vector.shape_cast %43 : vector<16xf32> to vector<16x1xf32>
    %cst_20 = arith.constant 1.280000e+02 : f32
    %45 = vector.broadcast %cst_20 : f32 to vector<16x1xf32>
    %46 = arith.divf %44, %45 : vector<16x1xf32>
    %c0_21 = arith.constant 0 : index
    %c0_22 = arith.constant 0 : index
    %47 = vector.load %arg5[%c0_21, %c0_22] : memref<16x2xf32, #tpu.memory_space<vmem>>, vector<16x2xf32>
    %cst_23 = arith.constant 9.99999974E-6 : f32
    %48 = vector.broadcast %cst_23 : f32 to vector<16x1xf32>
    %49 = arith.addf %46, %48 : vector<16x1xf32>
    %50 = math.rsqrt %49 : vector<16x1xf32>
    %51 = vector.broadcast %50 : vector<16x1xf32> to vector<16x128xf32>
    %52 = arith.mulf %41, %51 : vector<16x128xf32>
    %53 = vector.extract_strided_slice %47 {offsets = [0, 0], sizes = [16, 1], strides = [1, 1]} : vector<16x2xf32> to vector<16x1xf32>
    %54 = vector.broadcast %53 : vector<16x1xf32> to vector<16x128xf32>
    %55 = arith.mulf %52, %54 : vector<16x128xf32>
    %56 = vector.extract_strided_slice %47 {offsets = [0, 1], sizes = [16, 1], strides = [1, 1]} : vector<16x2xf32> to vector<16x1xf32>
    %57 = vector.broadcast %56 : vector<16x1xf32> to vector<16x128xf32>
    %58 = arith.addf %55, %57 : vector<16x128xf32>
    %c0_24 = arith.constant 0 : index
    %c0_25 = arith.constant 0 : index
    %59 = vector.load %arg8[%c0_24, %c0_25] : memref<16x128xf32, #tpu.memory_space<vmem>>, vector<16x128xf32>
    tpu.vector_store %arg8[%c0_24, %c0_25], %58 {strides = array<i32>} : memref<16x128xf32, #tpu.memory_space<vmem>>, vector<16x128xf32>,
    %c0_26 = arith.constant 0 : index
    %c0_27 = arith.constant 0 : index
    %60 = vector.load %arg6[%c0_26, %c0_27] : memref<10x16xf32, #tpu.memory_space<vmem>>, vector<10x16xf32>
    %c0_28 = arith.constant 0 : index
    %c0_29 = arith.constant 0 : index
    %61 = vector.load %arg7[%c0_28, %c0_29] : memref<16x10xf32, #tpu.memory_space<vmem>>, vector<16x10xf32>
    %cst_30 = arith.constant dense<0.000000e+00> : vector<10x128xf32>
    %62 = tpu.matmul %60, %58, %cst_30 {dimension_numbers = #tpu.dot_dimension_numbers<[1], [0], [0], [1], [0, 0, 1, 1], [], []>} : vector<10x16xf32>, vector<16x128xf32>, vector<10x128xf32> -> vector<10x128xf32>
    %63 = arith.mulf %60, %60 : vector<10x16xf32>
    %cst_31 = arith.constant dense<0.000000e+00> : vector<10xf32>
    %64 = vector.multi_reduction <add>, %63, %cst_31 [1] : vector<10x16xf32> to vector<10xf32>
    %65 = vector.shape_cast %64 : vector<10xf32> to vector<10x1xf32>
    %66 = arith.mulf %58, %58 : vector<16x128xf32>
    %cst_32 = arith.constant dense<0.000000e+00> : vector<128xf32>
    %67 = vector.multi_reduction <add>, %66, %cst_32 [0] : vector<16x128xf32> to vector<128xf32>
    %68 = vector.shape_cast %67 : vector<128xf32> to vector<1x128xf32>
    %69 = vector.broadcast %65 : vector<10x1xf32> to vector<10x128xf32>
    %70 = vector.broadcast %68 : vector<1x128xf32> to vector<10x128xf32>
    %71 = arith.addf %69, %70 : vector<10x128xf32>
    %cst_33 = arith.constant 2.000000e+00 : f32
    %72 = vector.broadcast %cst_33 : f32 to vector<10x128xf32>
    %73 = arith.mulf %72, %62 : vector<10x128xf32>
    %74 = arith.subf %71, %73 : vector<10x128xf32>
    %75 = tpu.iota {dimensions = array<i32: 0>} : vector<10x128xi32>
    %76 = arith.sitofp %75 : vector<10x128xi32> to vector<10x128xf32>
    %cst_34 = arith.constant dense<0x7F800000> : vector<128xf32>
    %77 = vector.multi_reduction <minimumf>, %74, %cst_34 [0] : vector<10x128xf32> to vector<128xf32>
    %78 = vector.shape_cast %77 : vector<128xf32> to vector<1x128xf32>
    %79 = vector.broadcast %78 : vector<1x128xf32> to vector<10x128xf32>
    %80 = arith.cmpf ole, %74, %79 : vector<10x128xf32>
    %cst_35 = arith.constant 1.000000e+01 : f32
    %81 = vector.broadcast %cst_35 : f32 to vector<10x128xf32>
    %82 = arith.select %80, %76, %81 : vector<10x128xi1>, vector<10x128xf32>
    %cst_36 = arith.constant dense<0x7F800000> : vector<128xf32>
    %83 = vector.multi_reduction <minimumf>, %82, %cst_36 [0] : vector<10x128xf32> to vector<128xf32>
    %84 = vector.shape_cast %83 : vector<128xf32> to vector<1x128xf32>
    %85 = arith.fptosi %84 : vector<1x128xf32> to vector<1x128xi32>
    %c0_37 = arith.constant 0 : index
    %c0_38 = arith.constant 0 : index
    %86 = vector.load %arg10[%c0_37, %c0_38] : memref<1x128xi32, #tpu.memory_space<vmem>>, vector<1x128xi32>
    tpu.vector_store %arg10[%c0_37, %c0_38], %85 {strides = array<i32>} : memref<1x128xi32, #tpu.memory_space<vmem>>, vector<1x128xi32>,
    %87 = vector.broadcast %84 : vector<1x128xf32> to vector<10x128xf32>
    %88 = arith.cmpf oeq, %76, %87 : vector<10x128xf32>
    %89 = arith.extui %88 : vector<10x128xi1> to vector<10x128xi32>
    %90 = arith.sitofp %89 : vector<10x128xi32> to vector<10x128xf32>
    %cst_39 = arith.constant dense<0.000000e+00> : vector<16x128xf32>
    %91 = tpu.matmul %61, %90, %cst_39 {dimension_numbers = #tpu.dot_dimension_numbers<[1], [0], [0], [1], [0, 0, 1, 1], [], []>} : vector<16x10xf32>, vector<10x128xf32>, vector<16x128xf32> -> vector<16x128xf32>
    %c0_40 = arith.constant 0 : index
    %c0_41 = arith.constant 0 : index
    %92 = vector.load %arg9[%c0_40, %c0_41] : memref<16x128xf32, #tpu.memory_space<vmem>>, vector<16x128xf32>
    tpu.vector_store %arg9[%c0_40, %c0_41], %91 {strides = array<i32>} : memref<16x128xf32, #tpu.memory_space<vmem>>, vector<16x128xf32>,
    return
  }
}

module attributes {stable_mosaic.version = 11 : i64} {
  func.func @kernel(%arg0: memref<16x144xbf16, #tpu.memory_space<vmem>>, %arg1: memref<144x128xbf16, #tpu.memory_space<vmem>>, %arg2: memref<16x16xbf16, #tpu.memory_space<vmem>>, %arg3: memref<16x128xbf16, #tpu.memory_space<vmem>>, %arg4: memref<16x1xf32, #tpu.memory_space<vmem>>, %arg5: memref<16x2xf32, #tpu.memory_space<vmem>>, %arg6: memref<16x128xbf16, #tpu.memory_space<vmem>>) attributes {dimension_semantics = [], scalar_prefetch = 0 : i64, scratch_operands = 0 : i64, tpu.core_type = #tpu.core_type<tc>} {
    %c0 = arith.constant 0 : index
    %c0_0 = arith.constant 0 : index
    %0 = vector.load %arg1[%c0, %c0_0] : memref<144x128xbf16, #tpu.memory_space<vmem>>, vector<144x128xbf16>
    %cst = arith.constant 0.000000e+00 : bf16
    %1 = vector.broadcast %cst : bf16 to vector<144x128xbf16>
    %2 = arith.maximumf %0, %1 : vector<144x128xbf16>
    %c0_1 = arith.constant 0 : index
    %c0_2 = arith.constant 0 : index
    %3 = vector.load %arg0[%c0_1, %c0_2] : memref<16x144xbf16, #tpu.memory_space<vmem>>, vector<16x144xbf16>
    %cst_3 = arith.constant dense<0.000000e+00> : vector<16x128xf32>
    %4 = tpu.matmul %3, %2, %cst_3 {dimension_numbers = #tpu.dot_dimension_numbers<[1], [0], [0], [1], [0, 0, 1, 1], [], []>} : vector<16x144xbf16>, vector<144x128xbf16>, vector<16x128xf32> -> vector<16x128xf32>
    %c0_4 = arith.constant 0 : index
    %c0_5 = arith.constant 0 : index
    %5 = vector.load %arg4[%c0_4, %c0_5] : memref<16x1xf32, #tpu.memory_space<vmem>>, vector<16x1xf32>
    %6 = vector.broadcast %5 : vector<16x1xf32> to vector<16x128xf32>
    %7 = arith.addf %4, %6 : vector<16x128xf32>
    %cst_6 = arith.constant 0.000000e+00 : f32
    %8 = vector.broadcast %cst_6 : f32 to vector<16x128xf32>
    %9 = arith.maximumf %7, %8 : vector<16x128xf32>
    %c0_7 = arith.constant 0 : index
    %c0_8 = arith.constant 0 : index
    %10 = vector.load %arg2[%c0_7, %c0_8] : memref<16x16xbf16, #tpu.memory_space<vmem>>, vector<16x16xbf16>
    %11 = arith.truncf %9 : vector<16x128xf32> to vector<16x128xbf16>
    %cst_9 = arith.constant dense<0.000000e+00> : vector<16x128xf32>
    %12 = tpu.matmul %10, %11, %cst_9 {dimension_numbers = #tpu.dot_dimension_numbers<[1], [0], [0], [1], [0, 0, 1, 1], [], []>} : vector<16x16xbf16>, vector<16x128xbf16>, vector<16x128xf32> -> vector<16x128xf32>
    %c0_10 = arith.constant 0 : index
    %c0_11 = arith.constant 0 : index
    %13 = vector.load %arg3[%c0_10, %c0_11] : memref<16x128xbf16, #tpu.memory_space<vmem>>, vector<16x128xbf16>
    %14 = arith.extf %13 : vector<16x128xbf16> to vector<16x128xf32>
    %15 = arith.addf %12, %14 : vector<16x128xf32>
    %cst_12 = arith.constant dense<0.000000e+00> : vector<16xf32>
    %16 = vector.multi_reduction <add>, %15, %cst_12 [1] : vector<16x128xf32> to vector<16xf32>
    %17 = vector.shape_cast %16 : vector<16xf32> to vector<16x1xf32>
    %cst_13 = arith.constant 1.280000e+02 : f32
    %18 = vector.broadcast %cst_13 : f32 to vector<16x1xf32>
    %19 = arith.divf %17, %18 : vector<16x1xf32>
    %20 = vector.broadcast %19 : vector<16x1xf32> to vector<16x128xf32>
    %21 = arith.subf %15, %20 : vector<16x128xf32>
    %22 = arith.mulf %21, %21 : vector<16x128xf32>
    %cst_14 = arith.constant dense<0.000000e+00> : vector<16xf32>
    %23 = vector.multi_reduction <add>, %22, %cst_14 [1] : vector<16x128xf32> to vector<16xf32>
    %24 = vector.shape_cast %23 : vector<16xf32> to vector<16x1xf32>
    %cst_15 = arith.constant 1.280000e+02 : f32
    %25 = vector.broadcast %cst_15 : f32 to vector<16x1xf32>
    %26 = arith.divf %24, %25 : vector<16x1xf32>
    %c0_16 = arith.constant 0 : index
    %c0_17 = arith.constant 0 : index
    %27 = vector.load %arg5[%c0_16, %c0_17] : memref<16x2xf32, #tpu.memory_space<vmem>>, vector<16x2xf32>
    %cst_18 = arith.constant 9.99999974E-6 : f32
    %28 = vector.broadcast %cst_18 : f32 to vector<16x1xf32>
    %29 = arith.addf %26, %28 : vector<16x1xf32>
    %30 = math.rsqrt %29 : vector<16x1xf32>
    %31 = vector.broadcast %30 : vector<16x1xf32> to vector<16x128xf32>
    %32 = arith.mulf %21, %31 : vector<16x128xf32>
    %33 = vector.extract_strided_slice %27 {offsets = [0, 0], sizes = [16, 1], strides = [1, 1]} : vector<16x2xf32> to vector<16x1xf32>
    %34 = vector.broadcast %33 : vector<16x1xf32> to vector<16x128xf32>
    %35 = arith.mulf %32, %34 : vector<16x128xf32>
    %36 = vector.extract_strided_slice %27 {offsets = [0, 1], sizes = [16, 1], strides = [1, 1]} : vector<16x2xf32> to vector<16x1xf32>
    %37 = vector.broadcast %36 : vector<16x1xf32> to vector<16x128xf32>
    %38 = arith.addf %35, %37 : vector<16x128xf32>
    %39 = arith.truncf %38 : vector<16x128xf32> to vector<16x128xbf16>
    %c0_19 = arith.constant 0 : index
    %c0_20 = arith.constant 0 : index
    %40 = vector.load %arg6[%c0_19, %c0_20] : memref<16x128xbf16, #tpu.memory_space<vmem>>, vector<16x128xbf16>
    tpu.vector_store %arg6[%c0_19, %c0_20], %39 {strides = array<i32>} : memref<16x128xbf16, #tpu.memory_space<vmem>>, vector<16x128xbf16>,
    return
  }
}

module attributes {stable_mosaic.version = 11 : i64} {
  func.func @kernel(%arg0: memref<16x144xbf16, #tpu.memory_space<vmem>>, %arg1: memref<144x128xbf16, #tpu.memory_space<vmem>>, %arg2: memref<16x16xbf16, #tpu.memory_space<vmem>>, %arg3: memref<16x128xbf16, #tpu.memory_space<vmem>>, %arg4: memref<16x1xf32, #tpu.memory_space<vmem>>, %arg5: memref<16x1xf32, #tpu.memory_space<vmem>>, %arg6: memref<16x128xbf16, #tpu.memory_space<vmem>>) attributes {dimension_semantics = [], scalar_prefetch = 0 : i64, scratch_operands = 0 : i64, tpu.core_type = #tpu.core_type<tc>} {
    %c0 = arith.constant 0 : index
    %c0_0 = arith.constant 0 : index
    %0 = vector.load %arg1[%c0, %c0_0] : memref<144x128xbf16, #tpu.memory_space<vmem>>, vector<144x128xbf16>
    %cst = arith.constant 0.000000e+00 : bf16
    %1 = vector.broadcast %cst : bf16 to vector<144x128xbf16>
    %2 = arith.maximumf %0, %1 : vector<144x128xbf16>
    %c0_1 = arith.constant 0 : index
    %c0_2 = arith.constant 0 : index
    %3 = vector.load %arg0[%c0_1, %c0_2] : memref<16x144xbf16, #tpu.memory_space<vmem>>, vector<16x144xbf16>
    %cst_3 = arith.constant dense<0.000000e+00> : vector<16x128xf32>
    %4 = tpu.matmul %3, %2, %cst_3 {dimension_numbers = #tpu.dot_dimension_numbers<[1], [0], [0], [1], [0, 0, 1, 1], [], []>} : vector<16x144xbf16>, vector<144x128xbf16>, vector<16x128xf32> -> vector<16x128xf32>
    %c0_4 = arith.constant 0 : index
    %c0_5 = arith.constant 0 : index
    %5 = vector.load %arg4[%c0_4, %c0_5] : memref<16x1xf32, #tpu.memory_space<vmem>>, vector<16x1xf32>
    %6 = vector.broadcast %5 : vector<16x1xf32> to vector<16x128xf32>
    %7 = arith.addf %4, %6 : vector<16x128xf32>
    %cst_6 = arith.constant 0.000000e+00 : f32
    %8 = vector.broadcast %cst_6 : f32 to vector<16x128xf32>
    %9 = arith.maximumf %7, %8 : vector<16x128xf32>
    %c0_7 = arith.constant 0 : index
    %c0_8 = arith.constant 0 : index
    %10 = vector.load %arg2[%c0_7, %c0_8] : memref<16x16xbf16, #tpu.memory_space<vmem>>, vector<16x16xbf16>
    %11 = arith.truncf %9 : vector<16x128xf32> to vector<16x128xbf16>
    %cst_9 = arith.constant dense<0.000000e+00> : vector<16x128xf32>
    %12 = tpu.matmul %10, %11, %cst_9 {dimension_numbers = #tpu.dot_dimension_numbers<[1], [0], [0], [1], [0, 0, 1, 1], [], []>} : vector<16x16xbf16>, vector<16x128xbf16>, vector<16x128xf32> -> vector<16x128xf32>
    %c0_10 = arith.constant 0 : index
    %c0_11 = arith.constant 0 : index
    %13 = vector.load %arg5[%c0_10, %c0_11] : memref<16x1xf32, #tpu.memory_space<vmem>>, vector<16x1xf32>
    %14 = vector.broadcast %13 : vector<16x1xf32> to vector<16x128xf32>
    %15 = arith.addf %12, %14 : vector<16x128xf32>
    %c0_12 = arith.constant 0 : index
    %c0_13 = arith.constant 0 : index
    %16 = vector.load %arg3[%c0_12, %c0_13] : memref<16x128xbf16, #tpu.memory_space<vmem>>, vector<16x128xbf16>
    %17 = arith.extf %16 : vector<16x128xbf16> to vector<16x128xf32>
    %18 = arith.addf %15, %17 : vector<16x128xf32>
    %19 = arith.truncf %18 : vector<16x128xf32> to vector<16x128xbf16>
    %c0_14 = arith.constant 0 : index
    %c0_15 = arith.constant 0 : index
    %20 = vector.load %arg6[%c0_14, %c0_15] : memref<16x128xbf16, #tpu.memory_space<vmem>>, vector<16x128xbf16>
    tpu.vector_store %arg6[%c0_14, %c0_15], %19 {strides = array<i32>} : memref<16x128xbf16, #tpu.memory_space<vmem>>, vector<16x128xbf16>,
    return
  }
}

module attributes {stable_mosaic.version = 11 : i64} {
  func.func @kernel(%arg0: memref<16x256xbf16, #tpu.memory_space<vmem>>, %arg1: memref<256x512xbf16, #tpu.memory_space<vmem>>, %arg2: memref<16x2xf32, #tpu.memory_space<vmem>>, %arg3: memref<16x512xbf16, #tpu.memory_space<vmem>>) attributes {dimension_semantics = [], scalar_prefetch = 0 : i64, scratch_operands = 0 : i64, tpu.core_type = #tpu.core_type<tc>} {
    %c0 = arith.constant 0 : index
    %c0_0 = arith.constant 0 : index
    %0 = vector.load %arg0[%c0, %c0_0] : memref<16x256xbf16, #tpu.memory_space<vmem>>, vector<16x256xbf16>
    %c0_1 = arith.constant 0 : index
    %c0_2 = arith.constant 0 : index
    %1 = vector.load %arg1[%c0_1, %c0_2] : memref<256x512xbf16, #tpu.memory_space<vmem>>, vector<256x512xbf16>
    %cst = arith.constant dense<0.000000e+00> : vector<16x512xf32>
    %2 = tpu.matmul %0, %1, %cst {dimension_numbers = #tpu.dot_dimension_numbers<[1], [0], [0], [1], [0, 0, 1, 1], [], []>} : vector<16x256xbf16>, vector<256x512xbf16>, vector<16x512xf32> -> vector<16x512xf32>
    %cst_3 = arith.constant dense<0.000000e+00> : vector<16xf32>
    %3 = vector.multi_reduction <add>, %2, %cst_3 [1] : vector<16x512xf32> to vector<16xf32>
    %4 = vector.shape_cast %3 : vector<16xf32> to vector<16x1xf32>
    %cst_4 = arith.constant 5.120000e+02 : f32
    %5 = vector.broadcast %cst_4 : f32 to vector<16x1xf32>
    %6 = arith.divf %4, %5 : vector<16x1xf32>
    %7 = vector.broadcast %6 : vector<16x1xf32> to vector<16x512xf32>
    %8 = arith.subf %2, %7 : vector<16x512xf32>
    %9 = arith.mulf %8, %8 : vector<16x512xf32>
    %cst_5 = arith.constant dense<0.000000e+00> : vector<16xf32>
    %10 = vector.multi_reduction <add>, %9, %cst_5 [1] : vector<16x512xf32> to vector<16xf32>
    %11 = vector.shape_cast %10 : vector<16xf32> to vector<16x1xf32>
    %cst_6 = arith.constant 5.120000e+02 : f32
    %12 = vector.broadcast %cst_6 : f32 to vector<16x1xf32>
    %13 = arith.divf %11, %12 : vector<16x1xf32>
    %c0_7 = arith.constant 0 : index
    %c0_8 = arith.constant 0 : index
    %14 = vector.load %arg2[%c0_7, %c0_8] : memref<16x2xf32, #tpu.memory_space<vmem>>, vector<16x2xf32>
    %cst_9 = arith.constant 9.99999974E-6 : f32
    %15 = vector.broadcast %cst_9 : f32 to vector<16x1xf32>
    %16 = arith.addf %13, %15 : vector<16x1xf32>
    %17 = math.rsqrt %16 : vector<16x1xf32>
    %18 = vector.broadcast %17 : vector<16x1xf32> to vector<16x512xf32>
    %19 = arith.mulf %8, %18 : vector<16x512xf32>
    %20 = vector.extract_strided_slice %14 {offsets = [0, 0], sizes = [16, 1], strides = [1, 1]} : vector<16x2xf32> to vector<16x1xf32>
    %21 = vector.broadcast %20 : vector<16x1xf32> to vector<16x512xf32>
    %22 = arith.mulf %19, %21 : vector<16x512xf32>
    %23 = vector.extract_strided_slice %14 {offsets = [0, 1], sizes = [16, 1], strides = [1, 1]} : vector<16x2xf32> to vector<16x1xf32>
    %24 = vector.broadcast %23 : vector<16x1xf32> to vector<16x512xf32>
    %25 = arith.addf %22, %24 : vector<16x512xf32>
    %cst_10 = arith.constant 0.000000e+00 : f32
    %26 = vector.broadcast %cst_10 : f32 to vector<16x512xf32>
    %27 = arith.maximumf %25, %26 : vector<16x512xf32>
    %28 = arith.truncf %27 : vector<16x512xf32> to vector<16x512xbf16>
    %c0_11 = arith.constant 0 : index
    %c0_12 = arith.constant 0 : index
    %29 = vector.load %arg3[%c0_11, %c0_12] : memref<16x512xbf16, #tpu.memory_space<vmem>>, vector<16x512xbf16>
    tpu.vector_store %arg3[%c0_11, %c0_12], %28 {strides = array<i32>} : memref<16x512xbf16, #tpu.memory_space<vmem>>, vector<16x512xbf16>,
    return
  }
}

module attributes {stable_mosaic.version = 11 : i64} {
  func.func @kernel(%arg0: memref<3x256xbf16, #tpu.memory_space<vmem>>, %arg1: memref<256x2048xbf16, #tpu.memory_space<vmem>>, %arg2: memref<3x1xf32, #tpu.memory_space<vmem>>, %arg3: memref<3x2048xf32, #tpu.memory_space<vmem>>) attributes {dimension_semantics = [], scalar_prefetch = 0 : i64, scratch_operands = 0 : i64, tpu.core_type = #tpu.core_type<tc>} {
    %c0 = arith.constant 0 : index
    %c0_0 = arith.constant 0 : index
    %0 = vector.load %arg0[%c0, %c0_0] : memref<3x256xbf16, #tpu.memory_space<vmem>>, vector<3x256xbf16>
    %c0_1 = arith.constant 0 : index
    %c0_2 = arith.constant 0 : index
    %1 = vector.load %arg1[%c0_1, %c0_2] : memref<256x2048xbf16, #tpu.memory_space<vmem>>, vector<256x2048xbf16>
    %cst = arith.constant dense<0.000000e+00> : vector<3x2048xf32>
    %2 = tpu.matmul %0, %1, %cst {dimension_numbers = #tpu.dot_dimension_numbers<[1], [0], [0], [1], [0, 0, 1, 1], [], []>} : vector<3x256xbf16>, vector<256x2048xbf16>, vector<3x2048xf32> -> vector<3x2048xf32>
    %c0_3 = arith.constant 0 : index
    %c0_4 = arith.constant 0 : index
    %3 = vector.load %arg2[%c0_3, %c0_4] : memref<3x1xf32, #tpu.memory_space<vmem>>, vector<3x1xf32>
    %4 = vector.broadcast %3 : vector<3x1xf32> to vector<3x2048xf32>
    %5 = arith.addf %2, %4 : vector<3x2048xf32>
    %6 = math.tanh %5 : vector<3x2048xf32>
    %c0_5 = arith.constant 0 : index
    %c0_6 = arith.constant 0 : index
    %7 = vector.load %arg3[%c0_5, %c0_6] : memref<3x2048xf32, #tpu.memory_space<vmem>>, vector<3x2048xf32>
    tpu.vector_store %arg3[%c0_5, %c0_6], %6 {strides = array<i32>} : memref<3x2048xf32, #tpu.memory_space<vmem>>, vector<3x2048xf32>,
    return
  }
}

</mosaic_0001>

<llo_original>
// kernel: vq_cvae_forward.8
$region0: #{vq_cvae_forward.8}
  #allocation0 [shape = 'u32[]', space=smem, size = 0x4, offset = 0x4, fixed_abs, tag = 'smem constant byte address 0x4 - core index']
  #allocation1 [shape = 'u32[144,128]{1,0:T(1,128)}', space=vmem, size = 0x12000, scoped, tag = 'internal scratch']
  %s0 = inlined_call_operand.vmem [shape: bf16[16,48], index: 0, kind: input, shape index: {}]
  %s1 = inlined_call_operand.vmem [shape: bf16[48,512], index: 1, kind: input, shape index: {}]
  %s2 = inlined_call_operand.vmem [shape: f32[16,2], index: 2, kind: input, shape index: {}]
  %s3 = inlined_call_operand.vmem [shape: bf16[16,512], index: 3, kind: output, shape index: {}]
  %s4 = sld [smem:[#allocation0]]
  $region22: #{vq_cvae_forward.8} parent=0
    _
  %s6 = ssub.s32 1, %s4
  %s7 = scalar_select 0, %s6, %s4
  // Predicated region
  $region2: #{vq_cvae_forward.8} parent=0 // pred_check
    _
  $region3: #{vq_cvae_forward.8} parent=0 // pred_check_branch
    %9 = sbr.rel (0) target = $region5
  $region4: #{vq_cvae_forward.8} parent=0 // pred_region
    _
  $region5: #{vq_cvae_forward.8} parent=0 // pred_fallthru
    _
  // Predicated region
  $region6: #{vq_cvae_forward.8} parent=0 // pred_check
    _
  $region7: #{vq_cvae_forward.8} parent=0 // pred_check_branch
    %11 = sbr.rel (0) target = $region9
  $region8: #{vq_cvae_forward.8} parent=0 // pred_region
    _
  $region9: #{vq_cvae_forward.8} parent=0 // pred_fallthru
    _
  // Predicated region
  $region10: #{vq_cvae_forward.8} parent=0 // pred_check
    _
  $region11: #{vq_cvae_forward.8} parent=0 // pred_check_branch
    %13 = sbr.rel (0) target = $region13
  $region12: #{vq_cvae_forward.8} parent=0 // pred_region
    _
  $region13: #{vq_cvae_forward.8} parent=0 // pred_fallthru
    _
  %v15 = vld [vmem:[%s0] sm:$0xf]
  %v16 = vld [vmem:[%s0 + $0x4] sm:$0xf]
  %v17 = vld [vmem:[%s1] sm:$0xff]
  %v18 = vld [vmem:[%s1 + $0x8] sm:$0xff]
  %v19 = vld [vmem:[%s1 + $0x10] sm:$0xff]
  %v20 = vld [vmem:[%s1 + $0x18] sm:$0xff]
  %v21 = vld [vmem:[%s1 + $0x20] sm:$0xff]
  %v22 = vld [vmem:[%s1 + $0x28] sm:$0xff]
  %v23 = vld [vmem:[%s1 + $0x30] sm:$0xff]
  %v24 = vld [vmem:[%s1 + $0x38] sm:$0xff]
  %v25 = vld [vmem:[%s1 + $0x40] sm:$0xff]
  %v26 = vld [vmem:[%s1 + $0x48] sm:$0xff]
  %v27 = vld [vmem:[%s1 + $0x50] sm:$0xff]
  %v28 = vld [vmem:[%s1 + $0x58] sm:$0xff]
  %v31 = vunpack.c.l.b16 %v15
  %v32 = vunpack.c.l.b16 %v16
  %v33 = vpack.c.b16 %v32, %v31
  %v46 = vunpack.c.l.b16 %v17
  %v47 = vunpack.c.h.b16 %v17
  %v48 = vunpack.c.l.b16 %v18
  %v49 = vunpack.c.h.b16 %v18
  %v50 = vunpack.c.l.b16 %v19
  %v51 = vunpack.c.h.b16 %v19
  %v52 = vunpack.c.l.b16 %v20
  %v53 = vunpack.c.h.b16 %v20
  %v54 = vunpack.c.l.b16 %v21
  %v55 = vunpack.c.h.b16 %v21
  %v56 = vunpack.c.l.b16 %v22
  %v57 = vunpack.c.h.b16 %v22
  %v58 = vunpack.c.l.b16 %v23
  %v59 = vunpack.c.h.b16 %v23
  %v60 = vunpack.c.l.b16 %v24
  %v61 = vunpack.c.h.b16 %v24
  %v62 = vunpack.c.l.b16 %v25
  %v63 = vunpack.c.h.b16 %v25
  %v64 = vunpack.c.l.b16 %v26
  %v65 = vunpack.c.h.b16 %v26
  %v66 = vunpack.c.l.b16 %v27
  %v67 = vunpack.c.h.b16 %v27
  %v68 = vunpack.c.l.b16 %v28
  %v69 = vunpack.c.h.b16 %v28
  %v70 = vpack.c.b16 %v50, %v46
  %v71 = vpack.c.b16 %v51, %v47
  %v72 = vpack.c.b16 %v52, %v48
  %v73 = vpack.c.b16 %v53, %v49
  %v74 = vpack.c.b16 %v58, %v54
  %v75 = vpack.c.b16 %v59, %v55
  %v76 = vpack.c.b16 %v60, %v56
  %v77 = vpack.c.b16 %v61, %v57
  %v78 = vpack.c.b16 %v66, %v62
  %v79 = vpack.c.b16 %v67, %v63
  %v80 = vpack.c.b16 %v68, %v64
  %v81 = vpack.c.b16 %v69, %v65
  %vm94 = vcmask 392192
  %v96 = vsel %vm94, %v33, 0
  %98 = vmatprep.subr.bf16.mxu0 %v71
  %99 = vmatpush1.bf16.msra.mxu0 %v70
  %100 = vmatprep.subr.bf16.mxu0 %v75
  %101 = vmatpush1.bf16.msra.mxu0 %v74
  %102 = vmatprep.subr.bf16.mxu0 %v79
  %103 = vmatpush1.bf16.msra.mxu0 %v78
  %104 = vmatprep.subr.bf16.mxu0 0
  %105 = vmatpush1.bf16.msra.mxu0 0
  %106 = vmatprep.subr.bf16.mxu0 0
  %107 = vmatpush1.bf16.msra.mxu0 0
  %108 = vmatprep.subr.bf16.mxu0 0
  %109 = vmatpush1.bf16.msra.mxu0 0
  %110 = vmatprep.subr.bf16.mxu0 0
  %111 = vmatpush1.bf16.msra.mxu0 0
  %112 = vmatprep.subr.bf16.mxu0 0
  %113 = vmatpush1.bf16.msra.mxu0 0
  %114 = vmatprep.subr.bf16.mxu0 0
  %115 = vmatpush1.bf16.msra.mxu0 0
  %116 = vmatprep.subr.bf16.mxu0 0
  %117 = vmatpush1.bf16.msra.mxu0 0
  %118 = vmatprep.subr.bf16.mxu0 0
  %119 = vmatpush1.bf16.msra.mxu0 0
  %120 = vmatprep.subr.bf16.mxu0 0
  %121 = vmatpush1.bf16.msra.mxu0 0
  %122 = vmatprep.subr.bf16.mxu0 0
  %123 = vmatpush1.bf16.msra.mxu0 0
  %124 = vmatprep.subr.bf16.mxu0 0
  %125 = vmatpush1.bf16.msra.mxu0 0
  %126 = vmatprep.subr.bf16.mxu0 0
  %127 = vmatpush1.bf16.msra.mxu0 0
  %128 = vmatprep.subr.bf16.mxu0 0
  %129 = vmatpush1.bf16.msra.mxu0 0
  %130 = vmatprep.mubr.bf16.mxu0 0
  %131 = vmatmul.mubr.bf16.gmra.mrb[0].mxu0 %v96
  %v132 = vpop.f32.mrb[0].mxu0
  %v133 = vadd.f32 0.0, %v132
  %v134 = vpop.f32.mrb[0].mxu0
  %v135 = vadd.f32 0.0, %v134
  %v136 = vpop.f32.mrb[0].mxu0
  %v137 = vadd.f32 0.0, %v136
  %v138 = vpop.f32.mrb[0].mxu0
  %v139 = vadd.f32 0.0, %v138
  %140 = vdwg.mxu0
  %141 = vmatprep.subr.bf16.mxu0 %v73
  %142 = vmatpush1.bf16.msra.mxu0 %v72
  %143 = vmatprep.subr.bf16.mxu0 %v77
  %144 = vmatpush1.bf16.msra.mxu0 %v76
  %145 = vmatprep.subr.bf16.mxu0 %v81
  %146 = vmatpush1.bf16.msra.mxu0 %v80
  %147 = vmatprep.subr.bf16.mxu0 0
  %148 = vmatpush1.bf16.msra.mxu0 0
  %149 = vmatprep.subr.bf16.mxu0 0
  %150 = vmatpush1.bf16.msra.mxu0 0
  %151 = vmatprep.subr.bf16.mxu0 0
  %152 = vmatpush1.bf16.msra.mxu0 0
  %153 = vmatprep.subr.bf16.mxu0 0
  %154 = vmatpush1.bf16.msra.mxu0 0
  %155 = vmatprep.subr.bf16.mxu0 0
  %156 = vmatpush1.bf16.msra.mxu0 0
  %157 = vmatprep.subr.bf16.mxu0 0
  %158 = vmatpush1.bf16.msra.mxu0 0
  %159 = vmatprep.subr.bf16.mxu0 0
  %160 = vmatpush1.bf16.msra.mxu0 0
  %161 = vmatprep.subr.bf16.mxu0 0
  %162 = vmatpush1.bf16.msra.mxu0 0
  %163 = vmatprep.subr.bf16.mxu0 0
  %164 = vmatpush1.bf16.msra.mxu0 0
  %165 = vmatprep.subr.bf16.mxu0 0
  %166 = vmatpush1.bf16.msra.mxu0 0
  %167 = vmatprep.subr.bf16.mxu0 0
  %168 = vmatpush1.bf16.msra.mxu0 0
  %169 = vmatprep.subr.bf16.mxu0 0
  %170 = vmatpush1.bf16.msra.mxu0 0
  %171 = vmatprep.subr.bf16.mxu0 0
  %172 = vmatpush1.bf16.msra.mxu0 0
  %173 = vmatprep.mubr.bf16.mxu0 0
  %174 = vmatmul.mubr.bf16.gmra.mrb[0].mxu0 %v96
  %v175 = vpop.f32.mrb[0].mxu0
  %v176 = vadd.f32 0.0, %v175
  %v177 = vpop.f32.mrb[0].mxu0
  %v178 = vadd.f32 0.0, %v177
  %v179 = vpop.f32.mrb[0].mxu0
  %v180 = vadd.f32 0.0, %v179
  %v181 = vpop.f32.mrb[0].mxu0
  %v182 = vadd.f32 0.0, %v181
  %183 = vdwg.mxu0
  %v184 = vadd.f32 %v133, %v135
  %v185 = vadd.f32 %v184, %v176
  %v186 = vadd.f32 %v185, %v178
  %187 = vadd.xlane.f32.xlu0 %v186
  %v188 = vpop.xlane.xlu0 %187
  %v189 = vadd.f32 %v137, %v139
  %v190 = vadd.f32 %v189, %v180
  %v191 = vadd.f32 %v190, %v182
  %192 = vadd.xlane.f32.xlu0 %v191
  %v193 = vpop.xlane.xlu0 %192
  %v194 = vrcp.pop 512.0
  %v195 = vmul.f32 %v188, %v194
  %v196 = vmul.f32 %v193, %v194
  %v197 = vsub.f32 %v133, %v195
  %v198 = vsub.f32 %v135, %v195
  %v199 = vsub.f32 %v176, %v195
  %v200 = vsub.f32 %v178, %v195
  %v201 = vsub.f32 %v137, %v196
  %v202 = vsub.f32 %v139, %v196
  %v203 = vsub.f32 %v180, %v196
  %v204 = vsub.f32 %v182, %v196
  %v205 = vmul.f32 %v197, %v197
  %v206 = vmul.f32 %v198, %v198
  %v207 = vmul.f32 %v199, %v199
  %v208 = vmul.f32 %v200, %v200
  %v209 = vmul.f32 %v201, %v201
  %v210 = vmul.f32 %v202, %v202
  %v211 = vmul.f32 %v203, %v203
  %v212 = vmul.f32 %v204, %v204
  %v213 = vadd.f32 %v205, %v206
  %v214 = vadd.f32 %v213, %v207
  %v215 = vadd.f32 %v214, %v208
  %216 = vadd.xlane.f32.xlu0 %v215
  %v217 = vpop.xlane.xlu0 %216
  %v218 = vadd.f32 %v209, %v210
  %v219 = vadd.f32 %v218, %v211
  %v220 = vadd.f32 %v219, %v212
  %221 = vadd.xlane.f32.xlu0 %v220
  %v222 = vpop.xlane.xlu0 %221
  %v223 = vmul.f32 %v217, %v194
  %v224 = vmul.f32 %v222, %v194
  %v225 = vld [vmem:[%s2] sm:$0xff]
  %v226 = vld [vmem:[%s2 + $0x8] sm:$0xff]
  %v227 = vadd.f32 %v223, 1e-05
  %v228 = vadd.f32 %v224, 1e-05
  %v229 = vrsqrt.pop %v227
  %v230 = vrsqrt.pop %v228
  %v231 = vmul.f32 %v197, %v229
  %v232 = vmul.f32 %v198, %v229
  %v233 = vmul.f32 %v199, %v229
  %v234 = vmul.f32 %v200, %v229
  %v235 = vmul.f32 %v201, %v230
  %v236 = vmul.f32 %v202, %v230
  %v237 = vmul.f32 %v203, %v230
  %v238 = vmul.f32 %v204, %v230
  %240 = vset.pattern.permute.xlu0 0
  %241 = vperm.xlu0 %240, %v225
  %v242 = vpop.permute.xlu0 %241
  %245 = vset.pattern.permute.xlu0 0
  %246 = vperm.xlu0 %245, %v226
  %v247 = vpop.permute.xlu0 %246
  %v249 = vmul.f32 %v231, %v242
  %v250 = vmul.f32 %v232, %v242
  %v251 = vmul.f32 %v233, %v242
  %v252 = vmul.f32 %v234, %v242
  %v253 = vmul.f32 %v235, %v247
  %v254 = vmul.f32 %v236, %v247
  %v255 = vmul.f32 %v237, %v247
  %v256 = vmul.f32 %v238, %v247
  %257 = vset.pattern.permute.xlu0 1
  %258 = vperm.xlu0 %257, %v225
  %v259 = vpop.permute.xlu0 %258
  %261 = vset.pattern.permute.xlu0 1
  %262 = vperm.xlu0 %261, %v226
  %v263 = vpop.permute.xlu0 %262
  %v265 = vadd.f32 %v249, %v259
  %v266 = vadd.f32 %v250, %v259
  %v267 = vadd.f32 %v251, %v259
  %v268 = vadd.f32 %v252, %v259
  %v269 = vadd.f32 %v253, %v263
  %v270 = vadd.f32 %v254, %v263
  %v271 = vadd.f32 %v255, %v263
  %v272 = vadd.f32 %v256, %v263
  %v273 = vmax.f32 %v265, 0.0
  %v274 = vmax.f32 %v266, 0.0
  %v275 = vmax.f32 %v267, 0.0
  %v276 = vmax.f32 %v268, 0.0
  %v277 = vmax.f32 %v269, 0.0
  %v278 = vmax.f32 %v270, 0.0
  %v279 = vmax.f32 %v271, 0.0
  %v280 = vmax.f32 %v272, 0.0
  %v281 = vpack.c.bf16 %v277, %v273
  %v282 = vpack.c.bf16 %v278, %v274
  %v283 = vpack.c.bf16 %v279, %v275
  %v284 = vpack.c.bf16 %v280, %v276
  %v289 = vunpack.c.l.b16 %v281
  %v290 = vunpack.c.l.b16 %v282
  %v291 = vunpack.c.l.b16 %v283
  %v292 = vunpack.c.l.b16 %v284
  %v293 = vunpack.c.h.b16 %v281
  %v294 = vunpack.c.h.b16 %v282
  %v295 = vunpack.c.h.b16 %v283
  %v296 = vunpack.c.h.b16 %v284
  %v297 = vpack.c.b16 %v290, %v289
  %v298 = vpack.c.b16 %v292, %v291
  %v299 = vpack.c.b16 %v294, %v293
  %v300 = vpack.c.b16 %v296, %v295
  %305 = vst [vmem:[%s3] sm:$0xff] %v297
  %306 = vst [vmem:[%s3 + $0x8] sm:$0xff] %v298
  %307 = vst [vmem:[%s3 + $0x10] sm:$0xff] %v299
  %308 = vst [vmem:[%s3 + $0x18] sm:$0xff] %v300
  // Predicated region
  $region14: #{vq_cvae_forward.8} parent=0 // pred_check
    _
  $region15: #{vq_cvae_forward.8} parent=0 // pred_check_branch
    %310 = sbr.rel (0) target = $region17
  $region16: #{vq_cvae_forward.8} parent=0 // pred_region
    _
  $region17: #{vq_cvae_forward.8} parent=0 // pred_fallthru
    _
  // Predicated region
  $region18: #{vq_cvae_forward.8} parent=0 // pred_check
    _
  $region19: #{vq_cvae_forward.8} parent=0 // pred_check_branch
    %312 = sbr.rel (0) target = $region21
  $region20: #{vq_cvae_forward.8} parent=0 // pred_region
    _
  $region21: #{vq_cvae_forward.8} parent=0 // pred_fallthru
    _

// kernel: vq_cvae_forward.9
$region0: #{vq_cvae_forward.9}
  #allocation0 [shape = 'u32[]', space=smem, size = 0x4, offset = 0x4, fixed_abs, tag = 'smem constant byte address 0x4 - core index']
  #allocation1 [shape = 'u32[144,128]{1,0:T(1,128)}', space=vmem, size = 0x12000, scoped, tag = 'internal scratch']
  %s0 = inlined_call_operand.vmem [shape: bf16[16,256], index: 0, kind: input, shape index: {}]
  %s1 = inlined_call_operand.vmem [shape: bf16[256,128], index: 1, kind: input, shape index: {}]
  %s2 = inlined_call_operand.vmem [shape: f32[16,2], index: 2, kind: input, shape index: {}]
  %s3 = inlined_call_operand.vmem [shape: bf16[16,128], index: 3, kind: output, shape index: {}]
  %s4 = sld [smem:[#allocation0]]
  $region22: #{vq_cvae_forward.9} parent=0
    _
  %s6 = ssub.s32 1, %s4
  %s7 = scalar_select 0, %s6, %s4
  // Predicated region
  $region2: #{vq_cvae_forward.9} parent=0 // pred_check
    _
  $region3: #{vq_cvae_forward.9} parent=0 // pred_check_branch
    %9 = sbr.rel (0) target = $region5
  $region4: #{vq_cvae_forward.9} parent=0 // pred_region
    _
  $region5: #{vq_cvae_forward.9} parent=0 // pred_fallthru
    _
  // Predicated region
  $region6: #{vq_cvae_forward.9} parent=0 // pred_check
    _
  $region7: #{vq_cvae_forward.9} parent=0 // pred_check_branch
    %11 = sbr.rel (0) target = $region9
  $region8: #{vq_cvae_forward.9} parent=0 // pred_region
    _
  $region9: #{vq_cvae_forward.9} parent=0 // pred_fallthru
    _
  // Predicated region
  $region10: #{vq_cvae_forward.9} parent=0 // pred_check
    _
  $region11: #{vq_cvae_forward.9} parent=0 // pred_check_branch
    %13 = sbr.rel (0) target = $region13
  $region12: #{vq_cvae_forward.9} parent=0 // pred_region
    _
  $region13: #{vq_cvae_forward.9} parent=0 // pred_fallthru
    _
  %v15 = vld [vmem:[%s0] sm:$0xff]
  %v16 = vld [vmem:[%s0 + $0x8] sm:$0xff]
  %v17 = vld [vmem:[%s1] sm:$0xf]
  %v18 = vld [vmem:[%s1 + $0x4] sm:$0xf]
  %v19 = vld [vmem:[%s1 + $0x8] sm:$0xf]
  %v20 = vld [vmem:[%s1 + $0xc] sm:$0xf]
  %v21 = vld [vmem:[%s1 + $0x10] sm:$0xf]
  %v22 = vld [vmem:[%s1 + $0x14] sm:$0xf]
  %v23 = vld [vmem:[%s1 + $0x18] sm:$0xf]
  %v24 = vld [vmem:[%s1 + $0x1c] sm:$0xf]
  %v25 = vld [vmem:[%s1 + $0x20] sm:$0xf]
  %v26 = vld [vmem:[%s1 + $0x24] sm:$0xf]
  %v27 = vld [vmem:[%s1 + $0x28] sm:$0xf]
  %v28 = vld [vmem:[%s1 + $0x2c] sm:$0xf]
  %v29 = vld [vmem:[%s1 + $0x30] sm:$0xf]
  %v30 = vld [vmem:[%s1 + $0x34] sm:$0xf]
  %v31 = vld [vmem:[%s1 + $0x38] sm:$0xf]
  %v32 = vld [vmem:[%s1 + $0x3c] sm:$0xf]
  %v33 = vld [vmem:[%s1 + $0x40] sm:$0xf]
  %v34 = vld [vmem:[%s1 + $0x44] sm:$0xf]
  %v35 = vld [vmem:[%s1 + $0x48] sm:$0xf]
  %v36 = vld [vmem:[%s1 + $0x4c] sm:$0xf]
  %v37 = vld [vmem:[%s1 + $0x50] sm:$0xf]
  %v38 = vld [vmem:[%s1 + $0x54] sm:$0xf]
  %v39 = vld [vmem:[%s1 + $0x58] sm:$0xf]
  %v40 = vld [vmem:[%s1 + $0x5c] sm:$0xf]
  %v41 = vld [vmem:[%s1 + $0x60] sm:$0xf]
  %v42 = vld [vmem:[%s1 + $0x64] sm:$0xf]
  %v43 = vld [vmem:[%s1 + $0x68] sm:$0xf]
  %v44 = vld [vmem:[%s1 + $0x6c] sm:$0xf]
  %v45 = vld [vmem:[%s1 + $0x70] sm:$0xf]
  %v46 = vld [vmem:[%s1 + $0x74] sm:$0xf]
  %v47 = vld [vmem:[%s1 + $0x78] sm:$0xf]
  %v48 = vld [vmem:[%s1 + $0x7c] sm:$0xf]
  %v51 = vunpack.c.l.b16 %v15
  %v52 = vunpack.c.h.b16 %v15
  %v53 = vunpack.c.l.b16 %v16
  %v54 = vunpack.c.h.b16 %v16
  %v55 = vpack.c.b16 %v53, %v51
  %v56 = vpack.c.b16 %v54, %v52
  %v91 = vunpack.c.l.b16 %v17
  %v92 = vunpack.c.l.b16 %v18
  %v93 = vunpack.c.l.b16 %v19
  %v94 = vunpack.c.l.b16 %v20
  %v95 = vunpack.c.l.b16 %v21
  %v96 = vunpack.c.l.b16 %v22
  %v97 = vunpack.c.l.b16 %v23
  %v98 = vunpack.c.l.b16 %v24
  %v99 = vunpack.c.l.b16 %v25
  %v100 = vunpack.c.l.b16 %v26
  %v101 = vunpack.c.l.b16 %v27
  %v102 = vunpack.c.l.b16 %v28
  %v103 = vunpack.c.l.b16 %v29
  %v104 = vunpack.c.l.b16 %v30
  %v105 = vunpack.c.l.b16 %v31
  %v106 = vunpack.c.l.b16 %v32
  %v107 = vunpack.c.l.b16 %v33
  %v108 = vunpack.c.l.b16 %v34
  %v109 = vunpack.c.l.b16 %v35
  %v110 = vunpack.c.l.b16 %v36
  %v111 = vunpack.c.l.b16 %v37
  %v112 = vunpack.c.l.b16 %v38
  %v113 = vunpack.c.l.b16 %v39
  %v114 = vunpack.c.l.b16 %v40
  %v115 = vunpack.c.l.b16 %v41
  %v116 = vunpack.c.l.b16 %v42
  %v117 = vunpack.c.l.b16 %v43
  %v118 = vunpack.c.l.b16 %v44
  %v119 = vunpack.c.l.b16 %v45
  %v120 = vunpack.c.l.b16 %v46
  %v121 = vunpack.c.l.b16 %v47
  %v122 = vunpack.c.l.b16 %v48
  %v123 = vpack.c.b16 %v92, %v91
  %v124 = vpack.c.b16 %v94, %v93
  %v125 = vpack.c.b16 %v96, %v95
  %v126 = vpack.c.b16 %v98, %v97
  %v127 = vpack.c.b16 %v100, %v99
  %v128 = vpack.c.b16 %v102, %v101
  %v129 = vpack.c.b16 %v104, %v103
  %v130 = vpack.c.b16 %v106, %v105
  %v131 = vpack.c.b16 %v108, %v107
  %v132 = vpack.c.b16 %v110, %v109
  %v133 = vpack.c.b16 %v112, %v111
  %v134 = vpack.c.b16 %v114, %v113
  %v135 = vpack.c.b16 %v116, %v115
  %v136 = vpack.c.b16 %v118, %v117
  %v137 = vpack.c.b16 %v120, %v119
  %v138 = vpack.c.b16 %v122, %v121
  %155 = vmatprep.subr.bf16.mxu0 0
  %156 = vmatpush1.bf16.msra.mxu0 %v123
  %157 = vmatprep.subr.bf16.mxu0 0
  %158 = vmatpush1.bf16.msra.mxu0 %v124
  %159 = vmatprep.subr.bf16.mxu0 0
  %160 = vmatpush1.bf16.msra.mxu0 %v125
  %161 = vmatprep.subr.bf16.mxu0 0
  %162 = vmatpush1.bf16.msra.mxu0 %v126
  %163 = vmatprep.subr.bf16.mxu0 0
  %164 = vmatpush1.bf16.msra.mxu0 %v127
  %165 = vmatprep.subr.bf16.mxu0 0
  %166 = vmatpush1.bf16.msra.mxu0 %v128
  %167 = vmatprep.subr.bf16.mxu0 0
  %168 = vmatpush1.bf16.msra.mxu0 %v129
  %169 = vmatprep.subr.bf16.mxu0 0
  %170 = vmatpush1.bf16.msra.mxu0 %v130
  %171 = vmatprep.subr.bf16.mxu0 0
  %172 = vmatpush1.bf16.msra.mxu0 %v131
  %173 = vmatprep.subr.bf16.mxu0 0
  %174 = vmatpush1.bf16.msra.mxu0 %v132
  %175 = vmatprep.subr.bf16.mxu0 0
  %176 = vmatpush1.bf16.msra.mxu0 %v133
  %177 = vmatprep.subr.bf16.mxu0 0
  %178 = vmatpush1.bf16.msra.mxu0 %v134
  %179 = vmatprep.subr.bf16.mxu0 0
  %180 = vmatpush1.bf16.msra.mxu0 %v135
  %181 = vmatprep.subr.bf16.mxu0 0
  %182 = vmatpush1.bf16.msra.mxu0 %v136
  %183 = vmatprep.subr.bf16.mxu0 0
  %184 = vmatpush1.bf16.msra.mxu0 %v137
  %185 = vmatprep.subr.bf16.mxu0 0
  %186 = vmatpush1.bf16.msra.mxu0 %v138
  %187 = vmatprep.mubr.bf16.mxu0 %v56
  %188 = vmatmul.mubr.bf16.gmra.mrb[0].mxu0 %v55
  %v189 = vpop.f32.mrb[0].mxu0
  %v190 = vadd.f32 0.0, %v189
  %v191 = vpop.f32.mrb[0].mxu0
  %v192 = vpop.f32.mrb[0].mxu0
  %v193 = vadd.f32 0.0, %v192
  %v194 = vpop.f32.mrb[0].mxu0
  %195 = vdwg.mxu0
  %196 = vadd.xlane.f32.xlu0 %v190
  %v197 = vpop.xlane.xlu0 %196
  %198 = vadd.xlane.f32.xlu0 %v193
  %v199 = vpop.xlane.xlu0 %198
  %v200 = vrcp.pop 128.0
  %v201 = vmul.f32 %v197, %v200
  %v202 = vmul.f32 %v199, %v200
  %v203 = vsub.f32 %v190, %v201
  %v204 = vsub.f32 %v193, %v202
  %v205 = vmul.f32 %v203, %v203
  %v206 = vmul.f32 %v204, %v204
  %207 = vadd.xlane.f32.xlu0 %v205
  %v208 = vpop.xlane.xlu0 %207
  %209 = vadd.xlane.f32.xlu0 %v206
  %v210 = vpop.xlane.xlu0 %209
  %v211 = vmul.f32 %v208, %v200
  %v212 = vmul.f32 %v210, %v200
  %v213 = vld [vmem:[%s2] sm:$0xff]
  %v214 = vld [vmem:[%s2 + $0x8] sm:$0xff]
  %v215 = vadd.f32 %v211, 1e-05
  %v216 = vadd.f32 %v212, 1e-05
  %v217 = vrsqrt.pop %v215
  %v218 = vrsqrt.pop %v216
  %v219 = vmul.f32 %v203, %v217
  %v220 = vmul.f32 %v204, %v218
  %222 = vset.pattern.permute.xlu0 0
  %223 = vperm.xlu0 %222, %v213
  %v224 = vpop.permute.xlu0 %223
  %227 = vset.pattern.permute.xlu0 0
  %228 = vperm.xlu0 %227, %v214
  %v229 = vpop.permute.xlu0 %228
  %v231 = vmul.f32 %v219, %v224
  %v232 = vmul.f32 %v220, %v229
  %233 = vset.pattern.permute.xlu0 1
  %234 = vperm.xlu0 %233, %v213
  %v235 = vpop.permute.xlu0 %234
  %237 = vset.pattern.permute.xlu0 1
  %238 = vperm.xlu0 %237, %v214
  %v239 = vpop.permute.xlu0 %238
  %v241 = vadd.f32 %v231, %v235
  %v242 = vadd.f32 %v232, %v239
  %v243 = vmax.f32 %v241, 0.0
  %v244 = vmax.f32 %v242, 0.0
  %v245 = vpack.c.bf16 %v244, %v243
  %v247 = vunpack.c.l.b16 %v245
  %v248 = vunpack.c.h.b16 %v245
  %v249 = vpack.c.b16 %v247, %v247
  %v250 = vpack.c.b16 %v248, %v248
  %253 = vst [vmem:[%s3] sm:$0xf] %v249
  %254 = vst [vmem:[%s3 + $0x4] sm:$0xf] %v250
  // Predicated region
  $region14: #{vq_cvae_forward.9} parent=0 // pred_check
    _
  $region15: #{vq_cvae_forward.9} parent=0 // pred_check_branch
    %256 = sbr.rel (0) target = $region17
  $region16: #{vq_cvae_forward.9} parent=0 // pred_region
    _
  $region17: #{vq_cvae_forward.9} parent=0 // pred_fallthru
    _
  // Predicated region
  $region18: #{vq_cvae_forward.9} parent=0 // pred_check
    _
  $region19: #{vq_cvae_forward.9} parent=0 // pred_check_branch
    %258 = sbr.rel (0) target = $region21
  $region20: #{vq_cvae_forward.9} parent=0 // pred_region
    _
  $region21: #{vq_cvae_forward.9} parent=0 // pred_fallthru
    _

// kernel: vq_cvae_forward.10
$region0: #{vq_cvae_forward.10}
  #allocation0 [shape = 'u32[]', space=smem, size = 0x4, offset = 0x4, fixed_abs, tag = 'smem constant byte address 0x4 - core index']
  #allocation1 [shape = 'u32[144,128]{1,0:T(1,128)}', space=vmem, size = 0x12000, scoped, tag = 'internal scratch']
  %s0 = inlined_call_operand.vmem [shape: bf16[16,144], index: 0, kind: input, shape index: {}]
  %s1 = inlined_call_operand.vmem [shape: bf16[144,128], index: 1, kind: input, shape index: {}]
  %s2 = inlined_call_operand.vmem [shape: bf16[16,16], index: 2, kind: input, shape index: {}]
  %s3 = inlined_call_operand.vmem [shape: bf16[16,128], index: 3, kind: input, shape index: {}]
  %s4 = inlined_call_operand.vmem [shape: f32[16,2], index: 4, kind: input, shape index: {}]
  %s5 = inlined_call_operand.vmem [shape: f32[16,2], index: 5, kind: input, shape index: {}]
  %s6 = inlined_call_operand.vmem [shape: bf16[16,128], index: 6, kind: output, shape index: {}]
  %s7 = sld [smem:[#allocation0]]
  $region34: #{vq_cvae_forward.10} parent=0
    _
  %s9 = ssub.s32 1, %s7
  %s10 = scalar_select 0, %s9, %s7
  // Predicated region
  $region2: #{vq_cvae_forward.10} parent=0 // pred_check
    _
  $region3: #{vq_cvae_forward.10} parent=0 // pred_check_branch
    %12 = sbr.rel (0) target = $region5
  $region4: #{vq_cvae_forward.10} parent=0 // pred_region
    _
  $region5: #{vq_cvae_forward.10} parent=0 // pred_fallthru
    _
  // Predicated region
  $region6: #{vq_cvae_forward.10} parent=0 // pred_check
    _
  $region7: #{vq_cvae_forward.10} parent=0 // pred_check_branch
    %14 = sbr.rel (0) target = $region9
  $region8: #{vq_cvae_forward.10} parent=0 // pred_region
    _
  $region9: #{vq_cvae_forward.10} parent=0 // pred_fallthru
    _
  // Predicated region
  $region10: #{vq_cvae_forward.10} parent=0 // pred_check
    _
  $region11: #{vq_cvae_forward.10} parent=0 // pred_check_branch
    %16 = sbr.rel (0) target = $region13
  $region12: #{vq_cvae_forward.10} parent=0 // pred_region
    _
  $region13: #{vq_cvae_forward.10} parent=0 // pred_fallthru
    _
  // Predicated region
  $region14: #{vq_cvae_forward.10} parent=0 // pred_check
    _
  $region15: #{vq_cvae_forward.10} parent=0 // pred_check_branch
    %18 = sbr.rel (0) target = $region17
  $region16: #{vq_cvae_forward.10} parent=0 // pred_region
    _
  $region17: #{vq_cvae_forward.10} parent=0 // pred_fallthru
    _
  // Predicated region
  $region18: #{vq_cvae_forward.10} parent=0 // pred_check
    _
  $region19: #{vq_cvae_forward.10} parent=0 // pred_check_branch
    %20 = sbr.rel (0) target = $region21
  $region20: #{vq_cvae_forward.10} parent=0 // pred_region
    _
  $region21: #{vq_cvae_forward.10} parent=0 // pred_fallthru
    _
  // Predicated region
  $region22: #{vq_cvae_forward.10} parent=0 // pred_check
    _
  $region23: #{vq_cvae_forward.10} parent=0 // pred_check_branch
    %22 = sbr.rel (0) target = $region25
  $region24: #{vq_cvae_forward.10} parent=0 // pred_region
    _
  $region25: #{vq_cvae_forward.10} parent=0 // pred_fallthru
    _
  %v24 = vld [vmem:[%s1] sm:$0xf]
  %v25 = vld [vmem:[%s1 + $0x4] sm:$0xf]
  %v26 = vld [vmem:[%s1 + $0x8] sm:$0xf]
  %v27 = vld [vmem:[%s1 + $0xc] sm:$0xf]
  %v28 = vld [vmem:[%s1 + $0x10] sm:$0xf]
  %v29 = vld [vmem:[%s1 + $0x14] sm:$0xf]
  %v30 = vld [vmem:[%s1 + $0x18] sm:$0xf]
  %v31 = vld [vmem:[%s1 + $0x1c] sm:$0xf]
  %v32 = vld [vmem:[%s1 + $0x20] sm:$0xf]
  %v33 = vld [vmem:[%s1 + $0x24] sm:$0xf]
  %v34 = vld [vmem:[%s1 + $0x28] sm:$0xf]
  %v35 = vld [vmem:[%s1 + $0x2c] sm:$0xf]
  %v36 = vld [vmem:[%s1 + $0x30] sm:$0xf]
  %v37 = vld [vmem:[%s1 + $0x34] sm:$0xf]
  %v38 = vld [vmem:[%s1 + $0x38] sm:$0xf]
  %v39 = vld [vmem:[%s1 + $0x3c] sm:$0xf]
  %v40 = vld [vmem:[%s1 + $0x40] sm:$0xf]
  %v41 = vld [vmem:[%s1 + $0x44] sm:$0xf]
  %v42 = vmax.bf16 %v24, 0
  %v43 = vmax.bf16 %v25, 0
  %v44 = vmax.bf16 %v26, 0
  %v45 = vmax.bf16 %v27, 0
  %v46 = vmax.bf16 %v28, 0
  %v47 = vmax.bf16 %v29, 0
  %v48 = vmax.bf16 %v30, 0
  %v49 = vmax.bf16 %v31, 0
  %v50 = vmax.bf16 %v32, 0
  %v51 = vmax.bf16 %v33, 0
  %v52 = vmax.bf16 %v34, 0
  %v53 = vmax.bf16 %v35, 0
  %v54 = vmax.bf16 %v36, 0
  %v55 = vmax.bf16 %v37, 0
  %v56 = vmax.bf16 %v38, 0
  %v57 = vmax.bf16 %v39, 0
  %v58 = vmax.bf16 %v40, 0
  %v59 = vmax.bf16 %v41, 0
  %v60 = vld [vmem:[%s0] sm:$0xff]
  %v61 = vld [vmem:[%s0 + $0x8] sm:$0xff]
  %v64 = vunpack.c.l.b16 %v60
  %v65 = vunpack.c.h.b16 %v60
  %v66 = vunpack.c.l.b16 %v61
  %v67 = vunpack.c.h.b16 %v61
  %v68 = vpack.c.b16 %v66, %v64
  %v69 = vpack.c.b16 %v67, %v65
  %v89 = vunpack.c.l.b16 %v42
  %v90 = vunpack.c.l.b16 %v43
  %v91 = vunpack.c.l.b16 %v44
  %v92 = vunpack.c.l.b16 %v45
  %v93 = vunpack.c.l.b16 %v46
  %v94 = vunpack.c.l.b16 %v47
  %v95 = vunpack.c.l.b16 %v48
  %v96 = vunpack.c.l.b16 %v49
  %v97 = vunpack.c.l.b16 %v50
  %v98 = vunpack.c.l.b16 %v51
  %v99 = vunpack.c.l.b16 %v52
  %v100 = vunpack.c.l.b16 %v53
  %v101 = vunpack.c.l.b16 %v54
  %v102 = vunpack.c.l.b16 %v55
  %v103 = vunpack.c.l.b16 %v56
  %v104 = vunpack.c.l.b16 %v57
  %v105 = vunpack.c.l.b16 %v58
  %v106 = vunpack.c.l.b16 %v59
  %v107 = vpack.c.b16 %v90, %v89
  %v108 = vpack.c.b16 %v92, %v91
  %v109 = vpack.c.b16 %v94, %v93
  %v110 = vpack.c.b16 %v96, %v95
  %v111 = vpack.c.b16 %v98, %v97
  %v112 = vpack.c.b16 %v100, %v99
  %v113 = vpack.c.b16 %v102, %v101
  %v114 = vpack.c.b16 %v104, %v103
  %v115 = vpack.c.b16 %v106, %v105
  %vm125 = vcmask 130048
  %v127 = vsel %vm125, %v69, 0
  %129 = vmatprep.subr.bf16.mxu0 0
  %130 = vmatpush1.bf16.msra.mxu0 %v107
  %131 = vmatprep.subr.bf16.mxu0 0
  %132 = vmatpush1.bf16.msra.mxu0 %v108
  %133 = vmatprep.subr.bf16.mxu0 0
  %134 = vmatpush1.bf16.msra.mxu0 %v109
  %135 = vmatprep.subr.bf16.mxu0 0
  %136 = vmatpush1.bf16.msra.mxu0 %v110
  %137 = vmatprep.subr.bf16.mxu0 0
  %138 = vmatpush1.bf16.msra.mxu0 %v111
  %139 = vmatprep.subr.bf16.mxu0 0
  %140 = vmatpush1.bf16.msra.mxu0 %v112
  %141 = vmatprep.subr.bf16.mxu0 0
  %142 = vmatpush1.bf16.msra.mxu0 %v113
  %143 = vmatprep.subr.bf16.mxu0 0
  %144 = vmatpush1.bf16.msra.mxu0 %v114
  %145 = vmatprep.subr.bf16.mxu0 0
  %146 = vmatpush1.bf16.msra.mxu0 %v115
  %147 = vmatprep.subr.bf16.mxu0 0
  %148 = vmatpush1.bf16.msra.mxu0 0
  %149 = vmatprep.subr.bf16.mxu0 0
  %150 = vmatpush1.bf16.msra.mxu0 0
  %151 = vmatprep.subr.bf16.mxu0 0
  %152 = vmatpush1.bf16.msra.mxu0 0
  %153 = vmatprep.subr.bf16.mxu0 0
  %154 = vmatpush1.bf16.msra.mxu0 0
  %155 = vmatprep.subr.bf16.mxu0 0
  %156 = vmatpush1.bf16.msra.mxu0 0
  %157 = vmatprep.subr.bf16.mxu0 0
  %158 = vmatpush1.bf16.msra.mxu0 0
  %159 = vmatprep.subr.bf16.mxu0 0
  %160 = vmatpush1.bf16.msra.mxu0 0
  %161 = vmatprep.mubr.bf16.mxu0 %v127
  %162 = vmatmul.mubr.bf16.gmra.mrb[0].mxu0 %v68
  %v163 = vpop.f32.mrb[0].mxu0
  %v164 = vadd.f32 0.0, %v163
  %v165 = vpop.f32.mrb[0].mxu0
  %v166 = vpop.f32.mrb[0].mxu0
  %v167 = vadd.f32 0.0, %v166
  %v168 = vpop.f32.mrb[0].mxu0
  %169 = vdwg.mxu0
  %170 = vadd.xlane.f32.xlu0 %v164
  %v171 = vpop.xlane.xlu0 %170
  %172 = vadd.xlane.f32.xlu0 %v167
  %v173 = vpop.xlane.xlu0 %172
  %v174 = vrcp.pop 128.0
  %v175 = vmul.f32 %v171, %v174
  %v176 = vmul.f32 %v173, %v174
  %v177 = vsub.f32 %v164, %v175
  %v178 = vsub.f32 %v167, %v176
  %v179 = vmul.f32 %v177, %v177
  %v180 = vmul.f32 %v178, %v178
  %181 = vadd.xlane.f32.xlu0 %v179
  %v182 = vpop.xlane.xlu0 %181
  %183 = vadd.xlane.f32.xlu0 %v180
  %v184 = vpop.xlane.xlu0 %183
  %v185 = vmul.f32 %v182, %v174
  %v186 = vmul.f32 %v184, %v174
  %v187 = vld [vmem:[%s4] sm:$0xff]
  %v188 = vld [vmem:[%s4 + $0x8] sm:$0xff]
  %v189 = vadd.f32 %v185, 1e-05
  %v190 = vadd.f32 %v186, 1e-05
  %v191 = vrsqrt.pop %v189
  %v192 = vrsqrt.pop %v190
  %v193 = vmul.f32 %v177, %v191
  %v194 = vmul.f32 %v178, %v192
  %196 = vset.pattern.permute.xlu0 0
  %197 = vperm.xlu0 %196, %v187
  %v198 = vpop.permute.xlu0 %197
  %201 = vset.pattern.permute.xlu0 0
  %202 = vperm.xlu0 %201, %v188
  %v203 = vpop.permute.xlu0 %202
  %v205 = vmul.f32 %v193, %v198
  %v206 = vmul.f32 %v194, %v203
  %207 = vset.pattern.permute.xlu0 1
  %208 = vperm.xlu0 %207, %v187
  %v209 = vpop.permute.xlu0 %208
  %211 = vset.pattern.permute.xlu0 1
  %212 = vperm.xlu0 %211, %v188
  %v213 = vpop.permute.xlu0 %212
  %v215 = vadd.f32 %v205, %v209
  %v216 = vadd.f32 %v206, %v213
  %v217 = vmax.f32 %v215, 0.0
  %v218 = vmax.f32 %v216, 0.0
  %v219 = vld [vmem:[%s2] sm:$0xf]
  %v220 = vld [vmem:[%s2 + $0x4] sm:$0xf]
  %v221 = vpack.c.bf16 %v218, %v217
  %v222 = vld [vmem:[%s3] sm:$0xf]
  %v223 = vld [vmem:[%s3 + $0x4] sm:$0xf]
  %v224 = vunpack.c.l.bf16 %v222
  %v225 = vunpack.c.l.bf16 %v223
  %v228 = vunpack.c.l.b16 %v219
  %v229 = vunpack.c.l.b16 %v220
  %v230 = vpack.c.b16 %v229, %v228
  %v232 = vsel %vm125, %v230, 0
  %234 = vmatprep.subr.bf16.mxu0 0
  %235 = vmatpush1.bf16.msra.mxu0 %v221
  %236 = vmatprep.subr.bf16.mxu0 0
  %237 = vmatpush1.bf16.msra.mxu0 0
  %238 = vmatprep.subr.bf16.mxu0 0
  %239 = vmatpush1.bf16.msra.mxu0 0
  %240 = vmatprep.subr.bf16.mxu0 0
  %241 = vmatpush1.bf16.msra.mxu0 0
  %242 = vmatprep.subr.bf16.mxu0 0
  %243 = vmatpush1.bf16.msra.mxu0 0
  %244 = vmatprep.subr.bf16.mxu0 0
  %245 = vmatpush1.bf16.msra.mxu0 0
  %246 = vmatprep.subr.bf16.mxu0 0
  %247 = vmatpush1.bf16.msra.mxu0 0
  %248 = vmatprep.subr.bf16.mxu0 0
  %249 = vmatpush1.bf16.msra.mxu0 0
  %250 = vmatprep.subr.bf16.mxu0 0
  %251 = vmatpush1.bf16.msra.mxu0 0
  %252 = vmatprep.subr.bf16.mxu0 0
  %253 = vmatpush1.bf16.msra.mxu0 0
  %254 = vmatprep.subr.bf16.mxu0 0
  %255 = vmatpush1.bf16.msra.mxu0 0
  %256 = vmatprep.subr.bf16.mxu0 0
  %257 = vmatpush1.bf16.msra.mxu0 0
  %258 = vmatprep.subr.bf16.mxu0 0
  %259 = vmatpush1.bf16.msra.mxu0 0
  %260 = vmatprep.subr.bf16.mxu0 0
  %261 = vmatpush1.bf16.msra.mxu0 0
  %262 = vmatprep.subr.bf16.mxu0 0
  %263 = vmatpush1.bf16.msra.mxu0 0
  %264 = vmatprep.subr.bf16.mxu0 0
  %265 = vmatpush1.bf16.msra.mxu0 0
  %266 = vmatprep.mubr.bf16.mxu0 0
  %267 = vmatmul.mubr.bf16.gmra.mrb[0].mxu0 %v232
  %v268 = vpop.f32.mrb[0].mxu0
  %v269 = vadd.f32 %v224, %v268
  %v270 = vpop.f32.mrb[0].mxu0
  %v271 = vpop.f32.mrb[0].mxu0
  %v272 = vadd.f32 %v225, %v271
  %v273 = vpop.f32.mrb[0].mxu0
  %274 = vdwg.mxu0
  %275 = vadd.xlane.f32.xlu0 %v269
  %v276 = vpop.xlane.xlu0 %275
  %277 = vadd.xlane.f32.xlu0 %v272
  %v278 = vpop.xlane.xlu0 %277
  %v279 = vmul.f32 %v276, %v174
  %v280 = vmul.f32 %v278, %v174
  %v281 = vsub.f32 %v269, %v279
  %v282 = vsub.f32 %v272, %v280
  %v283 = vmul.f32 %v281, %v281
  %v284 = vmul.f32 %v282, %v282
  %285 = vadd.xlane.f32.xlu0 %v283
  %v286 = vpop.xlane.xlu0 %285
  %287 = vadd.xlane.f32.xlu0 %v284
  %v288 = vpop.xlane.xlu0 %287
  %v289 = vmul.f32 %v286, %v174
  %v290 = vmul.f32 %v288, %v174
  %v291 = vld [vmem:[%s5] sm:$0xff]
  %v292 = vld [vmem:[%s5 + $0x8] sm:$0xff]
  %v293 = vadd.f32 %v289, 1e-05
  %v294 = vadd.f32 %v290, 1e-05
  %v295 = vrsqrt.pop %v293
  %v296 = vrsqrt.pop %v294
  %v297 = vmul.f32 %v281, %v295
  %v298 = vmul.f32 %v282, %v296
  %300 = vset.pattern.permute.xlu0 0
  %301 = vperm.xlu0 %300, %v291
  %v302 = vpop.permute.xlu0 %301
  %305 = vset.pattern.permute.xlu0 0
  %306 = vperm.xlu0 %305, %v292
  %v307 = vpop.permute.xlu0 %306
  %v309 = vmul.f32 %v297, %v302
  %v310 = vmul.f32 %v298, %v307
  %311 = vset.pattern.permute.xlu0 1
  %312 = vperm.xlu0 %311, %v291
  %v313 = vpop.permute.xlu0 %312
  %315 = vset.pattern.permute.xlu0 1
  %316 = vperm.xlu0 %315, %v292
  %v317 = vpop.permute.xlu0 %316
  %v319 = vadd.f32 %v309, %v313
  %v320 = vadd.f32 %v310, %v317
  %v321 = vpack.c.bf16 %v320, %v319
  %v323 = vunpack.c.l.b16 %v321
  %v324 = vunpack.c.h.b16 %v321
  %v325 = vpack.c.b16 %v323, %v323
  %v326 = vpack.c.b16 %v324, %v324
  %329 = vst [vmem:[%s6] sm:$0xf] %v325
  %330 = vst [vmem:[%s6 + $0x4] sm:$0xf] %v326
  // Predicated region
  $region26: #{vq_cvae_forward.10} parent=0 // pred_check
    _
  $region27: #{vq_cvae_forward.10} parent=0 // pred_check_branch
    %332 = sbr.rel (0) target = $region29
  $region28: #{vq_cvae_forward.10} parent=0 // pred_region
    _
  $region29: #{vq_cvae_forward.10} parent=0 // pred_fallthru
    _
  // Predicated region
  $region30: #{vq_cvae_forward.10} parent=0 // pred_check
    _
  $region31: #{vq_cvae_forward.10} parent=0 // pred_check_branch
    %334 = sbr.rel (0) target = $region33
  $region32: #{vq_cvae_forward.10} parent=0 // pred_region
    _
  $region33: #{vq_cvae_forward.10} parent=0 // pred_fallthru
    _

// kernel: vq_cvae_forward.11
$region0: #{vq_cvae_forward.11}
  #allocation0 [shape = 'u32[]', space=smem, size = 0x4, offset = 0x4, fixed_abs, tag = 'smem constant byte address 0x4 - core index']
  #allocation1 [shape = 'u32[144,128]{1,0:T(1,128)}', space=vmem, size = 0x12000, scoped, tag = 'internal scratch']
  %s0 = inlined_call_operand.vmem [shape: bf16[16,144], index: 0, kind: input, shape index: {}]
  %s1 = inlined_call_operand.vmem [shape: bf16[144,128], index: 1, kind: input, shape index: {}]
  %s2 = inlined_call_operand.vmem [shape: bf16[16,16], index: 2, kind: input, shape index: {}]
  %s3 = inlined_call_operand.vmem [shape: bf16[16,128], index: 3, kind: input, shape index: {}]
  %s4 = inlined_call_operand.vmem [shape: f32[16,2], index: 4, kind: input, shape index: {}]
  %s5 = inlined_call_operand.vmem [shape: f32[16,2], index: 5, kind: input, shape index: {}]
  %s6 = inlined_call_operand.vmem [shape: f32[10,16], index: 6, kind: input, shape index: {}]
  %s7 = inlined_call_operand.vmem [shape: f32[16,10], index: 7, kind: input, shape index: {}]
  %s8 = inlined_call_operand.vmem [shape: f32[16,128], index: 8, kind: output, shape index: {0}]
  %s9 = inlined_call_operand.vmem [shape: f32[16,128], index: 9, kind: output, shape index: {1}]
  %s10 = inlined_call_operand.vmem [shape: s32[1,128], index: 10, kind: output, shape index: {2}]
  %11 = xla_tuple %s8, %s9, %s10
  %s12 = sld [smem:[#allocation0]]
  $region58: #{vq_cvae_forward.11} parent=0
    _
  %s14 = ssub.s32 1, %s12
  %s15 = scalar_select 0, %s14, %s12
  // Predicated region
  $region2: #{vq_cvae_forward.11} parent=0 // pred_check
    _
  $region3: #{vq_cvae_forward.11} parent=0 // pred_check_branch
    %17 = sbr.rel (0) target = $region5
  $region4: #{vq_cvae_forward.11} parent=0 // pred_region
    _
  $region5: #{vq_cvae_forward.11} parent=0 // pred_fallthru
    _
  // Predicated region
  $region6: #{vq_cvae_forward.11} parent=0 // pred_check
    _
  $region7: #{vq_cvae_forward.11} parent=0 // pred_check_branch
    %19 = sbr.rel (0) target = $region9
  $region8: #{vq_cvae_forward.11} parent=0 // pred_region
    _
  $region9: #{vq_cvae_forward.11} parent=0 // pred_fallthru
    _
  // Predicated region
  $region10: #{vq_cvae_forward.11} parent=0 // pred_check
    _
  $region11: #{vq_cvae_forward.11} parent=0 // pred_check_branch
    %21 = sbr.rel (0) target = $region13
  $region12: #{vq_cvae_forward.11} parent=0 // pred_region
    _
  $region13: #{vq_cvae_forward.11} parent=0 // pred_fallthru
    _
  // Predicated region
  $region14: #{vq_cvae_forward.11} parent=0 // pred_check
    _
  $region15: #{vq_cvae_forward.11} parent=0 // pred_check_branch
    %23 = sbr.rel (0) target = $region17
  $region16: #{vq_cvae_forward.11} parent=0 // pred_region
    _
  $region17: #{vq_cvae_forward.11} parent=0 // pred_fallthru
    _
  // Predicated region
  $region18: #{vq_cvae_forward.11} parent=0 // pred_check
    _
  $region19: #{vq_cvae_forward.11} parent=0 // pred_check_branch
    %25 = sbr.rel (0) target = $region21
  $region20: #{vq_cvae_forward.11} parent=0 // pred_region
    _
  $region21: #{vq_cvae_forward.11} parent=0 // pred_fallthru
    _
  // Predicated region
  $region22: #{vq_cvae_forward.11} parent=0 // pred_check
    _
  $region23: #{vq_cvae_forward.11} parent=0 // pred_check_branch
    %27 = sbr.rel (0) target = $region25
  $region24: #{vq_cvae_forward.11} parent=0 // pred_region
    _
  $region25: #{vq_cvae_forward.11} parent=0 // pred_fallthru
    _
  // Predicated region
  $region26: #{vq_cvae_forward.11} parent=0 // pred_check
    _
  $region27: #{vq_cvae_forward.11} parent=0 // pred_check_branch
    %29 = sbr.rel (0) target = $region29
  $region28: #{vq_cvae_forward.11} parent=0 // pred_region
    _
  $region29: #{vq_cvae_forward.11} parent=0 // pred_fallthru
    _
  // Predicated region
  $region30: #{vq_cvae_forward.11} parent=0 // pred_check
    _
  $region31: #{vq_cvae_forward.11} parent=0 // pred_check_branch
    %31 = sbr.rel (0) target = $region33
  $region32: #{vq_cvae_forward.11} parent=0 // pred_region
    _
  $region33: #{vq_cvae_forward.11} parent=0 // pred_fallthru
    _
  %v33 = vld [vmem:[%s1] sm:$0xf]
  %v34 = vld [vmem:[%s1 + $0x4] sm:$0xf]
  %v35 = vld [vmem:[%s1 + $0x8] sm:$0xf]
  %v36 = vld [vmem:[%s1 + $0xc] sm:$0xf]
  %v37 = vld [vmem:[%s1 + $0x10] sm:$0xf]
  %v38 = vld [vmem:[%s1 + $0x14] sm:$0xf]
  %v39 = vld [vmem:[%s1 + $0x18] sm:$0xf]
  %v40 = vld [vmem:[%s1 + $0x1c] sm:$0xf]
  %v41 = vld [vmem:[%s1 + $0x20] sm:$0xf]
  %v42 = vld [vmem:[%s1 + $0x24] sm:$0xf]
  %v43 = vld [vmem:[%s1 + $0x28] sm:$0xf]
  %v44 = vld [vmem:[%s1 + $0x2c] sm:$0xf]
  %v45 = vld [vmem:[%s1 + $0x30] sm:$0xf]
  %v46 = vld [vmem:[%s1 + $0x34] sm:$0xf]
  %v47 = vld [vmem:[%s1 + $0x38] sm:$0xf]
  %v48 = vld [vmem:[%s1 + $0x3c] sm:$0xf]
  %v49 = vld [vmem:[%s1 + $0x40] sm:$0xf]
  %v50 = vld [vmem:[%s1 + $0x44] sm:$0xf]
  %v51 = vmax.bf16 %v33, 0
  %v52 = vmax.bf16 %v34, 0
  %v53 = vmax.bf16 %v35, 0
  %v54 = vmax.bf16 %v36, 0
  %v55 = vmax.bf16 %v37, 0
  %v56 = vmax.bf16 %v38, 0
  %v57 = vmax.bf16 %v39, 0
  %v58 = vmax.bf16 %v40, 0
  %v59 = vmax.bf16 %v41, 0
  %v60 = vmax.bf16 %v42, 0
  %v61 = vmax.bf16 %v43, 0
  %v62 = vmax.bf16 %v44, 0
  %v63 = vmax.bf16 %v45, 0
  %v64 = vmax.bf16 %v46, 0
  %v65 = vmax.bf16 %v47, 0
  %v66 = vmax.bf16 %v48, 0
  %v67 = vmax.bf16 %v49, 0
  %v68 = vmax.bf16 %v50, 0
  %v69 = vld [vmem:[%s0] sm:$0xff]
  %v70 = vld [vmem:[%s0 + $0x8] sm:$0xff]
  %v73 = vunpack.c.l.b16 %v69
  %v74 = vunpack.c.h.b16 %v69
  %v75 = vunpack.c.l.b16 %v70
  %v76 = vunpack.c.h.b16 %v70
  %v77 = vpack.c.b16 %v75, %v73
  %v78 = vpack.c.b16 %v76, %v74
  %v98 = vunpack.c.l.b16 %v51
  %v99 = vunpack.c.l.b16 %v52
  %v100 = vunpack.c.l.b16 %v53
  %v101 = vunpack.c.l.b16 %v54
  %v102 = vunpack.c.l.b16 %v55
  %v103 = vunpack.c.l.b16 %v56
  %v104 = vunpack.c.l.b16 %v57
  %v105 = vunpack.c.l.b16 %v58
  %v106 = vunpack.c.l.b16 %v59
  %v107 = vunpack.c.l.b16 %v60
  %v108 = vunpack.c.l.b16 %v61
  %v109 = vunpack.c.l.b16 %v62
  %v110 = vunpack.c.l.b16 %v63
  %v111 = vunpack.c.l.b16 %v64
  %v112 = vunpack.c.l.b16 %v65
  %v113 = vunpack.c.l.b16 %v66
  %v114 = vunpack.c.l.b16 %v67
  %v115 = vunpack.c.l.b16 %v68
  %v116 = vpack.c.b16 %v99, %v98
  %v117 = vpack.c.b16 %v101, %v100
  %v118 = vpack.c.b16 %v103, %v102
  %v119 = vpack.c.b16 %v105, %v104
  %v120 = vpack.c.b16 %v107, %v106
  %v121 = vpack.c.b16 %v109, %v108
  %v122 = vpack.c.b16 %v111, %v110
  %v123 = vpack.c.b16 %v113, %v112
  %v124 = vpack.c.b16 %v115, %v114
  %vm134 = vcmask 130048
  %v136 = vsel %vm134, %v78, 0
  %138 = vmatprep.subr.bf16.mxu0 0
  %139 = vmatpush1.bf16.msra.mxu0 %v116
  %140 = vmatprep.subr.bf16.mxu0 0
  %141 = vmatpush1.bf16.msra.mxu0 %v117
  %142 = vmatprep.subr.bf16.mxu0 0
  %143 = vmatpush1.bf16.msra.mxu0 %v118
  %144 = vmatprep.subr.bf16.mxu0 0
  %145 = vmatpush1.bf16.msra.mxu0 %v119
  %146 = vmatprep.subr.bf16.mxu0 0
  %147 = vmatpush1.bf16.msra.mxu0 %v120
  %148 = vmatprep.subr.bf16.mxu0 0
  %149 = vmatpush1.bf16.msra.mxu0 %v121
  %150 = vmatprep.subr.bf16.mxu0 0
  %151 = vmatpush1.bf16.msra.mxu0 %v122
  %152 = vmatprep.subr.bf16.mxu0 0
  %153 = vmatpush1.bf16.msra.mxu0 %v123
  %154 = vmatprep.subr.bf16.mxu0 0
  %155 = vmatpush1.bf16.msra.mxu0 %v124
  %156 = vmatprep.subr.bf16.mxu0 0
  %157 = vmatpush1.bf16.msra.mxu0 0
  %158 = vmatprep.subr.bf16.mxu0 0
  %159 = vmatpush1.bf16.msra.mxu0 0
  %160 = vmatprep.subr.bf16.mxu0 0
  %161 = vmatpush1.bf16.msra.mxu0 0
  %162 = vmatprep.subr.bf16.mxu0 0
  %163 = vmatpush1.bf16.msra.mxu0 0
  %164 = vmatprep.subr.bf16.mxu0 0
  %165 = vmatpush1.bf16.msra.mxu0 0
  %166 = vmatprep.subr.bf16.mxu0 0
  %167 = vmatpush1.bf16.msra.mxu0 0
  %168 = vmatprep.subr.bf16.mxu0 0
  %169 = vmatpush1.bf16.msra.mxu0 0
  %170 = vmatprep.mubr.bf16.mxu0 %v136
  %171 = vmatmul.mubr.bf16.gmra.mrb[0].mxu0 %v77
  %v172 = vpop.f32.mrb[0].mxu0
  %v173 = vadd.f32 0.0, %v172
  %v174 = vpop.f32.mrb[0].mxu0
  %v175 = vpop.f32.mrb[0].mxu0
  %v176 = vadd.f32 0.0, %v175
  %v177 = vpop.f32.mrb[0].mxu0
  %178 = vdwg.mxu0
  %179 = vadd.xlane.f32.xlu0 %v173
  %v180 = vpop.xlane.xlu0 %179
  %181 = vadd.xlane.f32.xlu0 %v176
  %v182 = vpop.xlane.xlu0 %181
  %v183 = vrcp.pop 128.0
  %v184 = vmul.f32 %v180, %v183
  %v185 = vmul.f32 %v182, %v183
  %v186 = vsub.f32 %v173, %v184
  %v187 = vsub.f32 %v176, %v185
  %v188 = vmul.f32 %v186, %v186
  %v189 = vmul.f32 %v187, %v187
  %190 = vadd.xlane.f32.xlu0 %v188
  %v191 = vpop.xlane.xlu0 %190
  %192 = vadd.xlane.f32.xlu0 %v189
  %v193 = vpop.xlane.xlu0 %192
  %v194 = vmul.f32 %v191, %v183
  %v195 = vmul.f32 %v193, %v183
  %v196 = vld [vmem:[%s4] sm:$0xff]
  %v197 = vld [vmem:[%s4 + $0x8] sm:$0xff]
  %v198 = vadd.f32 %v194, 1e-05
  %v199 = vadd.f32 %v195, 1e-05
  %v200 = vrsqrt.pop %v198
  %v201 = vrsqrt.pop %v199
  %v202 = vmul.f32 %v186, %v200
  %v203 = vmul.f32 %v187, %v201
  %205 = vset.pattern.permute.xlu0 0
  %206 = vperm.xlu0 %205, %v196
  %v207 = vpop.permute.xlu0 %206
  %210 = vset.pattern.permute.xlu0 0
  %211 = vperm.xlu0 %210, %v197
  %v212 = vpop.permute.xlu0 %211
  %v214 = vmul.f32 %v202, %v207
  %v215 = vmul.f32 %v203, %v212
  %216 = vset.pattern.permute.xlu0 1
  %217 = vperm.xlu0 %216, %v196
  %v218 = vpop.permute.xlu0 %217
  %220 = vset.pattern.permute.xlu0 1
  %221 = vperm.xlu0 %220, %v197
  %v222 = vpop.permute.xlu0 %221
  %v224 = vadd.f32 %v214, %v218
  %v225 = vadd.f32 %v215, %v222
  %v226 = vmax.f32 %v224, 0.0
  %v227 = vmax.f32 %v225, 0.0
  %v228 = vld [vmem:[%s2] sm:$0xf]
  %v229 = vld [vmem:[%s2 + $0x4] sm:$0xf]
  %v230 = vpack.c.bf16 %v227, %v226
  %v231 = vld [vmem:[%s3] sm:$0xf]
  %v232 = vld [vmem:[%s3 + $0x4] sm:$0xf]
  %v233 = vunpack.c.l.bf16 %v231
  %v234 = vunpack.c.l.bf16 %v232
  %v237 = vunpack.c.l.b16 %v228
  %v238 = vunpack.c.l.b16 %v229
  %v239 = vpack.c.b16 %v238, %v237
  %v241 = vsel %vm134, %v239, 0
  %243 = vmatprep.subr.bf16.mxu0 0
  %244 = vmatpush1.bf16.msra.mxu0 %v230
  %245 = vmatprep.subr.bf16.mxu0 0
  %246 = vmatpush1.bf16.msra.mxu0 0
  %247 = vmatprep.subr.bf16.mxu0 0
  %248 = vmatpush1.bf16.msra.mxu0 0
  %249 = vmatprep.subr.bf16.mxu0 0
  %250 = vmatpush1.bf16.msra.mxu0 0
  %251 = vmatprep.subr.bf16.mxu0 0
  %252 = vmatpush1.bf16.msra.mxu0 0
  %253 = vmatprep.subr.bf16.mxu0 0
  %254 = vmatpush1.bf16.msra.mxu0 0
  %255 = vmatprep.subr.bf16.mxu0 0
  %256 = vmatpush1.bf16.msra.mxu0 0
  %257 = vmatprep.subr.bf16.mxu0 0
  %258 = vmatpush1.bf16.msra.mxu0 0
  %259 = vmatprep.subr.bf16.mxu0 0
  %260 = vmatpush1.bf16.msra.mxu0 0
  %261 = vmatprep.subr.bf16.mxu0 0
  %262 = vmatpush1.bf16.msra.mxu0 0
  %263 = vmatprep.subr.bf16.mxu0 0
  %264 = vmatpush1.bf16.msra.mxu0 0
  %265 = vmatprep.subr.bf16.mxu0 0
  %266 = vmatpush1.bf16.msra.mxu0 0
  %267 = vmatprep.subr.bf16.mxu0 0
  %268 = vmatpush1.bf16.msra.mxu0 0
  %269 = vmatprep.subr.bf16.mxu0 0
  %270 = vmatpush1.bf16.msra.mxu0 0
  %271 = vmatprep.subr.bf16.mxu0 0
  %272 = vmatpush1.bf16.msra.mxu0 0
  %273 = vmatprep.subr.bf16.mxu0 0
  %274 = vmatpush1.bf16.msra.mxu0 0
  %275 = vmatprep.mubr.bf16.mxu0 0
  %276 = vmatmul.mubr.bf16.gmra.mrb[0].mxu0 %v241
  %v277 = vpop.f32.mrb[0].mxu0
  %v278 = vadd.f32 %v233, %v277
  %v279 = vpop.f32.mrb[0].mxu0
  %v280 = vpop.f32.mrb[0].mxu0
  %v281 = vadd.f32 %v234, %v280
  %v282 = vpop.f32.mrb[0].mxu0
  %283 = vdwg.mxu0
  %284 = vadd.xlane.f32.xlu0 %v278
  %v285 = vpop.xlane.xlu0 %284
  %286 = vadd.xlane.f32.xlu0 %v281
  %v287 = vpop.xlane.xlu0 %286
  %v288 = vmul.f32 %v285, %v183
  %v289 = vmul.f32 %v287, %v183
  %v290 = vsub.f32 %v278, %v288
  %v291 = vsub.f32 %v281, %v289
  %v292 = vmul.f32 %v290, %v290
  %v293 = vmul.f32 %v291, %v291
  %294 = vadd.xlane.f32.xlu0 %v292
  %v295 = vpop.xlane.xlu0 %294
  %296 = vadd.xlane.f32.xlu0 %v293
  %v297 = vpop.xlane.xlu0 %296
  %v298 = vmul.f32 %v295, %v183
  %v299 = vmul.f32 %v297, %v183
  %v300 = vld [vmem:[%s5] sm:$0xff]
  %v301 = vld [vmem:[%s5 + $0x8] sm:$0xff]
  %v302 = vadd.f32 %v298, 1e-05
  %v303 = vadd.f32 %v299, 1e-05
  %v304 = vrsqrt.pop %v302
  %v305 = vrsqrt.pop %v303
  %v306 = vmul.f32 %v290, %v304
  %v307 = vmul.f32 %v291, %v305
  %309 = vset.pattern.permute.xlu0 0
  %310 = vperm.xlu0 %309, %v300
  %v311 = vpop.permute.xlu0 %310
  %314 = vset.pattern.permute.xlu0 0
  %315 = vperm.xlu0 %314, %v301
  %v316 = vpop.permute.xlu0 %315
  %v318 = vmul.f32 %v306, %v311
  %v319 = vmul.f32 %v307, %v316
  %320 = vset.pattern.permute.xlu0 1
  %321 = vperm.xlu0 %320, %v300
  %v322 = vpop.permute.xlu0 %321
  %324 = vset.pattern.permute.xlu0 1
  %325 = vperm.xlu0 %324, %v301
  %v326 = vpop.permute.xlu0 %325
  %v328 = vadd.f32 %v318, %v322
  %v329 = vadd.f32 %v319, %v326
  %330 = vst [vmem:[%s8] sm:$0xff] %v328
  %331 = vst [vmem:[%s8 + $0x8] sm:$0xff] %v329
  %v332 = vld [vmem:[%s6] sm:$0xff]
  %v333 = vld [vmem:[%s6 + $0x8] sm:$0x3]
  %v334 = vld [vmem:[%s7] sm:$0xff]
  %v335 = vld [vmem:[%s7 + $0x8] sm:$0xff]
  %v337 = vsel %vm134, %v332, 0
  %v340 = vsel %vm134, %v333, 0
  %342 = vmatprep.subr.mxu0 0.0
  %343 = vmatpush1.msra.mxu0 %v328
  %344 = vmatprep.subr.mxu0 0.0
  %345 = vmatpush1.msra.mxu0 %v329
  %346 = vmatprep.subr.mxu0 0.0
  %347 = vmatpush1.msra.mxu0 0.0
  %348 = vmatprep.subr.mxu0 0.0
  %349 = vmatpush1.msra.mxu0 0.0
  %350 = vmatprep.subr.mxu0 0.0
  %351 = vmatpush1.msra.mxu0 0.0
  %352 = vmatprep.subr.mxu0 0.0
  %353 = vmatpush1.msra.mxu0 0.0
  %354 = vmatprep.subr.mxu0 0.0
  %355 = vmatpush1.msra.mxu0 0.0
  %356 = vmatprep.subr.mxu0 0.0
  %357 = vmatpush1.msra.mxu0 0.0
  %358 = vmatprep.subr.mxu0 0.0
  %359 = vmatpush1.msra.mxu0 0.0
  %360 = vmatprep.subr.mxu0 0.0
  %361 = vmatpush1.msra.mxu0 0.0
  %362 = vmatprep.subr.mxu0 0.0
  %363 = vmatpush1.msra.mxu0 0.0
  %364 = vmatprep.subr.mxu0 0.0
  %365 = vmatpush1.msra.mxu0 0.0
  %366 = vmatprep.subr.mxu0 0.0
  %367 = vmatpush1.msra.mxu0 0.0
  %368 = vmatprep.subr.mxu0 0.0
  %369 = vmatpush1.msra.mxu0 0.0
  %370 = vmatprep.subr.mxu0 0.0
  %371 = vmatpush1.msra.mxu0 0.0
  %372 = vmatprep.subr.mxu0 0.0
  %373 = vmatpush1.msra.mxu0 0.0
  %374 = vmatprep.subr.mxu0 0.0
  %375 = vmatpush1.msra.mxu0 0.0
  %376 = vmatprep.subr.mxu0 0.0
  %377 = vmatpush1.msra.mxu0 0.0
  %378 = vmatprep.subr.mxu0 0.0
  %379 = vmatpush1.msra.mxu0 0.0
  %380 = vmatprep.subr.mxu0 0.0
  %381 = vmatpush1.msra.mxu0 0.0
  %382 = vmatprep.subr.mxu0 0.0
  %383 = vmatpush1.msra.mxu0 0.0
  %384 = vmatprep.subr.mxu0 0.0
  %385 = vmatpush1.msra.mxu0 0.0
  %386 = vmatprep.subr.mxu0 0.0
  %387 = vmatpush1.msra.mxu0 0.0
  %388 = vmatprep.subr.mxu0 0.0
  %389 = vmatpush1.msra.mxu0 0.0
  %390 = vmatprep.subr.mxu0 0.0
  %391 = vmatpush1.msra.mxu0 0.0
  %392 = vmatprep.subr.mxu0 0.0
  %393 = vmatpush1.msra.mxu0 0.0
  %394 = vmatprep.subr.mxu0 0.0
  %395 = vmatpush1.msra.mxu0 0.0
  %396 = vmatprep.subr.mxu0 0.0
  %397 = vmatpush1.msra.mxu0 0.0
  %398 = vmatprep.subr.mxu0 0.0
  %399 = vmatpush1.msra.mxu0 0.0
  %400 = vmatprep.subr.mxu0 0.0
  %401 = vmatpush1.msra.mxu0 0.0
  %402 = vmatprep.subr.mxu0 0.0
  %403 = vmatpush1.msra.mxu0 0.0
  %404 = vmatprep.subr.mxu0 0.0
  %405 = vmatpush1.msra.mxu0 0.0
  %406 = vmatprep.mubr.f32.mxu0 0.0
  %407 = vmatmul.mubr.f32.gmra.mrb[0].mxu0 %v337
  %v408 = vpop.f32.mrb[0].mxu0
  %v409 = vadd.f32 0.0, %v408
  %v410 = vpop.f32.mrb[0].mxu0
  %411 = vmatprep.mubr.f32.mxu0 0.0
  %412 = vmatmul.mubr.f32.gmra.mrb[0].mxu0 %v340
  %v413 = vpop.f32.mrb[0].mxu0
  %v414 = vadd.f32 0.0, %v413
  %v415 = vpop.f32.mrb[0].mxu0
  %416 = vdwg.mxu0
  %v417 = vmul.f32 %v332, %v332
  %v418 = vmul.f32 %v333, %v333
  %v419 = vsel %vm134, %v417, 0.0
  %420 = vadd.xlane.f32.xlu0 %v419
  %v421 = vpop.xlane.xlu0 %420
  %vm422 = vcmask 123904
  %v423 = vsel %vm422, %v418, 0.0
  %424 = vadd.xlane.f32.xlu0 %v423
  %v425 = vpop.xlane.xlu0 %424
  %v426 = vmul.f32 %v328, %v328
  %v427 = vmul.f32 %v329, %v329
  %v428 = vadd.f32 %v426, %v427
  %v429 = vrot.slane %v428, 4
  %v430 = vadd.f32 %v428, %v429
  %v431 = vrot.slane %v430, 2
  %v432 = vadd.f32 %v430, %v431
  %v433 = vrot.slane %v432, 1
  %v434 = vadd.f32 %v432, %v433
  %v435 = vadd.f32 %v421, %v434
  %v436 = vadd.f32 %v425, %v434
  %v437 = vmul.f32 %v409, 2.0
  %v438 = vmul.f32 %v414, 2.0
  %v439 = vsub.f32 %v435, %v437
  %v440 = vsub.f32 %v436, %v438
  %v441 = vlaneseq
  %v442 = vshrl.u32 %v441, 7
  %v443 = vadd.s32 %v442, 8
  %v444 = vcvt.s32.f32 %v442
  %v445 = vcvt.s32.f32 %v443
  %vm446 = vcmask 1041408
  %v447 = vsel %vm446, %v440, inf
  %v448 = vmin.f32 %v439, %v447
  %v449 = vrot.slane %v448, 4
  %v450 = vmin.f32 %v448, %v449
  %v451 = vrot.slane %v450, 2
  %v452 = vmin.f32 %v450, %v451
  %v453 = vrot.slane %v452, 1
  %v454 = vmin.f32 %v452, %v453
  %vm455 = vcmp.le.f32.partialorder %v439, %v454
  %vm456 = vcmp.le.f32.partialorder %v440, %v454
  %v457 = vsel %vm455, %v444, 10.0
  %v458 = vsel %vm456, %v445, 10.0
  %v459 = vsel %vm446, %v458, inf
  %v460 = vmin.f32 %v457, %v459
  %v461 = vrot.slane %v460, 4
  %v462 = vmin.f32 %v460, %v461
  %v463 = vrot.slane %v462, 2
  %v464 = vmin.f32 %v462, %v463
  %v465 = vrot.slane %v464, 1
  %v466 = vmin.f32 %v464, %v465
  %v467 = vcvt.f32.s32.to.zero.pseudo %v466
  %468 = vst [vmem:[%s10] sm:$0x1] %v467
  %vm469 = vcmp.eq.f32.partialorder %v444, %v466
  %vm470 = vcmp.eq.f32.partialorder %v445, %v466
  %v471 = vsel %vm469, 1, 0
  %v472 = vsel %vm470, 1, 0
  %v473 = vcvt.s32.f32 %v471
  %v474 = vcvt.s32.f32 %v472
  %vm475 = vcmask 80896
  %v477 = vsel %vm475, %v334, 0
  %v480 = vsel %vm475, %v335, 0
  %v483 = vsel %vm446, %v474, 0
  %485 = vmatprep.subr.mxu0 0.0
  %486 = vmatpush1.msra.mxu0 %v473
  %487 = vmatprep.subr.mxu0 0.0
  %488 = vmatpush1.msra.mxu0 %v483
  %489 = vmatprep.subr.mxu0 0.0
  %490 = vmatpush1.msra.mxu0 0.0
  %491 = vmatprep.subr.mxu0 0.0
  %492 = vmatpush1.msra.mxu0 0.0
  %493 = vmatprep.subr.mxu0 0.0
  %494 = vmatpush1.msra.mxu0 0.0
  %495 = vmatprep.subr.mxu0 0.0
  %496 = vmatpush1.msra.mxu0 0.0
  %497 = vmatprep.subr.mxu0 0.0
  %498 = vmatpush1.msra.mxu0 0.0
  %499 = vmatprep.subr.mxu0 0.0
  %500 = vmatpush1.msra.mxu0 0.0
  %501 = vmatprep.subr.mxu0 0.0
  %502 = vmatpush1.msra.mxu0 0.0
  %503 = vmatprep.subr.mxu0 0.0
  %504 = vmatpush1.msra.mxu0 0.0
  %505 = vmatprep.subr.mxu0 0.0
  %506 = vmatpush1.msra.mxu0 0.0
  %507 = vmatprep.subr.mxu0 0.0
  %508 = vmatpush1.msra.mxu0 0.0
  %509 = vmatprep.subr.mxu0 0.0
  %510 = vmatpush1.msra.mxu0 0.0
  %511 = vmatprep.subr.mxu0 0.0
  %512 = vmatpush1.msra.mxu0 0.0
  %513 = vmatprep.subr.mxu0 0.0
  %514 = vmatpush1.msra.mxu0 0.0
  %515 = vmatprep.subr.mxu0 0.0
  %516 = vmatpush1.msra.mxu0 0.0
  %517 = vmatprep.subr.mxu0 0.0
  %518 = vmatpush1.msra.mxu0 0.0
  %519 = vmatprep.subr.mxu0 0.0
  %520 = vmatpush1.msra.mxu0 0.0
  %521 = vmatprep.subr.mxu0 0.0
  %522 = vmatpush1.msra.mxu0 0.0
  %523 = vmatprep.subr.mxu0 0.0
  %524 = vmatpush1.msra.mxu0 0.0
  %525 = vmatprep.subr.mxu0 0.0
  %526 = vmatpush1.msra.mxu0 0.0
  %527 = vmatprep.subr.mxu0 0.0
  %528 = vmatpush1.msra.mxu0 0.0
  %529 = vmatprep.subr.mxu0 0.0
  %530 = vmatpush1.msra.mxu0 0.0
  %531 = vmatprep.subr.mxu0 0.0
  %532 = vmatpush1.msra.mxu0 0.0
  %533 = vmatprep.subr.mxu0 0.0
  %534 = vmatpush1.msra.mxu0 0.0
  %535 = vmatprep.subr.mxu0 0.0
  %536 = vmatpush1.msra.mxu0 0.0
  %537 = vmatprep.subr.mxu0 0.0
  %538 = vmatpush1.msra.mxu0 0.0
  %539 = vmatprep.subr.mxu0 0.0
  %540 = vmatpush1.msra.mxu0 0.0
  %541 = vmatprep.subr.mxu0 0.0
  %542 = vmatpush1.msra.mxu0 0.0
  %543 = vmatprep.subr.mxu0 0.0
  %544 = vmatpush1.msra.mxu0 0.0
  %545 = vmatprep.subr.mxu0 0.0
  %546 = vmatpush1.msra.mxu0 0.0
  %547 = vmatprep.subr.mxu0 0.0
  %548 = vmatpush1.msra.mxu0 0.0
  %549 = vmatprep.mubr.f32.mxu0 0.0
  %550 = vmatmul.mubr.f32.gmra.mrb[0].mxu0 %v477
  %v551 = vpop.f32.mrb[0].mxu0
  %v552 = vadd.f32 0.0, %v551
  %v553 = vpop.f32.mrb[0].mxu0
  %554 = vmatprep.mubr.f32.mxu0 0.0
  %555 = vmatmul.mubr.f32.gmra.mrb[0].mxu0 %v480
  %v556 = vpop.f32.mrb[0].mxu0
  %v557 = vadd.f32 0.0, %v556
  %v558 = vpop.f32.mrb[0].mxu0
  %559 = vdwg.mxu0
  %560 = vst [vmem:[%s9] sm:$0xff] %v552
  %561 = vst [vmem:[%s9 + $0x8] sm:$0xff] %v557
  // Predicated region
  $region34: #{vq_cvae_forward.11} parent=0 // pred_check
    _
  $region35: #{vq_cvae_forward.11} parent=0 // pred_check_branch
    %563 = sbr.rel (0) target = $region37
  $region36: #{vq_cvae_forward.11} parent=0 // pred_region
    _
  $region37: #{vq_cvae_forward.11} parent=0 // pred_fallthru
    _
  // Predicated region
  $region38: #{vq_cvae_forward.11} parent=0 // pred_check
    _
  $region39: #{vq_cvae_forward.11} parent=0 // pred_check_branch
    %565 = sbr.rel (0) target = $region41
  $region40: #{vq_cvae_forward.11} parent=0 // pred_region
    _
  $region41: #{vq_cvae_forward.11} parent=0 // pred_fallthru
    _
  // Predicated region
  $region42: #{vq_cvae_forward.11} parent=0 // pred_check
    _
  $region43: #{vq_cvae_forward.11} parent=0 // pred_check_branch
    %567 = sbr.rel (0) target = $region45
  $region44: #{vq_cvae_forward.11} parent=0 // pred_region
    _
  $region45: #{vq_cvae_forward.11} parent=0 // pred_fallthru
    _
  // Predicated region
  $region46: #{vq_cvae_forward.11} parent=0 // pred_check
    _
  $region47: #{vq_cvae_forward.11} parent=0 // pred_check_branch
    %569 = sbr.rel (0) target = $region49
  $region48: #{vq_cvae_forward.11} parent=0 // pred_region
    _
  $region49: #{vq_cvae_forward.11} parent=0 // pred_fallthru
    _
  // Predicated region
  $region50: #{vq_cvae_forward.11} parent=0 // pred_check
    _
  $region51: #{vq_cvae_forward.11} parent=0 // pred_check_branch
    %571 = sbr.rel (0) target = $region53
  $region52: #{vq_cvae_forward.11} parent=0 // pred_region
    _
  $region53: #{vq_cvae_forward.11} parent=0 // pred_fallthru
    _
  // Predicated region
  $region54: #{vq_cvae_forward.11} parent=0 // pred_check
    _
  $region55: #{vq_cvae_forward.11} parent=0 // pred_check_branch
    %573 = sbr.rel (0) target = $region57
  $region56: #{vq_cvae_forward.11} parent=0 // pred_region
    _
  $region57: #{vq_cvae_forward.11} parent=0 // pred_fallthru
    _

// kernel: vq_cvae_forward.12
$region0: #{vq_cvae_forward.12}
  #allocation0 [shape = 'u32[]', space=smem, size = 0x4, offset = 0x4, fixed_abs, tag = 'smem constant byte address 0x4 - core index']
  #allocation1 [shape = 'u32[144,128]{1,0:T(1,128)}', space=vmem, size = 0x12000, scoped, tag = 'internal scratch']
  %s0 = inlined_call_operand.vmem [shape: bf16[16,144], index: 0, kind: input, shape index: {}]
  %s1 = inlined_call_operand.vmem [shape: bf16[144,128], index: 1, kind: input, shape index: {}]
  %s2 = inlined_call_operand.vmem [shape: bf16[16,16], index: 2, kind: input, shape index: {}]
  %s3 = inlined_call_operand.vmem [shape: bf16[16,128], index: 3, kind: input, shape index: {}]
  %s4 = inlined_call_operand.vmem [shape: f32[16,1], index: 4, kind: input, shape index: {}]
  %s5 = inlined_call_operand.vmem [shape: f32[16,2], index: 5, kind: input, shape index: {}]
  %s6 = inlined_call_operand.vmem [shape: bf16[16,128], index: 6, kind: output, shape index: {}]
  %s7 = sld [smem:[#allocation0]]
  $region34: #{vq_cvae_forward.12} parent=0
    _
  %s9 = ssub.s32 1, %s7
  %s10 = scalar_select 0, %s9, %s7
  // Predicated region
  $region2: #{vq_cvae_forward.12} parent=0 // pred_check
    _
  $region3: #{vq_cvae_forward.12} parent=0 // pred_check_branch
    %12 = sbr.rel (0) target = $region5
  $region4: #{vq_cvae_forward.12} parent=0 // pred_region
    _
  $region5: #{vq_cvae_forward.12} parent=0 // pred_fallthru
    _
  // Predicated region
  $region6: #{vq_cvae_forward.12} parent=0 // pred_check
    _
  $region7: #{vq_cvae_forward.12} parent=0 // pred_check_branch
    %14 = sbr.rel (0) target = $region9
  $region8: #{vq_cvae_forward.12} parent=0 // pred_region
    _
  $region9: #{vq_cvae_forward.12} parent=0 // pred_fallthru
    _
  // Predicated region
  $region10: #{vq_cvae_forward.12} parent=0 // pred_check
    _
  $region11: #{vq_cvae_forward.12} parent=0 // pred_check_branch
    %16 = sbr.rel (0) target = $region13
  $region12: #{vq_cvae_forward.12} parent=0 // pred_region
    _
  $region13: #{vq_cvae_forward.12} parent=0 // pred_fallthru
    _
  // Predicated region
  $region14: #{vq_cvae_forward.12} parent=0 // pred_check
    _
  $region15: #{vq_cvae_forward.12} parent=0 // pred_check_branch
    %18 = sbr.rel (0) target = $region17
  $region16: #{vq_cvae_forward.12} parent=0 // pred_region
    _
  $region17: #{vq_cvae_forward.12} parent=0 // pred_fallthru
    _
  // Predicated region
  $region18: #{vq_cvae_forward.12} parent=0 // pred_check
    _
  $region19: #{vq_cvae_forward.12} parent=0 // pred_check_branch
    %20 = sbr.rel (0) target = $region21
  $region20: #{vq_cvae_forward.12} parent=0 // pred_region
    _
  $region21: #{vq_cvae_forward.12} parent=0 // pred_fallthru
    _
  // Predicated region
  $region22: #{vq_cvae_forward.12} parent=0 // pred_check
    _
  $region23: #{vq_cvae_forward.12} parent=0 // pred_check_branch
    %22 = sbr.rel (0) target = $region25
  $region24: #{vq_cvae_forward.12} parent=0 // pred_region
    _
  $region25: #{vq_cvae_forward.12} parent=0 // pred_fallthru
    _
  %v24 = vld [vmem:[%s1] sm:$0xf]
  %v25 = vld [vmem:[%s1 + $0x4] sm:$0xf]
  %v26 = vld [vmem:[%s1 + $0x8] sm:$0xf]
  %v27 = vld [vmem:[%s1 + $0xc] sm:$0xf]
  %v28 = vld [vmem:[%s1 + $0x10] sm:$0xf]
  %v29 = vld [vmem:[%s1 + $0x14] sm:$0xf]
  %v30 = vld [vmem:[%s1 + $0x18] sm:$0xf]
  %v31 = vld [vmem:[%s1 + $0x1c] sm:$0xf]
  %v32 = vld [vmem:[%s1 + $0x20] sm:$0xf]
  %v33 = vld [vmem:[%s1 + $0x24] sm:$0xf]
  %v34 = vld [vmem:[%s1 + $0x28] sm:$0xf]
  %v35 = vld [vmem:[%s1 + $0x2c] sm:$0xf]
  %v36 = vld [vmem:[%s1 + $0x30] sm:$0xf]
  %v37 = vld [vmem:[%s1 + $0x34] sm:$0xf]
  %v38 = vld [vmem:[%s1 + $0x38] sm:$0xf]
  %v39 = vld [vmem:[%s1 + $0x3c] sm:$0xf]
  %v40 = vld [vmem:[%s1 + $0x40] sm:$0xf]
  %v41 = vld [vmem:[%s1 + $0x44] sm:$0xf]
  %v42 = vmax.bf16 %v24, 0
  %v43 = vmax.bf16 %v25, 0
  %v44 = vmax.bf16 %v26, 0
  %v45 = vmax.bf16 %v27, 0
  %v46 = vmax.bf16 %v28, 0
  %v47 = vmax.bf16 %v29, 0
  %v48 = vmax.bf16 %v30, 0
  %v49 = vmax.bf16 %v31, 0
  %v50 = vmax.bf16 %v32, 0
  %v51 = vmax.bf16 %v33, 0
  %v52 = vmax.bf16 %v34, 0
  %v53 = vmax.bf16 %v35, 0
  %v54 = vmax.bf16 %v36, 0
  %v55 = vmax.bf16 %v37, 0
  %v56 = vmax.bf16 %v38, 0
  %v57 = vmax.bf16 %v39, 0
  %v58 = vmax.bf16 %v40, 0
  %v59 = vmax.bf16 %v41, 0
  %v60 = vld [vmem:[%s0] sm:$0xff]
  %v61 = vld [vmem:[%s0 + $0x8] sm:$0xff]
  %v62 = vld [vmem:[%s4] sm:$0xff]
  %v63 = vld [vmem:[%s4 + $0x8] sm:$0xff]
  %65 = vset.pattern.permute.xlu0 0
  %66 = vperm.xlu0 %65, %v62
  %v67 = vpop.permute.xlu0 %66
  %70 = vset.pattern.permute.xlu0 0
  %71 = vperm.xlu0 %70, %v63
  %v72 = vpop.permute.xlu0 %71
  %v76 = vunpack.c.l.b16 %v60
  %v77 = vunpack.c.h.b16 %v60
  %v78 = vunpack.c.l.b16 %v61
  %v79 = vunpack.c.h.b16 %v61
  %v80 = vpack.c.b16 %v78, %v76
  %v81 = vpack.c.b16 %v79, %v77
  %v101 = vunpack.c.l.b16 %v42
  %v102 = vunpack.c.l.b16 %v43
  %v103 = vunpack.c.l.b16 %v44
  %v104 = vunpack.c.l.b16 %v45
  %v105 = vunpack.c.l.b16 %v46
  %v106 = vunpack.c.l.b16 %v47
  %v107 = vunpack.c.l.b16 %v48
  %v108 = vunpack.c.l.b16 %v49
  %v109 = vunpack.c.l.b16 %v50
  %v110 = vunpack.c.l.b16 %v51
  %v111 = vunpack.c.l.b16 %v52
  %v112 = vunpack.c.l.b16 %v53
  %v113 = vunpack.c.l.b16 %v54
  %v114 = vunpack.c.l.b16 %v55
  %v115 = vunpack.c.l.b16 %v56
  %v116 = vunpack.c.l.b16 %v57
  %v117 = vunpack.c.l.b16 %v58
  %v118 = vunpack.c.l.b16 %v59
  %v119 = vpack.c.b16 %v102, %v101
  %v120 = vpack.c.b16 %v104, %v103
  %v121 = vpack.c.b16 %v106, %v105
  %v122 = vpack.c.b16 %v108, %v107
  %v123 = vpack.c.b16 %v110, %v109
  %v124 = vpack.c.b16 %v112, %v111
  %v125 = vpack.c.b16 %v114, %v113
  %v126 = vpack.c.b16 %v116, %v115
  %v127 = vpack.c.b16 %v118, %v117
  %vm137 = vcmask 130048
  %v139 = vsel %vm137, %v81, 0
  %141 = vmatprep.subr.bf16.mxu0 0
  %142 = vmatpush1.bf16.msra.mxu0 %v119
  %143 = vmatprep.subr.bf16.mxu0 0
  %144 = vmatpush1.bf16.msra.mxu0 %v120
  %145 = vmatprep.subr.bf16.mxu0 0
  %146 = vmatpush1.bf16.msra.mxu0 %v121
  %147 = vmatprep.subr.bf16.mxu0 0
  %148 = vmatpush1.bf16.msra.mxu0 %v122
  %149 = vmatprep.subr.bf16.mxu0 0
  %150 = vmatpush1.bf16.msra.mxu0 %v123
  %151 = vmatprep.subr.bf16.mxu0 0
  %152 = vmatpush1.bf16.msra.mxu0 %v124
  %153 = vmatprep.subr.bf16.mxu0 0
  %154 = vmatpush1.bf16.msra.mxu0 %v125
  %155 = vmatprep.subr.bf16.mxu0 0
  %156 = vmatpush1.bf16.msra.mxu0 %v126
  %157 = vmatprep.subr.bf16.mxu0 0
  %158 = vmatpush1.bf16.msra.mxu0 %v127
  %159 = vmatprep.subr.bf16.mxu0 0
  %160 = vmatpush1.bf16.msra.mxu0 0
  %161 = vmatprep.subr.bf16.mxu0 0
  %162 = vmatpush1.bf16.msra.mxu0 0
  %163 = vmatprep.subr.bf16.mxu0 0
  %164 = vmatpush1.bf16.msra.mxu0 0
  %165 = vmatprep.subr.bf16.mxu0 0
  %166 = vmatpush1.bf16.msra.mxu0 0
  %167 = vmatprep.subr.bf16.mxu0 0
  %168 = vmatpush1.bf16.msra.mxu0 0
  %169 = vmatprep.subr.bf16.mxu0 0
  %170 = vmatpush1.bf16.msra.mxu0 0
  %171 = vmatprep.subr.bf16.mxu0 0
  %172 = vmatpush1.bf16.msra.mxu0 0
  %173 = vmatprep.mubr.bf16.mxu0 %v139
  %174 = vmatmul.mubr.bf16.gmra.mrb[0].mxu0 %v80
  %v175 = vpop.f32.mrb[0].mxu0
  %v176 = vadd.f32 %v67, %v175
  %v177 = vpop.f32.mrb[0].mxu0
  %v178 = vpop.f32.mrb[0].mxu0
  %v179 = vadd.f32 %v72, %v178
  %v180 = vpop.f32.mrb[0].mxu0
  %181 = vdwg.mxu0
  %v182 = vmax.f32 %v176, 0.0
  %v183 = vmax.f32 %v179, 0.0
  %v184 = vld [vmem:[%s2] sm:$0xf]
  %v185 = vld [vmem:[%s2 + $0x4] sm:$0xf]
  %v186 = vpack.c.bf16 %v183, %v182
  %v187 = vld [vmem:[%s3] sm:$0xf]
  %v188 = vld [vmem:[%s3 + $0x4] sm:$0xf]
  %v189 = vunpack.c.l.bf16 %v187
  %v190 = vunpack.c.l.bf16 %v188
  %v193 = vunpack.c.l.b16 %v184
  %v194 = vunpack.c.l.b16 %v185
  %v195 = vpack.c.b16 %v194, %v193
  %v197 = vsel %vm137, %v195, 0
  %199 = vmatprep.subr.bf16.mxu0 0
  %200 = vmatpush1.bf16.msra.mxu0 %v186
  %201 = vmatprep.subr.bf16.mxu0 0
  %202 = vmatpush1.bf16.msra.mxu0 0
  %203 = vmatprep.subr.bf16.mxu0 0
  %204 = vmatpush1.bf16.msra.mxu0 0
  %205 = vmatprep.subr.bf16.mxu0 0
  %206 = vmatpush1.bf16.msra.mxu0 0
  %207 = vmatprep.subr.bf16.mxu0 0
  %208 = vmatpush1.bf16.msra.mxu0 0
  %209 = vmatprep.subr.bf16.mxu0 0
  %210 = vmatpush1.bf16.msra.mxu0 0
  %211 = vmatprep.subr.bf16.mxu0 0
  %212 = vmatpush1.bf16.msra.mxu0 0
  %213 = vmatprep.subr.bf16.mxu0 0
  %214 = vmatpush1.bf16.msra.mxu0 0
  %215 = vmatprep.subr.bf16.mxu0 0
  %216 = vmatpush1.bf16.msra.mxu0 0
  %217 = vmatprep.subr.bf16.mxu0 0
  %218 = vmatpush1.bf16.msra.mxu0 0
  %219 = vmatprep.subr.bf16.mxu0 0
  %220 = vmatpush1.bf16.msra.mxu0 0
  %221 = vmatprep.subr.bf16.mxu0 0
  %222 = vmatpush1.bf16.msra.mxu0 0
  %223 = vmatprep.subr.bf16.mxu0 0
  %224 = vmatpush1.bf16.msra.mxu0 0
  %225 = vmatprep.subr.bf16.mxu0 0
  %226 = vmatpush1.bf16.msra.mxu0 0
  %227 = vmatprep.subr.bf16.mxu0 0
  %228 = vmatpush1.bf16.msra.mxu0 0
  %229 = vmatprep.subr.bf16.mxu0 0
  %230 = vmatpush1.bf16.msra.mxu0 0
  %231 = vmatprep.mubr.bf16.mxu0 0
  %232 = vmatmul.mubr.bf16.gmra.mrb[0].mxu0 %v197
  %v233 = vpop.f32.mrb[0].mxu0
  %v234 = vadd.f32 %v189, %v233
  %v235 = vpop.f32.mrb[0].mxu0
  %v236 = vpop.f32.mrb[0].mxu0
  %v237 = vadd.f32 %v190, %v236
  %v238 = vpop.f32.mrb[0].mxu0
  %239 = vdwg.mxu0
  %240 = vadd.xlane.f32.xlu0 %v234
  %v241 = vpop.xlane.xlu0 %240
  %242 = vadd.xlane.f32.xlu0 %v237
  %v243 = vpop.xlane.xlu0 %242
  %v244 = vrcp.pop 128.0
  %v245 = vmul.f32 %v241, %v244
  %v246 = vmul.f32 %v243, %v244
  %v247 = vsub.f32 %v234, %v245
  %v248 = vsub.f32 %v237, %v246
  %v249 = vmul.f32 %v247, %v247
  %v250 = vmul.f32 %v248, %v248
  %251 = vadd.xlane.f32.xlu0 %v249
  %v252 = vpop.xlane.xlu0 %251
  %253 = vadd.xlane.f32.xlu0 %v250
  %v254 = vpop.xlane.xlu0 %253
  %v255 = vmul.f32 %v252, %v244
  %v256 = vmul.f32 %v254, %v244
  %v257 = vld [vmem:[%s5] sm:$0xff]
  %v258 = vld [vmem:[%s5 + $0x8] sm:$0xff]
  %v259 = vadd.f32 %v255, 1e-05
  %v260 = vadd.f32 %v256, 1e-05
  %v261 = vrsqrt.pop %v259
  %v262 = vrsqrt.pop %v260
  %v263 = vmul.f32 %v247, %v261
  %v264 = vmul.f32 %v248, %v262
  %266 = vset.pattern.permute.xlu0 0
  %267 = vperm.xlu0 %266, %v257
  %v268 = vpop.permute.xlu0 %267
  %271 = vset.pattern.permute.xlu0 0
  %272 = vperm.xlu0 %271, %v258
  %v273 = vpop.permute.xlu0 %272
  %v275 = vmul.f32 %v263, %v268
  %v276 = vmul.f32 %v264, %v273
  %277 = vset.pattern.permute.xlu0 1
  %278 = vperm.xlu0 %277, %v257
  %v279 = vpop.permute.xlu0 %278
  %281 = vset.pattern.permute.xlu0 1
  %282 = vperm.xlu0 %281, %v258
  %v283 = vpop.permute.xlu0 %282
  %v285 = vadd.f32 %v275, %v279
  %v286 = vadd.f32 %v276, %v283
  %v287 = vpack.c.bf16 %v286, %v285
  %v289 = vunpack.c.l.b16 %v287
  %v290 = vunpack.c.h.b16 %v287
  %v291 = vpack.c.b16 %v289, %v289
  %v292 = vpack.c.b16 %v290, %v290
  %295 = vst [vmem:[%s6] sm:$0xf] %v291
  %296 = vst [vmem:[%s6 + $0x4] sm:$0xf] %v292
  // Predicated region
  $region26: #{vq_cvae_forward.12} parent=0 // pred_check
    _
  $region27: #{vq_cvae_forward.12} parent=0 // pred_check_branch
    %298 = sbr.rel (0) target = $region29
  $region28: #{vq_cvae_forward.12} parent=0 // pred_region
    _
  $region29: #{vq_cvae_forward.12} parent=0 // pred_fallthru
    _
  // Predicated region
  $region30: #{vq_cvae_forward.12} parent=0 // pred_check
    _
  $region31: #{vq_cvae_forward.12} parent=0 // pred_check_branch
    %300 = sbr.rel (0) target = $region33
  $region32: #{vq_cvae_forward.12} parent=0 // pred_region
    _
  $region33: #{vq_cvae_forward.12} parent=0 // pred_fallthru
    _

// kernel: vq_cvae_forward.13
$region0: #{vq_cvae_forward.13}
  #allocation0 [shape = 'u32[]', space=smem, size = 0x4, offset = 0x4, fixed_abs, tag = 'smem constant byte address 0x4 - core index']
  #allocation1 [shape = 'u32[144,128]{1,0:T(1,128)}', space=vmem, size = 0x12000, scoped, tag = 'internal scratch']
  %s0 = inlined_call_operand.vmem [shape: bf16[16,144], index: 0, kind: input, shape index: {}]
  %s1 = inlined_call_operand.vmem [shape: bf16[144,128], index: 1, kind: input, shape index: {}]
  %s2 = inlined_call_operand.vmem [shape: bf16[16,16], index: 2, kind: input, shape index: {}]
  %s3 = inlined_call_operand.vmem [shape: bf16[16,128], index: 3, kind: input, shape index: {}]
  %s4 = inlined_call_operand.vmem [shape: f32[16,1], index: 4, kind: input, shape index: {}]
  %s5 = inlined_call_operand.vmem [shape: f32[16,1], index: 5, kind: input, shape index: {}]
  %s6 = inlined_call_operand.vmem [shape: bf16[16,128], index: 6, kind: output, shape index: {}]
  %s7 = sld [smem:[#allocation0]]
  $region34: #{vq_cvae_forward.13} parent=0
    _
  %s9 = ssub.s32 1, %s7
  %s10 = scalar_select 0, %s9, %s7
  // Predicated region
  $region2: #{vq_cvae_forward.13} parent=0 // pred_check
    _
  $region3: #{vq_cvae_forward.13} parent=0 // pred_check_branch
    %12 = sbr.rel (0) target = $region5
  $region4: #{vq_cvae_forward.13} parent=0 // pred_region
    _
  $region5: #{vq_cvae_forward.13} parent=0 // pred_fallthru
    _
  // Predicated region
  $region6: #{vq_cvae_forward.13} parent=0 // pred_check
    _
  $region7: #{vq_cvae_forward.13} parent=0 // pred_check_branch
    %14 = sbr.rel (0) target = $region9
  $region8: #{vq_cvae_forward.13} parent=0 // pred_region
    _
  $region9: #{vq_cvae_forward.13} parent=0 // pred_fallthru
    _
  // Predicated region
  $region10: #{vq_cvae_forward.13} parent=0 // pred_check
    _
  $region11: #{vq_cvae_forward.13} parent=0 // pred_check_branch
    %16 = sbr.rel (0) target = $region13
  $region12: #{vq_cvae_forward.13} parent=0 // pred_region
    _
  $region13: #{vq_cvae_forward.13} parent=0 // pred_fallthru
    _
  // Predicated region
  $region14: #{vq_cvae_forward.13} parent=0 // pred_check
    _
  $region15: #{vq_cvae_forward.13} parent=0 // pred_check_branch
    %18 = sbr.rel (0) target = $region17
  $region16: #{vq_cvae_forward.13} parent=0 // pred_region
    _
  $region17: #{vq_cvae_forward.13} parent=0 // pred_fallthru
    _
  // Predicated region
  $region18: #{vq_cvae_forward.13} parent=0 // pred_check
    _
  $region19: #{vq_cvae_forward.13} parent=0 // pred_check_branch
    %20 = sbr.rel (0) target = $region21
  $region20: #{vq_cvae_forward.13} parent=0 // pred_region
    _
  $region21: #{vq_cvae_forward.13} parent=0 // pred_fallthru
    _
  // Predicated region
  $region22: #{vq_cvae_forward.13} parent=0 // pred_check
    _
  $region23: #{vq_cvae_forward.13} parent=0 // pred_check_branch
    %22 = sbr.rel (0) target = $region25
  $region24: #{vq_cvae_forward.13} parent=0 // pred_region
    _
  $region25: #{vq_cvae_forward.13} parent=0 // pred_fallthru
    _
  %v24 = vld [vmem:[%s1] sm:$0xf]
  %v25 = vld [vmem:[%s1 + $0x4] sm:$0xf]
  %v26 = vld [vmem:[%s1 + $0x8] sm:$0xf]
  %v27 = vld [vmem:[%s1 + $0xc] sm:$0xf]
  %v28 = vld [vmem:[%s1 + $0x10] sm:$0xf]
  %v29 = vld [vmem:[%s1 + $0x14] sm:$0xf]
  %v30 = vld [vmem:[%s1 + $0x18] sm:$0xf]
  %v31 = vld [vmem:[%s1 + $0x1c] sm:$0xf]
  %v32 = vld [vmem:[%s1 + $0x20] sm:$0xf]
  %v33 = vld [vmem:[%s1 + $0x24] sm:$0xf]
  %v34 = vld [vmem:[%s1 + $0x28] sm:$0xf]
  %v35 = vld [vmem:[%s1 + $0x2c] sm:$0xf]
  %v36 = vld [vmem:[%s1 + $0x30] sm:$0xf]
  %v37 = vld [vmem:[%s1 + $0x34] sm:$0xf]
  %v38 = vld [vmem:[%s1 + $0x38] sm:$0xf]
  %v39 = vld [vmem:[%s1 + $0x3c] sm:$0xf]
  %v40 = vld [vmem:[%s1 + $0x40] sm:$0xf]
  %v41 = vld [vmem:[%s1 + $0x44] sm:$0xf]
  %v42 = vmax.bf16 %v24, 0
  %v43 = vmax.bf16 %v25, 0
  %v44 = vmax.bf16 %v26, 0
  %v45 = vmax.bf16 %v27, 0
  %v46 = vmax.bf16 %v28, 0
  %v47 = vmax.bf16 %v29, 0
  %v48 = vmax.bf16 %v30, 0
  %v49 = vmax.bf16 %v31, 0
  %v50 = vmax.bf16 %v32, 0
  %v51 = vmax.bf16 %v33, 0
  %v52 = vmax.bf16 %v34, 0
  %v53 = vmax.bf16 %v35, 0
  %v54 = vmax.bf16 %v36, 0
  %v55 = vmax.bf16 %v37, 0
  %v56 = vmax.bf16 %v38, 0
  %v57 = vmax.bf16 %v39, 0
  %v58 = vmax.bf16 %v40, 0
  %v59 = vmax.bf16 %v41, 0
  %v60 = vld [vmem:[%s0] sm:$0xff]
  %v61 = vld [vmem:[%s0 + $0x8] sm:$0xff]
  %v62 = vld [vmem:[%s4] sm:$0xff]
  %v63 = vld [vmem:[%s4 + $0x8] sm:$0xff]
  %65 = vset.pattern.permute.xlu0 0
  %66 = vperm.xlu0 %65, %v62
  %v67 = vpop.permute.xlu0 %66
  %70 = vset.pattern.permute.xlu0 0
  %71 = vperm.xlu0 %70, %v63
  %v72 = vpop.permute.xlu0 %71
  %v76 = vunpack.c.l.b16 %v60
  %v77 = vunpack.c.h.b16 %v60
  %v78 = vunpack.c.l.b16 %v61
  %v79 = vunpack.c.h.b16 %v61
  %v80 = vpack.c.b16 %v78, %v76
  %v81 = vpack.c.b16 %v79, %v77
  %v101 = vunpack.c.l.b16 %v42
  %v102 = vunpack.c.l.b16 %v43
  %v103 = vunpack.c.l.b16 %v44
  %v104 = vunpack.c.l.b16 %v45
  %v105 = vunpack.c.l.b16 %v46
  %v106 = vunpack.c.l.b16 %v47
  %v107 = vunpack.c.l.b16 %v48
  %v108 = vunpack.c.l.b16 %v49
  %v109 = vunpack.c.l.b16 %v50
  %v110 = vunpack.c.l.b16 %v51
  %v111 = vunpack.c.l.b16 %v52
  %v112 = vunpack.c.l.b16 %v53
  %v113 = vunpack.c.l.b16 %v54
  %v114 = vunpack.c.l.b16 %v55
  %v115 = vunpack.c.l.b16 %v56
  %v116 = vunpack.c.l.b16 %v57
  %v117 = vunpack.c.l.b16 %v58
  %v118 = vunpack.c.l.b16 %v59
  %v119 = vpack.c.b16 %v102, %v101
  %v120 = vpack.c.b16 %v104, %v103
  %v121 = vpack.c.b16 %v106, %v105
  %v122 = vpack.c.b16 %v108, %v107
  %v123 = vpack.c.b16 %v110, %v109
  %v124 = vpack.c.b16 %v112, %v111
  %v125 = vpack.c.b16 %v114, %v113
  %v126 = vpack.c.b16 %v116, %v115
  %v127 = vpack.c.b16 %v118, %v117
  %vm137 = vcmask 130048
  %v139 = vsel %vm137, %v81, 0
  %141 = vmatprep.subr.bf16.mxu0 0
  %142 = vmatpush1.bf16.msra.mxu0 %v119
  %143 = vmatprep.subr.bf16.mxu0 0
  %144 = vmatpush1.bf16.msra.mxu0 %v120
  %145 = vmatprep.subr.bf16.mxu0 0
  %146 = vmatpush1.bf16.msra.mxu0 %v121
  %147 = vmatprep.subr.bf16.mxu0 0
  %148 = vmatpush1.bf16.msra.mxu0 %v122
  %149 = vmatprep.subr.bf16.mxu0 0
  %150 = vmatpush1.bf16.msra.mxu0 %v123
  %151 = vmatprep.subr.bf16.mxu0 0
  %152 = vmatpush1.bf16.msra.mxu0 %v124
  %153 = vmatprep.subr.bf16.mxu0 0
  %154 = vmatpush1.bf16.msra.mxu0 %v125
  %155 = vmatprep.subr.bf16.mxu0 0
  %156 = vmatpush1.bf16.msra.mxu0 %v126
  %157 = vmatprep.subr.bf16.mxu0 0
  %158 = vmatpush1.bf16.msra.mxu0 %v127
  %159 = vmatprep.subr.bf16.mxu0 0
  %160 = vmatpush1.bf16.msra.mxu0 0
  %161 = vmatprep.subr.bf16.mxu0 0
  %162 = vmatpush1.bf16.msra.mxu0 0
  %163 = vmatprep.subr.bf16.mxu0 0
  %164 = vmatpush1.bf16.msra.mxu0 0
  %165 = vmatprep.subr.bf16.mxu0 0
  %166 = vmatpush1.bf16.msra.mxu0 0
  %167 = vmatprep.subr.bf16.mxu0 0
  %168 = vmatpush1.bf16.msra.mxu0 0
  %169 = vmatprep.subr.bf16.mxu0 0
  %170 = vmatpush1.bf16.msra.mxu0 0
  %171 = vmatprep.subr.bf16.mxu0 0
  %172 = vmatpush1.bf16.msra.mxu0 0
  %173 = vmatprep.mubr.bf16.mxu0 %v139
  %174 = vmatmul.mubr.bf16.gmra.mrb[0].mxu0 %v80
  %v175 = vpop.f32.mrb[0].mxu0
  %v176 = vadd.f32 %v67, %v175
  %v177 = vpop.f32.mrb[0].mxu0
  %v178 = vpop.f32.mrb[0].mxu0
  %v179 = vadd.f32 %v72, %v178
  %v180 = vpop.f32.mrb[0].mxu0
  %181 = vdwg.mxu0
  %v182 = vmax.f32 %v176, 0.0
  %v183 = vmax.f32 %v179, 0.0
  %v184 = vld [vmem:[%s2] sm:$0xf]
  %v185 = vld [vmem:[%s2 + $0x4] sm:$0xf]
  %v186 = vpack.c.bf16 %v183, %v182
  %v187 = vld [vmem:[%s5] sm:$0xff]
  %v188 = vld [vmem:[%s5 + $0x8] sm:$0xff]
  %190 = vset.pattern.permute.xlu0 0
  %191 = vperm.xlu0 %190, %v187
  %v192 = vpop.permute.xlu0 %191
  %195 = vset.pattern.permute.xlu0 0
  %196 = vperm.xlu0 %195, %v188
  %v197 = vpop.permute.xlu0 %196
  %v201 = vunpack.c.l.b16 %v184
  %v202 = vunpack.c.l.b16 %v185
  %v203 = vpack.c.b16 %v202, %v201
  %v205 = vsel %vm137, %v203, 0
  %207 = vmatprep.subr.bf16.mxu0 0
  %208 = vmatpush1.bf16.msra.mxu0 %v186
  %209 = vmatprep.subr.bf16.mxu0 0
  %210 = vmatpush1.bf16.msra.mxu0 0
  %211 = vmatprep.subr.bf16.mxu0 0
  %212 = vmatpush1.bf16.msra.mxu0 0
  %213 = vmatprep.subr.bf16.mxu0 0
  %214 = vmatpush1.bf16.msra.mxu0 0
  %215 = vmatprep.subr.bf16.mxu0 0
  %216 = vmatpush1.bf16.msra.mxu0 0
  %217 = vmatprep.subr.bf16.mxu0 0
  %218 = vmatpush1.bf16.msra.mxu0 0
  %219 = vmatprep.subr.bf16.mxu0 0
  %220 = vmatpush1.bf16.msra.mxu0 0
  %221 = vmatprep.subr.bf16.mxu0 0
  %222 = vmatpush1.bf16.msra.mxu0 0
  %223 = vmatprep.subr.bf16.mxu0 0
  %224 = vmatpush1.bf16.msra.mxu0 0
  %225 = vmatprep.subr.bf16.mxu0 0
  %226 = vmatpush1.bf16.msra.mxu0 0
  %227 = vmatprep.subr.bf16.mxu0 0
  %228 = vmatpush1.bf16.msra.mxu0 0
  %229 = vmatprep.subr.bf16.mxu0 0
  %230 = vmatpush1.bf16.msra.mxu0 0
  %231 = vmatprep.subr.bf16.mxu0 0
  %232 = vmatpush1.bf16.msra.mxu0 0
  %233 = vmatprep.subr.bf16.mxu0 0
  %234 = vmatpush1.bf16.msra.mxu0 0
  %235 = vmatprep.subr.bf16.mxu0 0
  %236 = vmatpush1.bf16.msra.mxu0 0
  %237 = vmatprep.subr.bf16.mxu0 0
  %238 = vmatpush1.bf16.msra.mxu0 0
  %239 = vmatprep.mubr.bf16.mxu0 0
  %240 = vmatmul.mubr.bf16.gmra.mrb[0].mxu0 %v205
  %v241 = vpop.f32.mrb[0].mxu0
  %v242 = vadd.f32 %v192, %v241
  %v243 = vpop.f32.mrb[0].mxu0
  %v244 = vpop.f32.mrb[0].mxu0
  %v245 = vadd.f32 %v197, %v244
  %v246 = vpop.f32.mrb[0].mxu0
  %247 = vdwg.mxu0
  %v248 = vld [vmem:[%s3] sm:$0xf]
  %v249 = vld [vmem:[%s3 + $0x4] sm:$0xf]
  %v250 = vunpack.c.l.bf16 %v248
  %v251 = vunpack.c.l.bf16 %v249
  %v252 = vadd.f32 %v242, %v250
  %v253 = vadd.f32 %v245, %v251
  %v254 = vpack.c.bf16 %v253, %v252
  %v256 = vunpack.c.l.b16 %v254
  %v257 = vunpack.c.h.b16 %v254
  %v258 = vpack.c.b16 %v256, %v256
  %v259 = vpack.c.b16 %v257, %v257
  %262 = vst [vmem:[%s6] sm:$0xf] %v258
  %263 = vst [vmem:[%s6 + $0x4] sm:$0xf] %v259
  // Predicated region
  $region26: #{vq_cvae_forward.13} parent=0 // pred_check
    _
  $region27: #{vq_cvae_forward.13} parent=0 // pred_check_branch
    %265 = sbr.rel (0) target = $region29
  $region28: #{vq_cvae_forward.13} parent=0 // pred_region
    _
  $region29: #{vq_cvae_forward.13} parent=0 // pred_fallthru
    _
  // Predicated region
  $region30: #{vq_cvae_forward.13} parent=0 // pred_check
    _
  $region31: #{vq_cvae_forward.13} parent=0 // pred_check_branch
    %267 = sbr.rel (0) target = $region33
  $region32: #{vq_cvae_forward.13} parent=0 // pred_region
    _
  $region33: #{vq_cvae_forward.13} parent=0 // pred_fallthru
    _

// kernel: vq_cvae_forward.14
$region0: #{vq_cvae_forward.14}
  #allocation0 [shape = 'u32[]', space=smem, size = 0x4, offset = 0x4, fixed_abs, tag = 'smem constant byte address 0x4 - core index']
  #allocation1 [shape = 'u32[144,128]{1,0:T(1,128)}', space=vmem, size = 0x12000, scoped, tag = 'internal scratch']
  %s0 = inlined_call_operand.vmem [shape: bf16[16,256], index: 0, kind: input, shape index: {}]
  %s1 = inlined_call_operand.vmem [shape: bf16[256,512], index: 1, kind: input, shape index: {}]
  %s2 = inlined_call_operand.vmem [shape: f32[16,2], index: 2, kind: input, shape index: {}]
  %s3 = inlined_call_operand.vmem [shape: bf16[16,512], index: 3, kind: output, shape index: {}]
  %s4 = sld [smem:[#allocation0]]
  $region22: #{vq_cvae_forward.14} parent=0
    _
  %s6 = ssub.s32 1, %s4
  %s7 = scalar_select 0, %s6, %s4
  // Predicated region
  $region2: #{vq_cvae_forward.14} parent=0 // pred_check
    _
  $region3: #{vq_cvae_forward.14} parent=0 // pred_check_branch
    %9 = sbr.rel (0) target = $region5
  $region4: #{vq_cvae_forward.14} parent=0 // pred_region
    _
  $region5: #{vq_cvae_forward.14} parent=0 // pred_fallthru
    _
  // Predicated region
  $region6: #{vq_cvae_forward.14} parent=0 // pred_check
    _
  $region7: #{vq_cvae_forward.14} parent=0 // pred_check_branch
    %11 = sbr.rel (0) target = $region9
  $region8: #{vq_cvae_forward.14} parent=0 // pred_region
    _
  $region9: #{vq_cvae_forward.14} parent=0 // pred_fallthru
    _
  // Predicated region
  $region10: #{vq_cvae_forward.14} parent=0 // pred_check
    _
  $region11: #{vq_cvae_forward.14} parent=0 // pred_check_branch
    %13 = sbr.rel (0) target = $region13
  $region12: #{vq_cvae_forward.14} parent=0 // pred_region
    _
  $region13: #{vq_cvae_forward.14} parent=0 // pred_fallthru
    _
  %v14 = vld [vmem:[%s0] sm:$0xff]
  %v15 = vld [vmem:[%s0 + $0x8] sm:$0xff]
  %v16 = vld [vmem:[%s1] sm:$0xff]
  %v17 = vld [vmem:[%s1 + $0x8] sm:$0xff]
  %v18 = vld [vmem:[%s1 + $0x10] sm:$0xff]
  %v19 = vld [vmem:[%s1 + $0x18] sm:$0xff]
  %v20 = vld [vmem:[%s1 + $0x20] sm:$0xff]
  %v21 = vld [vmem:[%s1 + $0x28] sm:$0xff]
  %v22 = vld [vmem:[%s1 + $0x30] sm:$0xff]
  %v23 = vld [vmem:[%s1 + $0x38] sm:$0xff]
  %v24 = vld [vmem:[%s1 + $0x40] sm:$0xff]
  %v25 = vld [vmem:[%s1 + $0x48] sm:$0xff]
  %v26 = vld [vmem:[%s1 + $0x50] sm:$0xff]
  %v27 = vld [vmem:[%s1 + $0x58] sm:$0xff]
  %v28 = vld [vmem:[%s1 + $0x60] sm:$0xff]
  %v29 = vld [vmem:[%s1 + $0x68] sm:$0xff]
  %v30 = vld [vmem:[%s1 + $0x70] sm:$0xff]
  %v31 = vld [vmem:[%s1 + $0x78] sm:$0xff]
  %v32 = vld [vmem:[%s1 + $0x80] sm:$0xff]
  %v33 = vld [vmem:[%s1 + $0x88] sm:$0xff]
  %v34 = vld [vmem:[%s1 + $0x90] sm:$0xff]
  %v35 = vld [vmem:[%s1 + $0x98] sm:$0xff]
  %v36 = vld [vmem:[%s1 + $0xa0] sm:$0xff]
  %v37 = vld [vmem:[%s1 + $0xa8] sm:$0xff]
  %v38 = vld [vmem:[%s1 + $0xb0] sm:$0xff]
  %v39 = vld [vmem:[%s1 + $0xb8] sm:$0xff]
  %v40 = vld [vmem:[%s1 + $0xc0] sm:$0xff]
  %v41 = vld [vmem:[%s1 + $0xc8] sm:$0xff]
  %v42 = vld [vmem:[%s1 + $0xd0] sm:$0xff]
  %v43 = vld [vmem:[%s1 + $0xd8] sm:$0xff]
  %v44 = vld [vmem:[%s1 + $0xe0] sm:$0xff]
  %v45 = vld [vmem:[%s1 + $0xe8] sm:$0xff]
  %v46 = vld [vmem:[%s1 + $0xf0] sm:$0xff]
  %v47 = vld [vmem:[%s1 + $0xf8] sm:$0xff]
  %v48 = vld [vmem:[%s1 + $0x100] sm:$0xff]
  %v49 = vld [vmem:[%s1 + $0x108] sm:$0xff]
  %v50 = vld [vmem:[%s1 + $0x110] sm:$0xff]
  %v51 = vld [vmem:[%s1 + $0x118] sm:$0xff]
  %v52 = vld [vmem:[%s1 + $0x120] sm:$0xff]
  %v53 = vld [vmem:[%s1 + $0x128] sm:$0xff]
  %v54 = vld [vmem:[%s1 + $0x130] sm:$0xff]
  %v55 = vld [vmem:[%s1 + $0x138] sm:$0xff]
  %v56 = vld [vmem:[%s1 + $0x140] sm:$0xff]
  %v57 = vld [vmem:[%s1 + $0x148] sm:$0xff]
  %v58 = vld [vmem:[%s1 + $0x150] sm:$0xff]
  %v59 = vld [vmem:[%s1 + $0x158] sm:$0xff]
  %v60 = vld [vmem:[%s1 + $0x160] sm:$0xff]
  %v61 = vld [vmem:[%s1 + $0x168] sm:$0xff]
  %v62 = vld [vmem:[%s1 + $0x170] sm:$0xff]
  %v63 = vld [vmem:[%s1 + $0x178] sm:$0xff]
  %v64 = vld [vmem:[%s1 + $0x180] sm:$0xff]
  %v65 = vld [vmem:[%s1 + $0x188] sm:$0xff]
  %v66 = vld [vmem:[%s1 + $0x190] sm:$0xff]
  %v67 = vld [vmem:[%s1 + $0x198] sm:$0xff]
  %v68 = vld [vmem:[%s1 + $0x1a0] sm:$0xff]
  %v69 = vld [vmem:[%s1 + $0x1a8] sm:$0xff]
  %v70 = vld [vmem:[%s1 + $0x1b0] sm:$0xff]
  %v71 = vld [vmem:[%s1 + $0x1b8] sm:$0xff]
  %v72 = vld [vmem:[%s1 + $0x1c0] sm:$0xff]
  %v73 = vld [vmem:[%s1 + $0x1c8] sm:$0xff]
  %v74 = vld [vmem:[%s1 + $0x1d0] sm:$0xff]
  %v75 = vld [vmem:[%s1 + $0x1d8] sm:$0xff]
  %v76 = vld [vmem:[%s1 + $0x1e0] sm:$0xff]
  %v77 = vld [vmem:[%s1 + $0x1e8] sm:$0xff]
  %v78 = vld [vmem:[%s1 + $0x1f0] sm:$0xff]
  %v79 = vld [vmem:[%s1 + $0x1f8] sm:$0xff]
  %v82 = vunpack.c.l.b16 %v14
  %v83 = vunpack.c.h.b16 %v14
  %v84 = vunpack.c.l.b16 %v15
  %v85 = vunpack.c.h.b16 %v15
  %v86 = vpack.c.b16 %v84, %v82
  %v87 = vpack.c.b16 %v85, %v83
  %v154 = vunpack.c.l.b16 %v16
  %v155 = vunpack.c.h.b16 %v16
  %v156 = vunpack.c.l.b16 %v17
  %v157 = vunpack.c.h.b16 %v17
  %v158 = vunpack.c.l.b16 %v18
  %v159 = vunpack.c.h.b16 %v18
  %v160 = vunpack.c.l.b16 %v19
  %v161 = vunpack.c.h.b16 %v19
  %v162 = vunpack.c.l.b16 %v20
  %v163 = vunpack.c.h.b16 %v20
  %v164 = vunpack.c.l.b16 %v21
  %v165 = vunpack.c.h.b16 %v21
  %v166 = vunpack.c.l.b16 %v22
  %v167 = vunpack.c.h.b16 %v22
  %v168 = vunpack.c.l.b16 %v23
  %v169 = vunpack.c.h.b16 %v23
  %v170 = vunpack.c.l.b16 %v24
  %v171 = vunpack.c.h.b16 %v24
  %v172 = vunpack.c.l.b16 %v25
  %v173 = vunpack.c.h.b16 %v25
  %v174 = vunpack.c.l.b16 %v26
  %v175 = vunpack.c.h.b16 %v26
  %v176 = vunpack.c.l.b16 %v27
  %v177 = vunpack.c.h.b16 %v27
  %v178 = vunpack.c.l.b16 %v28
  %v179 = vunpack.c.h.b16 %v28
  %v180 = vunpack.c.l.b16 %v29
  %v181 = vunpack.c.h.b16 %v29
  %v182 = vunpack.c.l.b16 %v30
  %v183 = vunpack.c.h.b16 %v30
  %v184 = vunpack.c.l.b16 %v31
  %v185 = vunpack.c.h.b16 %v31
  %v186 = vunpack.c.l.b16 %v32
  %v187 = vunpack.c.h.b16 %v32
  %v188 = vunpack.c.l.b16 %v33
  %v189 = vunpack.c.h.b16 %v33
  %v190 = vunpack.c.l.b16 %v34
  %v191 = vunpack.c.h.b16 %v34
  %v192 = vunpack.c.l.b16 %v35
  %v193 = vunpack.c.h.b16 %v35
  %v194 = vunpack.c.l.b16 %v36
  %v195 = vunpack.c.h.b16 %v36
  %v196 = vunpack.c.l.b16 %v37
  %v197 = vunpack.c.h.b16 %v37
  %v198 = vunpack.c.l.b16 %v38
  %v199 = vunpack.c.h.b16 %v38
  %v200 = vunpack.c.l.b16 %v39
  %v201 = vunpack.c.h.b16 %v39
  %v202 = vunpack.c.l.b16 %v40
  %v203 = vunpack.c.h.b16 %v40
  %v204 = vunpack.c.l.b16 %v41
  %v205 = vunpack.c.h.b16 %v41
  %v206 = vunpack.c.l.b16 %v42
  %v207 = vunpack.c.h.b16 %v42
  %v208 = vunpack.c.l.b16 %v43
  %v209 = vunpack.c.h.b16 %v43
  %v210 = vunpack.c.l.b16 %v44
  %v211 = vunpack.c.h.b16 %v44
  %v212 = vunpack.c.l.b16 %v45
  %v213 = vunpack.c.h.b16 %v45
  %v214 = vunpack.c.l.b16 %v46
  %v215 = vunpack.c.h.b16 %v46
  %v216 = vunpack.c.l.b16 %v47
  %v217 = vunpack.c.h.b16 %v47
  %v218 = vunpack.c.l.b16 %v48
  %v219 = vunpack.c.h.b16 %v48
  %v220 = vunpack.c.l.b16 %v49
  %v221 = vunpack.c.h.b16 %v49
  %v222 = vunpack.c.l.b16 %v50
  %v223 = vunpack.c.h.b16 %v50
  %v224 = vunpack.c.l.b16 %v51
  %v225 = vunpack.c.h.b16 %v51
  %v226 = vunpack.c.l.b16 %v52
  %v227 = vunpack.c.h.b16 %v52
  %v228 = vunpack.c.l.b16 %v53
  %v229 = vunpack.c.h.b16 %v53
  %v230 = vunpack.c.l.b16 %v54
  %v231 = vunpack.c.h.b16 %v54
  %v232 = vunpack.c.l.b16 %v55
  %v233 = vunpack.c.h.b16 %v55
  %v234 = vunpack.c.l.b16 %v56
  %v235 = vunpack.c.h.b16 %v56
  %v236 = vunpack.c.l.b16 %v57
  %v237 = vunpack.c.h.b16 %v57
  %v238 = vunpack.c.l.b16 %v58
  %v239 = vunpack.c.h.b16 %v58
  %v240 = vunpack.c.l.b16 %v59
  %v241 = vunpack.c.h.b16 %v59
  %v242 = vunpack.c.l.b16 %v60
  %v243 = vunpack.c.h.b16 %v60
  %v244 = vunpack.c.l.b16 %v61
  %v245 = vunpack.c.h.b16 %v61
  %v246 = vunpack.c.l.b16 %v62
  %v247 = vunpack.c.h.b16 %v62
  %v248 = vunpack.c.l.b16 %v63
  %v249 = vunpack.c.h.b16 %v63
  %v250 = vunpack.c.l.b16 %v64
  %v251 = vunpack.c.h.b16 %v64
  %v252 = vunpack.c.l.b16 %v65
  %v253 = vunpack.c.h.b16 %v65
  %v254 = vunpack.c.l.b16 %v66
  %v255 = vunpack.c.h.b16 %v66
  %v256 = vunpack.c.l.b16 %v67
  %v257 = vunpack.c.h.b16 %v67
  %v258 = vunpack.c.l.b16 %v68
  %v259 = vunpack.c.h.b16 %v68
  %v260 = vunpack.c.l.b16 %v69
  %v261 = vunpack.c.h.b16 %v69
  %v262 = vunpack.c.l.b16 %v70
  %v263 = vunpack.c.h.b16 %v70
  %v264 = vunpack.c.l.b16 %v71
  %v265 = vunpack.c.h.b16 %v71
  %v266 = vunpack.c.l.b16 %v72
  %v267 = vunpack.c.h.b16 %v72
  %v268 = vunpack.c.l.b16 %v73
  %v269 = vunpack.c.h.b16 %v73
  %v270 = vunpack.c.l.b16 %v74
  %v271 = vunpack.c.h.b16 %v74
  %v272 = vunpack.c.l.b16 %v75
  %v273 = vunpack.c.h.b16 %v75
  %v274 = vunpack.c.l.b16 %v76
  %v275 = vunpack.c.h.b16 %v76
  %v276 = vunpack.c.l.b16 %v77
  %v277 = vunpack.c.h.b16 %v77
  %v278 = vunpack.c.l.b16 %v78
  %v279 = vunpack.c.h.b16 %v78
  %v280 = vunpack.c.l.b16 %v79
  %v281 = vunpack.c.h.b16 %v79
  %v282 = vpack.c.b16 %v158, %v154
  %v283 = vpack.c.b16 %v159, %v155
  %v284 = vpack.c.b16 %v160, %v156
  %v285 = vpack.c.b16 %v161, %v157
  %v286 = vpack.c.b16 %v166, %v162
  %v287 = vpack.c.b16 %v167, %v163
  %v288 = vpack.c.b16 %v168, %v164
  %v289 = vpack.c.b16 %v169, %v165
  %v290 = vpack.c.b16 %v174, %v170
  %v291 = vpack.c.b16 %v175, %v171
  %v292 = vpack.c.b16 %v176, %v172
  %v293 = vpack.c.b16 %v177, %v173
  %v294 = vpack.c.b16 %v182, %v178
  %v295 = vpack.c.b16 %v183, %v179
  %v296 = vpack.c.b16 %v184, %v180
  %v297 = vpack.c.b16 %v185, %v181
  %v298 = vpack.c.b16 %v190, %v186
  %v299 = vpack.c.b16 %v191, %v187
  %v300 = vpack.c.b16 %v192, %v188
  %v301 = vpack.c.b16 %v193, %v189
  %v302 = vpack.c.b16 %v198, %v194
  %v303 = vpack.c.b16 %v199, %v195
  %v304 = vpack.c.b16 %v200, %v196
  %v305 = vpack.c.b16 %v201, %v197
  %v306 = vpack.c.b16 %v206, %v202
  %v307 = vpack.c.b16 %v207, %v203
  %v308 = vpack.c.b16 %v208, %v204
  %v309 = vpack.c.b16 %v209, %v205
  %v310 = vpack.c.b16 %v214, %v210
  %v311 = vpack.c.b16 %v215, %v211
  %v312 = vpack.c.b16 %v216, %v212
  %v313 = vpack.c.b16 %v217, %v213
  %v314 = vpack.c.b16 %v222, %v218
  %v315 = vpack.c.b16 %v223, %v219
  %v316 = vpack.c.b16 %v224, %v220
  %v317 = vpack.c.b16 %v225, %v221
  %v318 = vpack.c.b16 %v230, %v226
  %v319 = vpack.c.b16 %v231, %v227
  %v320 = vpack.c.b16 %v232, %v228
  %v321 = vpack.c.b16 %v233, %v229
  %v322 = vpack.c.b16 %v238, %v234
  %v323 = vpack.c.b16 %v239, %v235
  %v324 = vpack.c.b16 %v240, %v236
  %v325 = vpack.c.b16 %v241, %v237
  %v326 = vpack.c.b16 %v246, %v242
  %v327 = vpack.c.b16 %v247, %v243
  %v328 = vpack.c.b16 %v248, %v244
  %v329 = vpack.c.b16 %v249, %v245
  %v330 = vpack.c.b16 %v254, %v250
  %v331 = vpack.c.b16 %v255, %v251
  %v332 = vpack.c.b16 %v256, %v252
  %v333 = vpack.c.b16 %v257, %v253
  %v334 = vpack.c.b16 %v262, %v258
  %v335 = vpack.c.b16 %v263, %v259
  %v336 = vpack.c.b16 %v264, %v260
  %v337 = vpack.c.b16 %v265, %v261
  %v338 = vpack.c.b16 %v270, %v266
  %v339 = vpack.c.b16 %v271, %v267
  %v340 = vpack.c.b16 %v272, %v268
  %v341 = vpack.c.b16 %v273, %v269
  %v342 = vpack.c.b16 %v278, %v274
  %v343 = vpack.c.b16 %v279, %v275
  %v344 = vpack.c.b16 %v280, %v276
  %v345 = vpack.c.b16 %v281, %v277
  %410 = vmatprep.subr.bf16.mxu0 %v283
  %411 = vmatpush1.bf16.msra.mxu0 %v282
  %412 = vmatprep.subr.bf16.mxu0 %v287
  %413 = vmatpush1.bf16.msra.mxu0 %v286
  %414 = vmatprep.subr.bf16.mxu0 %v291
  %415 = vmatpush1.bf16.msra.mxu0 %v290
  %416 = vmatprep.subr.bf16.mxu0 %v295
  %417 = vmatpush1.bf16.msra.mxu0 %v294
  %418 = vmatprep.subr.bf16.mxu0 %v299
  %419 = vmatpush1.bf16.msra.mxu0 %v298
  %420 = vmatprep.subr.bf16.mxu0 %v303
  %421 = vmatpush1.bf16.msra.mxu0 %v302
  %422 = vmatprep.subr.bf16.mxu0 %v307
  %423 = vmatpush1.bf16.msra.mxu0 %v306
  %424 = vmatprep.subr.bf16.mxu0 %v311
  %425 = vmatpush1.bf16.msra.mxu0 %v310
  %426 = vmatprep.subr.bf16.mxu0 %v315
  %427 = vmatpush1.bf16.msra.mxu0 %v314
  %428 = vmatprep.subr.bf16.mxu0 %v319
  %429 = vmatpush1.bf16.msra.mxu0 %v318
  %430 = vmatprep.subr.bf16.mxu0 %v323
  %431 = vmatpush1.bf16.msra.mxu0 %v322
  %432 = vmatprep.subr.bf16.mxu0 %v327
  %433 = vmatpush1.bf16.msra.mxu0 %v326
  %434 = vmatprep.subr.bf16.mxu0 %v331
  %435 = vmatpush1.bf16.msra.mxu0 %v330
  %436 = vmatprep.subr.bf16.mxu0 %v335
  %437 = vmatpush1.bf16.msra.mxu0 %v334
  %438 = vmatprep.subr.bf16.mxu0 %v339
  %439 = vmatpush1.bf16.msra.mxu0 %v338
  %440 = vmatprep.subr.bf16.mxu0 %v343
  %441 = vmatpush1.bf16.msra.mxu0 %v342
  %442 = vmatprep.mubr.bf16.mxu0 %v87
  %443 = vmatmul.mubr.bf16.gmra.mrb[0].mxu0 %v86
  %v444 = vpop.f32.mrb[0].mxu0
  %v445 = vadd.f32 0.0, %v444
  %v446 = vpop.f32.mrb[0].mxu0
  %v447 = vadd.f32 0.0, %v446
  %v448 = vpop.f32.mrb[0].mxu0
  %v449 = vadd.f32 0.0, %v448
  %v450 = vpop.f32.mrb[0].mxu0
  %v451 = vadd.f32 0.0, %v450
  %452 = vdwg.mxu0
  %453 = vmatprep.subr.bf16.mxu0 %v285
  %454 = vmatpush1.bf16.msra.mxu0 %v284
  %455 = vmatprep.subr.bf16.mxu0 %v289
  %456 = vmatpush1.bf16.msra.mxu0 %v288
  %457 = vmatprep.subr.bf16.mxu0 %v293
  %458 = vmatpush1.bf16.msra.mxu0 %v292
  %459 = vmatprep.subr.bf16.mxu0 %v297
  %460 = vmatpush1.bf16.msra.mxu0 %v296
  %461 = vmatprep.subr.bf16.mxu0 %v301
  %462 = vmatpush1.bf16.msra.mxu0 %v300
  %463 = vmatprep.subr.bf16.mxu0 %v305
  %464 = vmatpush1.bf16.msra.mxu0 %v304
  %465 = vmatprep.subr.bf16.mxu0 %v309
  %466 = vmatpush1.bf16.msra.mxu0 %v308
  %467 = vmatprep.subr.bf16.mxu0 %v313
  %468 = vmatpush1.bf16.msra.mxu0 %v312
  %469 = vmatprep.subr.bf16.mxu0 %v317
  %470 = vmatpush1.bf16.msra.mxu0 %v316
  %471 = vmatprep.subr.bf16.mxu0 %v321
  %472 = vmatpush1.bf16.msra.mxu0 %v320
  %473 = vmatprep.subr.bf16.mxu0 %v325
  %474 = vmatpush1.bf16.msra.mxu0 %v324
  %475 = vmatprep.subr.bf16.mxu0 %v329
  %476 = vmatpush1.bf16.msra.mxu0 %v328
  %477 = vmatprep.subr.bf16.mxu0 %v333
  %478 = vmatpush1.bf16.msra.mxu0 %v332
  %479 = vmatprep.subr.bf16.mxu0 %v337
  %480 = vmatpush1.bf16.msra.mxu0 %v336
  %481 = vmatprep.subr.bf16.mxu0 %v341
  %482 = vmatpush1.bf16.msra.mxu0 %v340
  %483 = vmatprep.subr.bf16.mxu0 %v345
  %484 = vmatpush1.bf16.msra.mxu0 %v344
  %485 = vmatprep.mubr.bf16.mxu0 %v87
  %486 = vmatmul.mubr.bf16.gmra.mrb[0].mxu0 %v86
  %v487 = vpop.f32.mrb[0].mxu0
  %v488 = vadd.f32 0.0, %v487
  %v489 = vpop.f32.mrb[0].mxu0
  %v490 = vadd.f32 0.0, %v489
  %v491 = vpop.f32.mrb[0].mxu0
  %v492 = vadd.f32 0.0, %v491
  %v493 = vpop.f32.mrb[0].mxu0
  %v494 = vadd.f32 0.0, %v493
  %495 = vdwg.mxu0
  %v496 = vadd.f32 %v445, %v447
  %v497 = vadd.f32 %v496, %v488
  %v498 = vadd.f32 %v497, %v490
  %499 = vadd.xlane.f32.xlu0 %v498
  %v500 = vpop.xlane.xlu0 %499
  %v501 = vadd.f32 %v449, %v451
  %v502 = vadd.f32 %v501, %v492
  %v503 = vadd.f32 %v502, %v494
  %504 = vadd.xlane.f32.xlu0 %v503
  %v505 = vpop.xlane.xlu0 %504
  %v506 = vrcp.pop 512.0
  %v507 = vmul.f32 %v500, %v506
  %v508 = vmul.f32 %v505, %v506
  %v509 = vsub.f32 %v445, %v507
  %v510 = vsub.f32 %v447, %v507
  %v511 = vsub.f32 %v488, %v507
  %v512 = vsub.f32 %v490, %v507
  %v513 = vsub.f32 %v449, %v508
  %v514 = vsub.f32 %v451, %v508
  %v515 = vsub.f32 %v492, %v508
  %v516 = vsub.f32 %v494, %v508
  %v517 = vmul.f32 %v509, %v509
  %v518 = vmul.f32 %v510, %v510
  %v519 = vmul.f32 %v511, %v511
  %v520 = vmul.f32 %v512, %v512
  %v521 = vmul.f32 %v513, %v513
  %v522 = vmul.f32 %v514, %v514
  %v523 = vmul.f32 %v515, %v515
  %v524 = vmul.f32 %v516, %v516
  %v525 = vadd.f32 %v517, %v518
  %v526 = vadd.f32 %v525, %v519
  %v527 = vadd.f32 %v526, %v520
  %528 = vadd.xlane.f32.xlu0 %v527
  %v529 = vpop.xlane.xlu0 %528
  %v530 = vadd.f32 %v521, %v522
  %v531 = vadd.f32 %v530, %v523
  %v532 = vadd.f32 %v531, %v524
  %533 = vadd.xlane.f32.xlu0 %v532
  %v534 = vpop.xlane.xlu0 %533
  %v535 = vmul.f32 %v529, %v506
  %v536 = vmul.f32 %v534, %v506
  %v537 = vld [vmem:[%s2] sm:$0xff]
  %v538 = vld [vmem:[%s2 + $0x8] sm:$0xff]
  %v539 = vadd.f32 %v535, 1e-05
  %v540 = vadd.f32 %v536, 1e-05
  %v541 = vrsqrt.pop %v539
  %v542 = vrsqrt.pop %v540
  %v543 = vmul.f32 %v509, %v541
  %v544 = vmul.f32 %v510, %v541
  %v545 = vmul.f32 %v511, %v541
  %v546 = vmul.f32 %v512, %v541
  %v547 = vmul.f32 %v513, %v542
  %v548 = vmul.f32 %v514, %v542
  %v549 = vmul.f32 %v515, %v542
  %v550 = vmul.f32 %v516, %v542
  %552 = vset.pattern.permute.xlu0 0
  %553 = vperm.xlu0 %552, %v537
  %v554 = vpop.permute.xlu0 %553
  %557 = vset.pattern.permute.xlu0 0
  %558 = vperm.xlu0 %557, %v538
  %v559 = vpop.permute.xlu0 %558
  %v561 = vmul.f32 %v543, %v554
  %v562 = vmul.f32 %v544, %v554
  %v563 = vmul.f32 %v545, %v554
  %v564 = vmul.f32 %v546, %v554
  %v565 = vmul.f32 %v547, %v559
  %v566 = vmul.f32 %v548, %v559
  %v567 = vmul.f32 %v549, %v559
  %v568 = vmul.f32 %v550, %v559
  %569 = vset.pattern.permute.xlu0 1
  %570 = vperm.xlu0 %569, %v537
  %v571 = vpop.permute.xlu0 %570
  %573 = vset.pattern.permute.xlu0 1
  %574 = vperm.xlu0 %573, %v538
  %v575 = vpop.permute.xlu0 %574
  %v577 = vadd.f32 %v561, %v571
  %v578 = vadd.f32 %v562, %v571
  %v579 = vadd.f32 %v563, %v571
  %v580 = vadd.f32 %v564, %v571
  %v581 = vadd.f32 %v565, %v575
  %v582 = vadd.f32 %v566, %v575
  %v583 = vadd.f32 %v567, %v575
  %v584 = vadd.f32 %v568, %v575
  %v585 = vmax.f32 %v577, 0.0
  %v586 = vmax.f32 %v578, 0.0
  %v587 = vmax.f32 %v579, 0.0
  %v588 = vmax.f32 %v580, 0.0
  %v589 = vmax.f32 %v581, 0.0
  %v590 = vmax.f32 %v582, 0.0
  %v591 = vmax.f32 %v583, 0.0
  %v592 = vmax.f32 %v584, 0.0
  %v593 = vpack.c.bf16 %v589, %v585
  %v594 = vpack.c.bf16 %v590, %v586
  %v595 = vpack.c.bf16 %v591, %v587
  %v596 = vpack.c.bf16 %v592, %v588
  %v601 = vunpack.c.l.b16 %v593
  %v602 = vunpack.c.l.b16 %v594
  %v603 = vunpack.c.l.b16 %v595
  %v604 = vunpack.c.l.b16 %v596
  %v605 = vunpack.c.h.b16 %v593
  %v606 = vunpack.c.h.b16 %v594
  %v607 = vunpack.c.h.b16 %v595
  %v608 = vunpack.c.h.b16 %v596
  %v609 = vpack.c.b16 %v602, %v601
  %v610 = vpack.c.b16 %v604, %v603
  %v611 = vpack.c.b16 %v606, %v605
  %v612 = vpack.c.b16 %v608, %v607
  %617 = vst [vmem:[%s3] sm:$0xff] %v609
  %618 = vst [vmem:[%s3 + $0x8] sm:$0xff] %v610
  %619 = vst [vmem:[%s3 + $0x10] sm:$0xff] %v611
  %620 = vst [vmem:[%s3 + $0x18] sm:$0xff] %v612
  // Predicated region
  $region14: #{vq_cvae_forward.14} parent=0 // pred_check
    _
  $region15: #{vq_cvae_forward.14} parent=0 // pred_check_branch
    %622 = sbr.rel (0) target = $region17
  $region16: #{vq_cvae_forward.14} parent=0 // pred_region
    _
  $region17: #{vq_cvae_forward.14} parent=0 // pred_fallthru
    _
  // Predicated region
  $region18: #{vq_cvae_forward.14} parent=0 // pred_check
    _
  $region19: #{vq_cvae_forward.14} parent=0 // pred_check_branch
    %624 = sbr.rel (0) target = $region21
  $region20: #{vq_cvae_forward.14} parent=0 // pred_region
    _
  $region21: #{vq_cvae_forward.14} parent=0 // pred_fallthru
    _

// kernel: squeeze.1
$region0: #{squeeze.1}
  %s0 = inlined_call_operand.vmem [shape: s32[128], index: 0, kind: input, shape index: {}]
  %s1 = inlined_call_operand.hbm [shape: s32[2,8,8], index: 1, kind: output, shape index: {}]
  $region1: #{squeeze.1} parent=0
    #allocation0 [shape = 'u8[8192]{0}', space=vmem, size = 0x2000, scoped, tag = 'operand span for operand 1']
    #allocation1 [shape = 's32[1]{0}', space=sflag, size = 0x4, scoped, tag = 'scoped memory for squeeze.1']
    #allocation2 [shape = 'u8[4096]{0}', space=vmem, size = 0x1000, scoped, tag = 'scoped mem for input reshape']
    %2 = vsyncpa [#allocation1], 0
    %s4 = sshllo.u32 0, 1
    %v5 = vld [vmem:[%s0] sm:%s4]
    %6 = vst [vmem:[#allocation2] sm:%s4] %v5
    %v7 = vld [vmem:[#allocation2] sm:$0x1]
    %vm8 = vcmask 64512
    %9 = vst.msk [vmem:[#allocation0] sm:$0x1] %vm8, %v7
    %v10 = vld [vmem:[#allocation2] sm:$0x1]
    %11 = vrot.lane.b32.xlu0 %v10, 120
    %v12 = vpop.permute.xlu0 %11
    %vm13 = vcmask 64512
    %s14 = scalar_lea.vmem [#allocation0], 1
    %15 = vst.msk [vmem:[%s14] sm:$0x1] %vm13, %v12
    %v16 = vld [vmem:[#allocation2] sm:$0x1]
    %17 = vrot.lane.b32.xlu0 %v16, 112
    %v18 = vpop.permute.xlu0 %17
    %vm19 = vcmask 64512
    %s20 = scalar_lea.vmem [#allocation0], 2
    %21 = vst.msk [vmem:[%s20] sm:$0x1] %vm19, %v18
    %v22 = vld [vmem:[#allocation2] sm:$0x1]
    %23 = vrot.lane.b32.xlu0 %v22, 104
    %v24 = vpop.permute.xlu0 %23
    %vm25 = vcmask 64512
    %s26 = scalar_lea.vmem [#allocation0], 3
    %27 = vst.msk [vmem:[%s26] sm:$0x1] %vm25, %v24
    %v28 = vld [vmem:[#allocation2] sm:$0x1]
    %29 = vrot.lane.b32.xlu0 %v28, 96
    %v30 = vpop.permute.xlu0 %29
    %vm31 = vcmask 64512
    %s32 = scalar_lea.vmem [#allocation0], 4
    %33 = vst.msk [vmem:[%s32] sm:$0x1] %vm31, %v30
    %v34 = vld [vmem:[#allocation2] sm:$0x1]
    %35 = vrot.lane.b32.xlu0 %v34, 88
    %v36 = vpop.permute.xlu0 %35
    %vm37 = vcmask 64512
    %s38 = scalar_lea.vmem [#allocation0], 5
    %39 = vst.msk [vmem:[%s38] sm:$0x1] %vm37, %v36
    %v40 = vld [vmem:[#allocation2] sm:$0x1]
    %41 = vrot.lane.b32.xlu0 %v40, 80
    %v42 = vpop.permute.xlu0 %41
    %vm43 = vcmask 64512
    %s44 = scalar_lea.vmem [#allocation0], 6
    %45 = vst.msk [vmem:[%s44] sm:$0x1] %vm43, %v42
    %v46 = vld [vmem:[#allocation2] sm:$0x1]
    %47 = vrot.lane.b32.xlu0 %v46, 72
    %v48 = vpop.permute.xlu0 %47
    %vm49 = vcmask 64512
    %s50 = scalar_lea.vmem [#allocation0], 7
    %51 = vst.msk [vmem:[%s50] sm:$0x1] %vm49, %v48
    %v52 = vld [vmem:[#allocation2] sm:$0x1]
    %53 = vrot.lane.b32.xlu0 %v52, 64
    %v54 = vpop.permute.xlu0 %53
    %vm55 = vcmask 64512
    %s56 = scalar_lea.vmem [#allocation0], 8
    %57 = vst.msk [vmem:[%s56] sm:$0x1] %vm55, %v54
    %v58 = vld [vmem:[#allocation2] sm:$0x1]
    %59 = vrot.lane.b32.xlu0 %v58, 56
    %v60 = vpop.permute.xlu0 %59
    %vm61 = vcmask 64512
    %s62 = scalar_lea.vmem [#allocation0], 9
    %63 = vst.msk [vmem:[%s62] sm:$0x1] %vm61, %v60
    %v64 = vld [vmem:[#allocation2] sm:$0x1]
    %65 = vrot.lane.b32.xlu0 %v64, 48
    %v66 = vpop.permute.xlu0 %65
    %vm67 = vcmask 64512
    %s68 = scalar_lea.vmem [#allocation0], 10
    %69 = vst.msk [vmem:[%s68] sm:$0x1] %vm67, %v66
    %v70 = vld [vmem:[#allocation2] sm:$0x1]
    %71 = vrot.lane.b32.xlu0 %v70, 40
    %v72 = vpop.permute.xlu0 %71
    %vm73 = vcmask 64512
    %s74 = scalar_lea.vmem [#allocation0], 11
    %75 = vst.msk [vmem:[%s74] sm:$0x1] %vm73, %v72
    %v76 = vld [vmem:[#allocation2] sm:$0x1]
    %77 = vrot.lane.b32.xlu0 %v76, 32
    %v78 = vpop.permute.xlu0 %77
    %vm79 = vcmask 64512
    %s80 = scalar_lea.vmem [#allocation0], 12
    %81 = vst.msk [vmem:[%s80] sm:$0x1] %vm79, %v78
    %v82 = vld [vmem:[#allocation2] sm:$0x1]
    %83 = vrot.lane.b32.xlu0 %v82, 24
    %v84 = vpop.permute.xlu0 %83
    %vm85 = vcmask 64512
    %s86 = scalar_lea.vmem [#allocation0], 13
    %87 = vst.msk [vmem:[%s86] sm:$0x1] %vm85, %v84
    %v88 = vld [vmem:[#allocation2] sm:$0x1]
    %89 = vrot.lane.b32.xlu0 %v88, 16
    %v90 = vpop.permute.xlu0 %89
    %vm91 = vcmask 64512
    %s92 = scalar_lea.vmem [#allocation0], 14
    %93 = vst.msk [vmem:[%s92] sm:$0x1] %vm91, %v90
    %v94 = vld [vmem:[#allocation2] sm:$0x1]
    %95 = vrot.lane.b32.xlu0 %v94, 8
    %v96 = vpop.permute.xlu0 %95
    %vm97 = vcmask 64512
    %s98 = scalar_lea.vmem [#allocation0], 15
    %99 = vst.msk [vmem:[%s98] sm:$0x1] %vm97, %v96
    %s101 = ssub.s32 256, 256
    %102 = vsyncadd [#allocation1], %s101
    %s104 = sshll.u32 [#allocation0], 4
    %s105 = int_to_ptr.vmem [resolvable:$true] %s104
    %107 = dma.vmem_to_hbm [thread:$0]  %s105, 256, %s1, [#allocation1]
    %108 = dma.done [#allocation1], 256
    %109 = vsyncpa [#allocation1], 1

// kernel: vq_cvae_forward.15
$region0: #{vq_cvae_forward.15}
  #allocation0 [shape = 'u32[]', space=smem, size = 0x4, offset = 0x4, fixed_abs, tag = 'smem constant byte address 0x4 - core index']
  #allocation1 [shape = 'u32[144,128]{1,0:T(1,128)}', space=vmem, size = 0x12000, scoped, tag = 'internal scratch']
  %s0 = inlined_call_operand.vmem [shape: bf16[3,256], index: 0, kind: input, shape index: {}]
  %s1 = inlined_call_operand.vmem [shape: bf16[256,2048], index: 1, kind: input, shape index: {}]
  %s2 = inlined_call_operand.vmem [shape: f32[3,1], index: 2, kind: input, shape index: {}]
  %s3 = inlined_call_operand.vmem [shape: f32[3,2048], index: 3, kind: output, shape index: {}]
  %s4 = sld [smem:[#allocation0]]
  $region22: #{vq_cvae_forward.15} parent=0
    _
  %s6 = ssub.s32 1, %s4
  %s7 = scalar_select 0, %s6, %s4
  // Predicated region
  $region2: #{vq_cvae_forward.15} parent=0 // pred_check
    _
  $region3: #{vq_cvae_forward.15} parent=0 // pred_check_branch
    %9 = sbr.rel (0) target = $region5
  $region4: #{vq_cvae_forward.15} parent=0 // pred_region
    _
  $region5: #{vq_cvae_forward.15} parent=0 // pred_fallthru
    _
  // Predicated region
  $region6: #{vq_cvae_forward.15} parent=0 // pred_check
    _
  $region7: #{vq_cvae_forward.15} parent=0 // pred_check_branch
    %11 = sbr.rel (0) target = $region9
  $region8: #{vq_cvae_forward.15} parent=0 // pred_region
    _
  $region9: #{vq_cvae_forward.15} parent=0 // pred_fallthru
    _
  // Predicated region
  $region10: #{vq_cvae_forward.15} parent=0 // pred_check
    _
  $region11: #{vq_cvae_forward.15} parent=0 // pred_check_branch
    %13 = sbr.rel (0) target = $region13
  $region12: #{vq_cvae_forward.15} parent=0 // pred_region
    _
  $region13: #{vq_cvae_forward.15} parent=0 // pred_fallthru
    _
  %v14 = vld [vmem:[%s0] sm:$0xf]
  %v15 = vld [vmem:[%s1] sm:$0xff]
  %v16 = vld [vmem:[%s1 + $0x8] sm:$0xff]
  %v17 = vld [vmem:[%s1 + $0x10] sm:$0xff]
  %v18 = vld [vmem:[%s1 + $0x18] sm:$0xff]
  %v19 = vld [vmem:[%s1 + $0x20] sm:$0xff]
  %v20 = vld [vmem:[%s1 + $0x28] sm:$0xff]
  %v21 = vld [vmem:[%s1 + $0x30] sm:$0xff]
  %v22 = vld [vmem:[%s1 + $0x38] sm:$0xff]
  %v23 = vld [vmem:[%s1 + $0x40] sm:$0xff]
  %v24 = vld [vmem:[%s1 + $0x48] sm:$0xff]
  %v25 = vld [vmem:[%s1 + $0x50] sm:$0xff]
  %v26 = vld [vmem:[%s1 + $0x58] sm:$0xff]
  %v27 = vld [vmem:[%s1 + $0x60] sm:$0xff]
  %v28 = vld [vmem:[%s1 + $0x68] sm:$0xff]
  %v29 = vld [vmem:[%s1 + $0x70] sm:$0xff]
  %v30 = vld [vmem:[%s1 + $0x78] sm:$0xff]
  %v31 = vld [vmem:[%s1 + $0x80] sm:$0xff]
  %v32 = vld [vmem:[%s1 + $0x88] sm:$0xff]
  %v33 = vld [vmem:[%s1 + $0x90] sm:$0xff]
  %v34 = vld [vmem:[%s1 + $0x98] sm:$0xff]
  %v35 = vld [vmem:[%s1 + $0xa0] sm:$0xff]
  %v36 = vld [vmem:[%s1 + $0xa8] sm:$0xff]
  %v37 = vld [vmem:[%s1 + $0xb0] sm:$0xff]
  %v38 = vld [vmem:[%s1 + $0xb8] sm:$0xff]
  %v39 = vld [vmem:[%s1 + $0xc0] sm:$0xff]
  %v40 = vld [vmem:[%s1 + $0xc8] sm:$0xff]
  %v41 = vld [vmem:[%s1 + $0xd0] sm:$0xff]
  %v42 = vld [vmem:[%s1 + $0xd8] sm:$0xff]
  %v43 = vld [vmem:[%s1 + $0xe0] sm:$0xff]
  %v44 = vld [vmem:[%s1 + $0xe8] sm:$0xff]
  %v45 = vld [vmem:[%s1 + $0xf0] sm:$0xff]
  %v46 = vld [vmem:[%s1 + $0xf8] sm:$0xff]
  %v47 = vld [vmem:[%s1 + $0x100] sm:$0xff]
  %v48 = vld [vmem:[%s1 + $0x108] sm:$0xff]
  %v49 = vld [vmem:[%s1 + $0x110] sm:$0xff]
  %v50 = vld [vmem:[%s1 + $0x118] sm:$0xff]
  %v51 = vld [vmem:[%s1 + $0x120] sm:$0xff]
  %v52 = vld [vmem:[%s1 + $0x128] sm:$0xff]
  %v53 = vld [vmem:[%s1 + $0x130] sm:$0xff]
  %v54 = vld [vmem:[%s1 + $0x138] sm:$0xff]
  %v55 = vld [vmem:[%s1 + $0x140] sm:$0xff]
  %v56 = vld [vmem:[%s1 + $0x148] sm:$0xff]
  %v57 = vld [vmem:[%s1 + $0x150] sm:$0xff]
  %v58 = vld [vmem:[%s1 + $0x158] sm:$0xff]
  %v59 = vld [vmem:[%s1 + $0x160] sm:$0xff]
  %v60 = vld [vmem:[%s1 + $0x168] sm:$0xff]
  %v61 = vld [vmem:[%s1 + $0x170] sm:$0xff]
  %v62 = vld [vmem:[%s1 + $0x178] sm:$0xff]
  %v63 = vld [vmem:[%s1 + $0x180] sm:$0xff]
  %v64 = vld [vmem:[%s1 + $0x188] sm:$0xff]
  %v65 = vld [vmem:[%s1 + $0x190] sm:$0xff]
  %v66 = vld [vmem:[%s1 + $0x198] sm:$0xff]
  %v67 = vld [vmem:[%s1 + $0x1a0] sm:$0xff]
  %v68 = vld [vmem:[%s1 + $0x1a8] sm:$0xff]
  %v69 = vld [vmem:[%s1 + $0x1b0] sm:$0xff]
  %v70 = vld [vmem:[%s1 + $0x1b8] sm:$0xff]
  %v71 = vld [vmem:[%s1 + $0x1c0] sm:$0xff]
  %v72 = vld [vmem:[%s1 + $0x1c8] sm:$0xff]
  %v73 = vld [vmem:[%s1 + $0x1d0] sm:$0xff]
  %v74 = vld [vmem:[%s1 + $0x1d8] sm:$0xff]
  %v75 = vld [vmem:[%s1 + $0x1e0] sm:$0xff]
  %v76 = vld [vmem:[%s1 + $0x1e8] sm:$0xff]
  %v77 = vld [vmem:[%s1 + $0x1f0] sm:$0xff]
  %v78 = vld [vmem:[%s1 + $0x1f8] sm:$0xff]
  %v79 = vld [vmem:[%s1 + $0x200] sm:$0xff]
  %v80 = vld [vmem:[%s1 + $0x208] sm:$0xff]
  %v81 = vld [vmem:[%s1 + $0x210] sm:$0xff]
  %v82 = vld [vmem:[%s1 + $0x218] sm:$0xff]
  %v83 = vld [vmem:[%s1 + $0x220] sm:$0xff]
  %v84 = vld [vmem:[%s1 + $0x228] sm:$0xff]
  %v85 = vld [vmem:[%s1 + $0x230] sm:$0xff]
  %v86 = vld [vmem:[%s1 + $0x238] sm:$0xff]
  %v87 = vld [vmem:[%s1 + $0x240] sm:$0xff]
  %v88 = vld [vmem:[%s1 + $0x248] sm:$0xff]
  %v89 = vld [vmem:[%s1 + $0x250] sm:$0xff]
  %v90 = vld [vmem:[%s1 + $0x258] sm:$0xff]
  %v91 = vld [vmem:[%s1 + $0x260] sm:$0xff]
  %v92 = vld [vmem:[%s1 + $0x268] sm:$0xff]
  %v93 = vld [vmem:[%s1 + $0x270] sm:$0xff]
  %v94 = vld [vmem:[%s1 + $0x278] sm:$0xff]
  %v95 = vld [vmem:[%s1 + $0x280] sm:$0xff]
  %v96 = vld [vmem:[%s1 + $0x288] sm:$0xff]
  %v97 = vld [vmem:[%s1 + $0x290] sm:$0xff]
  %v98 = vld [vmem:[%s1 + $0x298] sm:$0xff]
  %v99 = vld [vmem:[%s1 + $0x2a0] sm:$0xff]
  %v100 = vld [vmem:[%s1 + $0x2a8] sm:$0xff]
  %v101 = vld [vmem:[%s1 + $0x2b0] sm:$0xff]
  %v102 = vld [vmem:[%s1 + $0x2b8] sm:$0xff]
  %v103 = vld [vmem:[%s1 + $0x2c0] sm:$0xff]
  %v104 = vld [vmem:[%s1 + $0x2c8] sm:$0xff]
  %v105 = vld [vmem:[%s1 + $0x2d0] sm:$0xff]
  %v106 = vld [vmem:[%s1 + $0x2d8] sm:$0xff]
  %v107 = vld [vmem:[%s1 + $0x2e0] sm:$0xff]
  %v108 = vld [vmem:[%s1 + $0x2e8] sm:$0xff]
  %v109 = vld [vmem:[%s1 + $0x2f0] sm:$0xff]
  %v110 = vld [vmem:[%s1 + $0x2f8] sm:$0xff]
  %v111 = vld [vmem:[%s1 + $0x300] sm:$0xff]
  %v112 = vld [vmem:[%s1 + $0x308] sm:$0xff]
  %v113 = vld [vmem:[%s1 + $0x310] sm:$0xff]
  %v114 = vld [vmem:[%s1 + $0x318] sm:$0xff]
  %v115 = vld [vmem:[%s1 + $0x320] sm:$0xff]
  %v116 = vld [vmem:[%s1 + $0x328] sm:$0xff]
  %v117 = vld [vmem:[%s1 + $0x330] sm:$0xff]
  %v118 = vld [vmem:[%s1 + $0x338] sm:$0xff]
  %v119 = vld [vmem:[%s1 + $0x340] sm:$0xff]
  %v120 = vld [vmem:[%s1 + $0x348] sm:$0xff]
  %v121 = vld [vmem:[%s1 + $0x350] sm:$0xff]
  %v122 = vld [vmem:[%s1 + $0x358] sm:$0xff]
  %v123 = vld [vmem:[%s1 + $0x360] sm:$0xff]
  %v124 = vld [vmem:[%s1 + $0x368] sm:$0xff]
  %v125 = vld [vmem:[%s1 + $0x370] sm:$0xff]
  %v126 = vld [vmem:[%s1 + $0x378] sm:$0xff]
  %v127 = vld [vmem:[%s1 + $0x380] sm:$0xff]
  %v128 = vld [vmem:[%s1 + $0x388] sm:$0xff]
  %v129 = vld [vmem:[%s1 + $0x390] sm:$0xff]
  %v130 = vld [vmem:[%s1 + $0x398] sm:$0xff]
  %v131 = vld [vmem:[%s1 + $0x3a0] sm:$0xff]
  %v132 = vld [vmem:[%s1 + $0x3a8] sm:$0xff]
  %v133 = vld [vmem:[%s1 + $0x3b0] sm:$0xff]
  %v134 = vld [vmem:[%s1 + $0x3b8] sm:$0xff]
  %v135 = vld [vmem:[%s1 + $0x3c0] sm:$0xff]
  %v136 = vld [vmem:[%s1 + $0x3c8] sm:$0xff]
  %v137 = vld [vmem:[%s1 + $0x3d0] sm:$0xff]
  %v138 = vld [vmem:[%s1 + $0x3d8] sm:$0xff]
  %v139 = vld [vmem:[%s1 + $0x3e0] sm:$0xff]
  %v140 = vld [vmem:[%s1 + $0x3e8] sm:$0xff]
  %v141 = vld [vmem:[%s1 + $0x3f0] sm:$0xff]
  %v142 = vld [vmem:[%s1 + $0x3f8] sm:$0xff]
  %v143 = vld [vmem:[%s1 + $0x400] sm:$0xff]
  %v144 = vld [vmem:[%s1 + $0x408] sm:$0xff]
  %v145 = vld [vmem:[%s1 + $0x410] sm:$0xff]
  %v146 = vld [vmem:[%s1 + $0x418] sm:$0xff]
  %v147 = vld [vmem:[%s1 + $0x420] sm:$0xff]
  %v148 = vld [vmem:[%s1 + $0x428] sm:$0xff]
  %v149 = vld [vmem:[%s1 + $0x430] sm:$0xff]
  %v150 = vld [vmem:[%s1 + $0x438] sm:$0xff]
  %v151 = vld [vmem:[%s1 + $0x440] sm:$0xff]
  %v152 = vld [vmem:[%s1 + $0x448] sm:$0xff]
  %v153 = vld [vmem:[%s1 + $0x450] sm:$0xff]
  %v154 = vld [vmem:[%s1 + $0x458] sm:$0xff]
  %v155 = vld [vmem:[%s1 + $0x460] sm:$0xff]
  %v156 = vld [vmem:[%s1 + $0x468] sm:$0xff]
  %v157 = vld [vmem:[%s1 + $0x470] sm:$0xff]
  %v158 = vld [vmem:[%s1 + $0x478] sm:$0xff]
  %v159 = vld [vmem:[%s1 + $0x480] sm:$0xff]
  %v160 = vld [vmem:[%s1 + $0x488] sm:$0xff]
  %v161 = vld [vmem:[%s1 + $0x490] sm:$0xff]
  %v162 = vld [vmem:[%s1 + $0x498] sm:$0xff]
  %v163 = vld [vmem:[%s1 + $0x4a0] sm:$0xff]
  %v164 = vld [vmem:[%s1 + $0x4a8] sm:$0xff]
  %v165 = vld [vmem:[%s1 + $0x4b0] sm:$0xff]
  %v166 = vld [vmem:[%s1 + $0x4b8] sm:$0xff]
  %v167 = vld [vmem:[%s1 + $0x4c0] sm:$0xff]
  %v168 = vld [vmem:[%s1 + $0x4c8] sm:$0xff]
  %v169 = vld [vmem:[%s1 + $0x4d0] sm:$0xff]
  %v170 = vld [vmem:[%s1 + $0x4d8] sm:$0xff]
  %v171 = vld [vmem:[%s1 + $0x4e0] sm:$0xff]
  %v172 = vld [vmem:[%s1 + $0x4e8] sm:$0xff]
  %v173 = vld [vmem:[%s1 + $0x4f0] sm:$0xff]
  %v174 = vld [vmem:[%s1 + $0x4f8] sm:$0xff]
  %v175 = vld [vmem:[%s1 + $0x500] sm:$0xff]
  %v176 = vld [vmem:[%s1 + $0x508] sm:$0xff]
  %v177 = vld [vmem:[%s1 + $0x510] sm:$0xff]
  %v178 = vld [vmem:[%s1 + $0x518] sm:$0xff]
  %v179 = vld [vmem:[%s1 + $0x520] sm:$0xff]
  %v180 = vld [vmem:[%s1 + $0x528] sm:$0xff]
  %v181 = vld [vmem:[%s1 + $0x530] sm:$0xff]
  %v182 = vld [vmem:[%s1 + $0x538] sm:$0xff]
  %v183 = vld [vmem:[%s1 + $0x540] sm:$0xff]
  %v184 = vld [vmem:[%s1 + $0x548] sm:$0xff]
  %v185 = vld [vmem:[%s1 + $0x550] sm:$0xff]
  %v186 = vld [vmem:[%s1 + $0x558] sm:$0xff]
  %v187 = vld [vmem:[%s1 + $0x560] sm:$0xff]
  %v188 = vld [vmem:[%s1 + $0x568] sm:$0xff]
  %v189 = vld [vmem:[%s1 + $0x570] sm:$0xff]
  %v190 = vld [vmem:[%s1 + $0x578] sm:$0xff]
  %v191 = vld [vmem:[%s1 + $0x580] sm:$0xff]
  %v192 = vld [vmem:[%s1 + $0x588] sm:$0xff]
  %v193 = vld [vmem:[%s1 + $0x590] sm:$0xff]
  %v194 = vld [vmem:[%s1 + $0x598] sm:$0xff]
  %v195 = vld [vmem:[%s1 + $0x5a0] sm:$0xff]
  %v196 = vld [vmem:[%s1 + $0x5a8] sm:$0xff]
  %v197 = vld [vmem:[%s1 + $0x5b0] sm:$0xff]
  %v198 = vld [vmem:[%s1 + $0x5b8] sm:$0xff]
  %v199 = vld [vmem:[%s1 + $0x5c0] sm:$0xff]
  %v200 = vld [vmem:[%s1 + $0x5c8] sm:$0xff]
  %v201 = vld [vmem:[%s1 + $0x5d0] sm:$0xff]
  %v202 = vld [vmem:[%s1 + $0x5d8] sm:$0xff]
  %v203 = vld [vmem:[%s1 + $0x5e0] sm:$0xff]
  %v204 = vld [vmem:[%s1 + $0x5e8] sm:$0xff]
  %v205 = vld [vmem:[%s1 + $0x5f0] sm:$0xff]
  %v206 = vld [vmem:[%s1 + $0x5f8] sm:$0xff]
  %v207 = vld [vmem:[%s1 + $0x600] sm:$0xff]
  %v208 = vld [vmem:[%s1 + $0x608] sm:$0xff]
  %v209 = vld [vmem:[%s1 + $0x610] sm:$0xff]
  %v210 = vld [vmem:[%s1 + $0x618] sm:$0xff]
  %v211 = vld [vmem:[%s1 + $0x620] sm:$0xff]
  %v212 = vld [vmem:[%s1 + $0x628] sm:$0xff]
  %v213 = vld [vmem:[%s1 + $0x630] sm:$0xff]
  %v214 = vld [vmem:[%s1 + $0x638] sm:$0xff]
  %v215 = vld [vmem:[%s1 + $0x640] sm:$0xff]
  %v216 = vld [vmem:[%s1 + $0x648] sm:$0xff]
  %v217 = vld [vmem:[%s1 + $0x650] sm:$0xff]
  %v218 = vld [vmem:[%s1 + $0x658] sm:$0xff]
  %v219 = vld [vmem:[%s1 + $0x660] sm:$0xff]
  %v220 = vld [vmem:[%s1 + $0x668] sm:$0xff]
  %v221 = vld [vmem:[%s1 + $0x670] sm:$0xff]
  %v222 = vld [vmem:[%s1 + $0x678] sm:$0xff]
  %v223 = vld [vmem:[%s1 + $0x680] sm:$0xff]
  %v224 = vld [vmem:[%s1 + $0x688] sm:$0xff]
  %v225 = vld [vmem:[%s1 + $0x690] sm:$0xff]
  %v226 = vld [vmem:[%s1 + $0x698] sm:$0xff]
  %v227 = vld [vmem:[%s1 + $0x6a0] sm:$0xff]
  %v228 = vld [vmem:[%s1 + $0x6a8] sm:$0xff]
  %v229 = vld [vmem:[%s1 + $0x6b0] sm:$0xff]
  %v230 = vld [vmem:[%s1 + $0x6b8] sm:$0xff]
  %v231 = vld [vmem:[%s1 + $0x6c0] sm:$0xff]
  %v232 = vld [vmem:[%s1 + $0x6c8] sm:$0xff]
  %v233 = vld [vmem:[%s1 + $0x6d0] sm:$0xff]
  %v234 = vld [vmem:[%s1 + $0x6d8] sm:$0xff]
  %v235 = vld [vmem:[%s1 + $0x6e0] sm:$0xff]
  %v236 = vld [vmem:[%s1 + $0x6e8] sm:$0xff]
  %v237 = vld [vmem:[%s1 + $0x6f0] sm:$0xff]
  %v238 = vld [vmem:[%s1 + $0x6f8] sm:$0xff]
  %v239 = vld [vmem:[%s1 + $0x700] sm:$0xff]
  %v240 = vld [vmem:[%s1 + $0x708] sm:$0xff]
  %v241 = vld [vmem:[%s1 + $0x710] sm:$0xff]
  %v242 = vld [vmem:[%s1 + $0x718] sm:$0xff]
  %v243 = vld [vmem:[%s1 + $0x720] sm:$0xff]
  %v244 = vld [vmem:[%s1 + $0x728] sm:$0xff]
  %v245 = vld [vmem:[%s1 + $0x730] sm:$0xff]
  %v246 = vld [vmem:[%s1 + $0x738] sm:$0xff]
  %v247 = vld [vmem:[%s1 + $0x740] sm:$0xff]
  %v248 = vld [vmem:[%s1 + $0x748] sm:$0xff]
  %v249 = vld [vmem:[%s1 + $0x750] sm:$0xff]
  %v250 = vld [vmem:[%s1 + $0x758] sm:$0xff]
  %v251 = vld [vmem:[%s1 + $0x760] sm:$0xff]
  %v252 = vld [vmem:[%s1 + $0x768] sm:$0xff]
  %v253 = vld [vmem:[%s1 + $0x770] sm:$0xff]
  %v254 = vld [vmem:[%s1 + $0x778] sm:$0xff]
  %v255 = vld [vmem:[%s1 + $0x780] sm:$0xff]
  %v256 = vld [vmem:[%s1 + $0x788] sm:$0xff]
  %v257 = vld [vmem:[%s1 + $0x790] sm:$0xff]
  %v258 = vld [vmem:[%s1 + $0x798] sm:$0xff]
  %v259 = vld [vmem:[%s1 + $0x7a0] sm:$0xff]
  %v260 = vld [vmem:[%s1 + $0x7a8] sm:$0xff]
  %v261 = vld [vmem:[%s1 + $0x7b0] sm:$0xff]
  %v262 = vld [vmem:[%s1 + $0x7b8] sm:$0xff]
  %v263 = vld [vmem:[%s1 + $0x7c0] sm:$0xff]
  %v264 = vld [vmem:[%s1 + $0x7c8] sm:$0xff]
  %v265 = vld [vmem:[%s1 + $0x7d0] sm:$0xff]
  %v266 = vld [vmem:[%s1 + $0x7d8] sm:$0xff]
  %v267 = vld [vmem:[%s1 + $0x7e0] sm:$0xff]
  %v268 = vld [vmem:[%s1 + $0x7e8] sm:$0xff]
  %v269 = vld [vmem:[%s1 + $0x7f0] sm:$0xff]
  %v270 = vld [vmem:[%s1 + $0x7f8] sm:$0xff]
  %v271 = vld [vmem:[%s2] sm:$0x7]
  %273 = vset.pattern.permute.xlu0 0
  %274 = vperm.xlu0 %273, %v271
  %v275 = vpop.permute.xlu0 %274
  %v279 = vunpack.c.l.s4 1983009808
  %v280 = vunpack.c.0.s8 %v279
  %v281 = vlaneseq
  %v282 = vshrl.u32 %v281, 7
  %v283 = vsub.s32 %v280, %v282
  %v284 = vrot.slane %v14, %v283
  %v285 = vcombine.high %v284, %v284
  %v544 = vunpack.c.l.b16 %v15
  %v545 = vunpack.c.h.b16 %v15
  %v546 = vunpack.c.l.b16 %v16
  %v547 = vunpack.c.h.b16 %v16
  %v548 = vunpack.c.l.b16 %v17
  %v549 = vunpack.c.h.b16 %v17
  %v550 = vunpack.c.l.b16 %v18
  %v551 = vunpack.c.h.b16 %v18
  %v552 = vunpack.c.l.b16 %v19
  %v553 = vunpack.c.h.b16 %v19
  %v554 = vunpack.c.l.b16 %v20
  %v555 = vunpack.c.h.b16 %v20
  %v556 = vunpack.c.l.b16 %v21
  %v557 = vunpack.c.h.b16 %v21
  %v558 = vunpack.c.l.b16 %v22
  %v559 = vunpack.c.h.b16 %v22
  %v560 = vunpack.c.l.b16 %v23
  %v561 = vunpack.c.h.b16 %v23
  %v562 = vunpack.c.l.b16 %v24
  %v563 = vunpack.c.h.b16 %v24
  %v564 = vunpack.c.l.b16 %v25
  %v565 = vunpack.c.h.b16 %v25
  %v566 = vunpack.c.l.b16 %v26
  %v567 = vunpack.c.h.b16 %v26
  %v568 = vunpack.c.l.b16 %v27
  %v569 = vunpack.c.h.b16 %v27
  %v570 = vunpack.c.l.b16 %v28
  %v571 = vunpack.c.h.b16 %v28
  %v572 = vunpack.c.l.b16 %v29
  %v573 = vunpack.c.h.b16 %v29
  %v574 = vunpack.c.l.b16 %v30
  %v575 = vunpack.c.h.b16 %v30
  %v576 = vunpack.c.l.b16 %v31
  %v577 = vunpack.c.h.b16 %v31
  %v578 = vunpack.c.l.b16 %v32
  %v579 = vunpack.c.h.b16 %v32
  %v580 = vunpack.c.l.b16 %v33
  %v581 = vunpack.c.h.b16 %v33
  %v582 = vunpack.c.l.b16 %v34
  %v583 = vunpack.c.h.b16 %v34
  %v584 = vunpack.c.l.b16 %v35
  %v585 = vunpack.c.h.b16 %v35
  %v586 = vunpack.c.l.b16 %v36
  %v587 = vunpack.c.h.b16 %v36
  %v588 = vunpack.c.l.b16 %v37
  %v589 = vunpack.c.h.b16 %v37
  %v590 = vunpack.c.l.b16 %v38
  %v591 = vunpack.c.h.b16 %v38
  %v592 = vunpack.c.l.b16 %v39
  %v593 = vunpack.c.h.b16 %v39
  %v594 = vunpack.c.l.b16 %v40
  %v595 = vunpack.c.h.b16 %v40
  %v596 = vunpack.c.l.b16 %v41
  %v597 = vunpack.c.h.b16 %v41
  %v598 = vunpack.c.l.b16 %v42
  %v599 = vunpack.c.h.b16 %v42
  %v600 = vunpack.c.l.b16 %v43
  %v601 = vunpack.c.h.b16 %v43
  %v602 = vunpack.c.l.b16 %v44
  %v603 = vunpack.c.h.b16 %v44
  %v604 = vunpack.c.l.b16 %v45
  %v605 = vunpack.c.h.b16 %v45
  %v606 = vunpack.c.l.b16 %v46
  %v607 = vunpack.c.h.b16 %v46
  %v608 = vunpack.c.l.b16 %v47
  %v609 = vunpack.c.h.b16 %v47
  %v610 = vunpack.c.l.b16 %v48
  %v611 = vunpack.c.h.b16 %v48
  %v612 = vunpack.c.l.b16 %v49
  %v613 = vunpack.c.h.b16 %v49
  %v614 = vunpack.c.l.b16 %v50
  %v615 = vunpack.c.h.b16 %v50
  %v616 = vunpack.c.l.b16 %v51
  %v617 = vunpack.c.h.b16 %v51
  %v618 = vunpack.c.l.b16 %v52
  %v619 = vunpack.c.h.b16 %v52
  %v620 = vunpack.c.l.b16 %v53
  %v621 = vunpack.c.h.b16 %v53
  %v622 = vunpack.c.l.b16 %v54
  %v623 = vunpack.c.h.b16 %v54
  %v624 = vunpack.c.l.b16 %v55
  %v625 = vunpack.c.h.b16 %v55
  %v626 = vunpack.c.l.b16 %v56
  %v627 = vunpack.c.h.b16 %v56
  %v628 = vunpack.c.l.b16 %v57
  %v629 = vunpack.c.h.b16 %v57
  %v630 = vunpack.c.l.b16 %v58
  %v631 = vunpack.c.h.b16 %v58
  %v632 = vunpack.c.l.b16 %v59
  %v633 = vunpack.c.h.b16 %v59
  %v634 = vunpack.c.l.b16 %v60
  %v635 = vunpack.c.h.b16 %v60
  %v636 = vunpack.c.l.b16 %v61
  %v637 = vunpack.c.h.b16 %v61
  %v638 = vunpack.c.l.b16 %v62
  %v639 = vunpack.c.h.b16 %v62
  %v640 = vunpack.c.l.b16 %v63
  %v641 = vunpack.c.h.b16 %v63
  %v642 = vunpack.c.l.b16 %v64
  %v643 = vunpack.c.h.b16 %v64
  %v644 = vunpack.c.l.b16 %v65
  %v645 = vunpack.c.h.b16 %v65
  %v646 = vunpack.c.l.b16 %v66
  %v647 = vunpack.c.h.b16 %v66
  %v648 = vunpack.c.l.b16 %v67
  %v649 = vunpack.c.h.b16 %v67
  %v650 = vunpack.c.l.b16 %v68
  %v651 = vunpack.c.h.b16 %v68
  %v652 = vunpack.c.l.b16 %v69
  %v653 = vunpack.c.h.b16 %v69
  %v654 = vunpack.c.l.b16 %v70
  %v655 = vunpack.c.h.b16 %v70
  %v656 = vunpack.c.l.b16 %v71
  %v657 = vunpack.c.h.b16 %v71
  %v658 = vunpack.c.l.b16 %v72
  %v659 = vunpack.c.h.b16 %v72
  %v660 = vunpack.c.l.b16 %v73
  %v661 = vunpack.c.h.b16 %v73
  %v662 = vunpack.c.l.b16 %v74
  %v663 = vunpack.c.h.b16 %v74
  %v664 = vunpack.c.l.b16 %v75
  %v665 = vunpack.c.h.b16 %v75
  %v666 = vunpack.c.l.b16 %v76
  %v667 = vunpack.c.h.b16 %v76
  %v668 = vunpack.c.l.b16 %v77
  %v669 = vunpack.c.h.b16 %v77
  %v670 = vunpack.c.l.b16 %v78
  %v671 = vunpack.c.h.b16 %v78
  %v672 = vunpack.c.l.b16 %v79
  %v673 = vunpack.c.h.b16 %v79
  %v674 = vunpack.c.l.b16 %v80
  %v675 = vunpack.c.h.b16 %v80
  %v676 = vunpack.c.l.b16 %v81
  %v677 = vunpack.c.h.b16 %v81
  %v678 = vunpack.c.l.b16 %v82
  %v679 = vunpack.c.h.b16 %v82
  %v680 = vunpack.c.l.b16 %v83
  %v681 = vunpack.c.h.b16 %v83
  %v682 = vunpack.c.l.b16 %v84
  %v683 = vunpack.c.h.b16 %v84
  %v684 = vunpack.c.l.b16 %v85
  %v685 = vunpack.c.h.b16 %v85
  %v686 = vunpack.c.l.b16 %v86
  %v687 = vunpack.c.h.b16 %v86
  %v688 = vunpack.c.l.b16 %v87
  %v689 = vunpack.c.h.b16 %v87
  %v690 = vunpack.c.l.b16 %v88
  %v691 = vunpack.c.h.b16 %v88
  %v692 = vunpack.c.l.b16 %v89
  %v693 = vunpack.c.h.b16 %v89
  %v694 = vunpack.c.l.b16 %v90
  %v695 = vunpack.c.h.b16 %v90
  %v696 = vunpack.c.l.b16 %v91
  %v697 = vunpack.c.h.b16 %v91
  %v698 = vunpack.c.l.b16 %v92
  %v699 = vunpack.c.h.b16 %v92
  %v700 = vunpack.c.l.b16 %v93
  %v701 = vunpack.c.h.b16 %v93
  %v702 = vunpack.c.l.b16 %v94
  %v703 = vunpack.c.h.b16 %v94
  %v704 = vunpack.c.l.b16 %v95
  %v705 = vunpack.c.h.b16 %v95
  %v706 = vunpack.c.l.b16 %v96
  %v707 = vunpack.c.h.b16 %v96
  %v708 = vunpack.c.l.b16 %v97
  %v709 = vunpack.c.h.b16 %v97
  %v710 = vunpack.c.l.b16 %v98
  %v711 = vunpack.c.h.b16 %v98
  %v712 = vunpack.c.l.b16 %v99
  %v713 = vunpack.c.h.b16 %v99
  %v714 = vunpack.c.l.b16 %v100
  %v715 = vunpack.c.h.b16 %v100
  %v716 = vunpack.c.l.b16 %v101
  %v717 = vunpack.c.h.b16 %v101
  %v718 = vunpack.c.l.b16 %v102
  %v719 = vunpack.c.h.b16 %v102
  %v720 = vunpack.c.l.b16 %v103
  %v721 = vunpack.c.h.b16 %v103
  %v722 = vunpack.c.l.b16 %v104
  %v723 = vunpack.c.h.b16 %v104
  %v724 = vunpack.c.l.b16 %v105
  %v725 = vunpack.c.h.b16 %v105
  %v726 = vunpack.c.l.b16 %v106
  %v727 = vunpack.c.h.b16 %v106
  %v728 = vunpack.c.l.b16 %v107
  %v729 = vunpack.c.h.b16 %v107
  %v730 = vunpack.c.l.b16 %v108
  %v731 = vunpack.c.h.b16 %v108
  %v732 = vunpack.c.l.b16 %v109
  %v733 = vunpack.c.h.b16 %v109
  %v734 = vunpack.c.l.b16 %v110
  %v735 = vunpack.c.h.b16 %v110
  %v736 = vunpack.c.l.b16 %v111
  %v737 = vunpack.c.h.b16 %v111
  %v738 = vunpack.c.l.b16 %v112
  %v739 = vunpack.c.h.b16 %v112
  %v740 = vunpack.c.l.b16 %v113
  %v741 = vunpack.c.h.b16 %v113
  %v742 = vunpack.c.l.b16 %v114
  %v743 = vunpack.c.h.b16 %v114
  %v744 = vunpack.c.l.b16 %v115
  %v745 = vunpack.c.h.b16 %v115
  %v746 = vunpack.c.l.b16 %v116
  %v747 = vunpack.c.h.b16 %v116
  %v748 = vunpack.c.l.b16 %v117
  %v749 = vunpack.c.h.b16 %v117
  %v750 = vunpack.c.l.b16 %v118
  %v751 = vunpack.c.h.b16 %v118
  %v752 = vunpack.c.l.b16 %v119
  %v753 = vunpack.c.h.b16 %v119
  %v754 = vunpack.c.l.b16 %v120
  %v755 = vunpack.c.h.b16 %v120
  %v756 = vunpack.c.l.b16 %v121
  %v757 = vunpack.c.h.b16 %v121
  %v758 = vunpack.c.l.b16 %v122
  %v759 = vunpack.c.h.b16 %v122
  %v760 = vunpack.c.l.b16 %v123
  %v761 = vunpack.c.h.b16 %v123
  %v762 = vunpack.c.l.b16 %v124
  %v763 = vunpack.c.h.b16 %v124
  %v764 = vunpack.c.l.b16 %v125
  %v765 = vunpack.c.h.b16 %v125
  %v766 = vunpack.c.l.b16 %v126
  %v767 = vunpack.c.h.b16 %v126
  %v768 = vunpack.c.l.b16 %v127
  %v769 = vunpack.c.h.b16 %v127
  %v770 = vunpack.c.l.b16 %v128
  %v771 = vunpack.c.h.b16 %v128
  %v772 = vunpack.c.l.b16 %v129
  %v773 = vunpack.c.h.b16 %v129
  %v774 = vunpack.c.l.b16 %v130
  %v775 = vunpack.c.h.b16 %v130
  %v776 = vunpack.c.l.b16 %v131
  %v777 = vunpack.c.h.b16 %v131
  %v778 = vunpack.c.l.b16 %v132
  %v779 = vunpack.c.h.b16 %v132
  %v780 = vunpack.c.l.b16 %v133
  %v781 = vunpack.c.h.b16 %v133
  %v782 = vunpack.c.l.b16 %v134
  %v783 = vunpack.c.h.b16 %v134
  %v784 = vunpack.c.l.b16 %v135
  %v785 = vunpack.c.h.b16 %v135
  %v786 = vunpack.c.l.b16 %v136
  %v787 = vunpack.c.h.b16 %v136
  %v788 = vunpack.c.l.b16 %v137
  %v789 = vunpack.c.h.b16 %v137
  %v790 = vunpack.c.l.b16 %v138
  %v791 = vunpack.c.h.b16 %v138
  %v792 = vunpack.c.l.b16 %v139
  %v793 = vunpack.c.h.b16 %v139
  %v794 = vunpack.c.l.b16 %v140
  %v795 = vunpack.c.h.b16 %v140
  %v796 = vunpack.c.l.b16 %v141
  %v797 = vunpack.c.h.b16 %v141
  %v798 = vunpack.c.l.b16 %v142
  %v799 = vunpack.c.h.b16 %v142
  %v800 = vunpack.c.l.b16 %v143
  %v801 = vunpack.c.h.b16 %v143
  %v802 = vunpack.c.l.b16 %v144
  %v803 = vunpack.c.h.b16 %v144
  %v804 = vunpack.c.l.b16 %v145
  %v805 = vunpack.c.h.b16 %v145
  %v806 = vunpack.c.l.b16 %v146
  %v807 = vunpack.c.h.b16 %v146
  %v808 = vunpack.c.l.b16 %v147
  %v809 = vunpack.c.h.b16 %v147
  %v810 = vunpack.c.l.b16 %v148
  %v811 = vunpack.c.h.b16 %v148
  %v812 = vunpack.c.l.b16 %v149
  %v813 = vunpack.c.h.b16 %v149
  %v814 = vunpack.c.l.b16 %v150
  %v815 = vunpack.c.h.b16 %v150
  %v816 = vunpack.c.l.b16 %v151
  %v817 = vunpack.c.h.b16 %v151
  %v818 = vunpack.c.l.b16 %v152
  %v819 = vunpack.c.h.b16 %v152
  %v820 = vunpack.c.l.b16 %v153
  %v821 = vunpack.c.h.b16 %v153
  %v822 = vunpack.c.l.b16 %v154
  %v823 = vunpack.c.h.b16 %v154
  %v824 = vunpack.c.l.b16 %v155
  %v825 = vunpack.c.h.b16 %v155
  %v826 = vunpack.c.l.b16 %v156
  %v827 = vunpack.c.h.b16 %v156
  %v828 = vunpack.c.l.b16 %v157
  %v829 = vunpack.c.h.b16 %v157
  %v830 = vunpack.c.l.b16 %v158
  %v831 = vunpack.c.h.b16 %v158
  %v832 = vunpack.c.l.b16 %v159
  %v833 = vunpack.c.h.b16 %v159
  %v834 = vunpack.c.l.b16 %v160
  %v835 = vunpack.c.h.b16 %v160
  %v836 = vunpack.c.l.b16 %v161
  %v837 = vunpack.c.h.b16 %v161
  %v838 = vunpack.c.l.b16 %v162
  %v839 = vunpack.c.h.b16 %v162
  %v840 = vunpack.c.l.b16 %v163
  %v841 = vunpack.c.h.b16 %v163
  %v842 = vunpack.c.l.b16 %v164
  %v843 = vunpack.c.h.b16 %v164
  %v844 = vunpack.c.l.b16 %v165
  %v845 = vunpack.c.h.b16 %v165
  %v846 = vunpack.c.l.b16 %v166
  %v847 = vunpack.c.h.b16 %v166
  %v848 = vunpack.c.l.b16 %v167
  %v849 = vunpack.c.h.b16 %v167
  %v850 = vunpack.c.l.b16 %v168
  %v851 = vunpack.c.h.b16 %v168
  %v852 = vunpack.c.l.b16 %v169
  %v853 = vunpack.c.h.b16 %v169
  %v854 = vunpack.c.l.b16 %v170
  %v855 = vunpack.c.h.b16 %v170
  %v856 = vunpack.c.l.b16 %v171
  %v857 = vunpack.c.h.b16 %v171
  %v858 = vunpack.c.l.b16 %v172
  %v859 = vunpack.c.h.b16 %v172
  %v860 = vunpack.c.l.b16 %v173
  %v861 = vunpack.c.h.b16 %v173
  %v862 = vunpack.c.l.b16 %v174
  %v863 = vunpack.c.h.b16 %v174
  %v864 = vunpack.c.l.b16 %v175
  %v865 = vunpack.c.h.b16 %v175
  %v866 = vunpack.c.l.b16 %v176
  %v867 = vunpack.c.h.b16 %v176
  %v868 = vunpack.c.l.b16 %v177
  %v869 = vunpack.c.h.b16 %v177
  %v870 = vunpack.c.l.b16 %v178
  %v871 = vunpack.c.h.b16 %v178
  %v872 = vunpack.c.l.b16 %v179
  %v873 = vunpack.c.h.b16 %v179
  %v874 = vunpack.c.l.b16 %v180
  %v875 = vunpack.c.h.b16 %v180
  %v876 = vunpack.c.l.b16 %v181
  %v877 = vunpack.c.h.b16 %v181
  %v878 = vunpack.c.l.b16 %v182
  %v879 = vunpack.c.h.b16 %v182
  %v880 = vunpack.c.l.b16 %v183
  %v881 = vunpack.c.h.b16 %v183
  %v882 = vunpack.c.l.b16 %v184
  %v883 = vunpack.c.h.b16 %v184
  %v884 = vunpack.c.l.b16 %v185
  %v885 = vunpack.c.h.b16 %v185
  %v886 = vunpack.c.l.b16 %v186
  %v887 = vunpack.c.h.b16 %v186
  %v888 = vunpack.c.l.b16 %v187
  %v889 = vunpack.c.h.b16 %v187
  %v890 = vunpack.c.l.b16 %v188
  %v891 = vunpack.c.h.b16 %v188
  %v892 = vunpack.c.l.b16 %v189
  %v893 = vunpack.c.h.b16 %v189
  %v894 = vunpack.c.l.b16 %v190
  %v895 = vunpack.c.h.b16 %v190
  %v896 = vunpack.c.l.b16 %v191
  %v897 = vunpack.c.h.b16 %v191
  %v898 = vunpack.c.l.b16 %v192
  %v899 = vunpack.c.h.b16 %v192
  %v900 = vunpack.c.l.b16 %v193
  %v901 = vunpack.c.h.b16 %v193
  %v902 = vunpack.c.l.b16 %v194
  %v903 = vunpack.c.h.b16 %v194
  %v904 = vunpack.c.l.b16 %v195
  %v905 = vunpack.c.h.b16 %v195
  %v906 = vunpack.c.l.b16 %v196
  %v907 = vunpack.c.h.b16 %v196
  %v908 = vunpack.c.l.b16 %v197
  %v909 = vunpack.c.h.b16 %v197
  %v910 = vunpack.c.l.b16 %v198
  %v911 = vunpack.c.h.b16 %v198
  %v912 = vunpack.c.l.b16 %v199
  %v913 = vunpack.c.h.b16 %v199
  %v914 = vunpack.c.l.b16 %v200
  %v915 = vunpack.c.h.b16 %v200
  %v916 = vunpack.c.l.b16 %v201
  %v917 = vunpack.c.h.b16 %v201
  %v918 = vunpack.c.l.b16 %v202
  %v919 = vunpack.c.h.b16 %v202
  %v920 = vunpack.c.l.b16 %v203
  %v921 = vunpack.c.h.b16 %v203
  %v922 = vunpack.c.l.b16 %v204
  %v923 = vunpack.c.h.b16 %v204
  %v924 = vunpack.c.l.b16 %v205
  %v925 = vunpack.c.h.b16 %v205
  %v926 = vunpack.c.l.b16 %v206
  %v927 = vunpack.c.h.b16 %v206
  %v928 = vunpack.c.l.b16 %v207
  %v929 = vunpack.c.h.b16 %v207
  %v930 = vunpack.c.l.b16 %v208
  %v931 = vunpack.c.h.b16 %v208
  %v932 = vunpack.c.l.b16 %v209
  %v933 = vunpack.c.h.b16 %v209
  %v934 = vunpack.c.l.b16 %v210
  %v935 = vunpack.c.h.b16 %v210
  %v936 = vunpack.c.l.b16 %v211
  %v937 = vunpack.c.h.b16 %v211
  %v938 = vunpack.c.l.b16 %v212
  %v939 = vunpack.c.h.b16 %v212
  %v940 = vunpack.c.l.b16 %v213
  %v941 = vunpack.c.h.b16 %v213
  %v942 = vunpack.c.l.b16 %v214
  %v943 = vunpack.c.h.b16 %v214
  %v944 = vunpack.c.l.b16 %v215
  %v945 = vunpack.c.h.b16 %v215
  %v946 = vunpack.c.l.b16 %v216
  %v947 = vunpack.c.h.b16 %v216
  %v948 = vunpack.c.l.b16 %v217
  %v949 = vunpack.c.h.b16 %v217
  %v950 = vunpack.c.l.b16 %v218
  %v951 = vunpack.c.h.b16 %v218
  %v952 = vunpack.c.l.b16 %v219
  %v953 = vunpack.c.h.b16 %v219
  %v954 = vunpack.c.l.b16 %v220
  %v955 = vunpack.c.h.b16 %v220
  %v956 = vunpack.c.l.b16 %v221
  %v957 = vunpack.c.h.b16 %v221
  %v958 = vunpack.c.l.b16 %v222
  %v959 = vunpack.c.h.b16 %v222
  %v960 = vunpack.c.l.b16 %v223
  %v961 = vunpack.c.h.b16 %v223
  %v962 = vunpack.c.l.b16 %v224
  %v963 = vunpack.c.h.b16 %v224
  %v964 = vunpack.c.l.b16 %v225
  %v965 = vunpack.c.h.b16 %v225
  %v966 = vunpack.c.l.b16 %v226
  %v967 = vunpack.c.h.b16 %v226
  %v968 = vunpack.c.l.b16 %v227
  %v969 = vunpack.c.h.b16 %v227
  %v970 = vunpack.c.l.b16 %v228
  %v971 = vunpack.c.h.b16 %v228
  %v972 = vunpack.c.l.b16 %v229
  %v973 = vunpack.c.h.b16 %v229
  %v974 = vunpack.c.l.b16 %v230
  %v975 = vunpack.c.h.b16 %v230
  %v976 = vunpack.c.l.b16 %v231
  %v977 = vunpack.c.h.b16 %v231
  %v978 = vunpack.c.l.b16 %v232
  %v979 = vunpack.c.h.b16 %v232
  %v980 = vunpack.c.l.b16 %v233
  %v981 = vunpack.c.h.b16 %v233
  %v982 = vunpack.c.l.b16 %v234
  %v983 = vunpack.c.h.b16 %v234
  %v984 = vunpack.c.l.b16 %v235
  %v985 = vunpack.c.h.b16 %v235
  %v986 = vunpack.c.l.b16 %v236
  %v987 = vunpack.c.h.b16 %v236
  %v988 = vunpack.c.l.b16 %v237
  %v989 = vunpack.c.h.b16 %v237
  %v990 = vunpack.c.l.b16 %v238
  %v991 = vunpack.c.h.b16 %v238
  %v992 = vunpack.c.l.b16 %v239
  %v993 = vunpack.c.h.b16 %v239
  %v994 = vunpack.c.l.b16 %v240
  %v995 = vunpack.c.h.b16 %v240
  %v996 = vunpack.c.l.b16 %v241
  %v997 = vunpack.c.h.b16 %v241
  %v998 = vunpack.c.l.b16 %v242
  %v999 = vunpack.c.h.b16 %v242
  %v1000 = vunpack.c.l.b16 %v243
  %v1001 = vunpack.c.h.b16 %v243
  %v1002 = vunpack.c.l.b16 %v244
  %v1003 = vunpack.c.h.b16 %v244
  %v1004 = vunpack.c.l.b16 %v245
  %v1005 = vunpack.c.h.b16 %v245
  %v1006 = vunpack.c.l.b16 %v246
  %v1007 = vunpack.c.h.b16 %v246
  %v1008 = vunpack.c.l.b16 %v247
  %v1009 = vunpack.c.h.b16 %v247
  %v1010 = vunpack.c.l.b16 %v248
  %v1011 = vunpack.c.h.b16 %v248
  %v1012 = vunpack.c.l.b16 %v249
  %v1013 = vunpack.c.h.b16 %v249
  %v1014 = vunpack.c.l.b16 %v250
  %v1015 = vunpack.c.h.b16 %v250
  %v1016 = vunpack.c.l.b16 %v251
  %v1017 = vunpack.c.h.b16 %v251
  %v1018 = vunpack.c.l.b16 %v252
  %v1019 = vunpack.c.h.b16 %v252
  %v1020 = vunpack.c.l.b16 %v253
  %v1021 = vunpack.c.h.b16 %v253
  %v1022 = vunpack.c.l.b16 %v254
  %v1023 = vunpack.c.h.b16 %v254
  %v1024 = vunpack.c.l.b16 %v255
  %v1025 = vunpack.c.h.b16 %v255
  %v1026 = vunpack.c.l.b16 %v256
  %v1027 = vunpack.c.h.b16 %v256
  %v1028 = vunpack.c.l.b16 %v257
  %v1029 = vunpack.c.h.b16 %v257
  %v1030 = vunpack.c.l.b16 %v258
  %v1031 = vunpack.c.h.b16 %v258
  %v1032 = vunpack.c.l.b16 %v259
  %v1033 = vunpack.c.h.b16 %v259
  %v1034 = vunpack.c.l.b16 %v260
  %v1035 = vunpack.c.h.b16 %v260
  %v1036 = vunpack.c.l.b16 %v261
  %v1037 = vunpack.c.h.b16 %v261
  %v1038 = vunpack.c.l.b16 %v262
  %v1039 = vunpack.c.h.b16 %v262
  %v1040 = vunpack.c.l.b16 %v263
  %v1041 = vunpack.c.h.b16 %v263
  %v1042 = vunpack.c.l.b16 %v264
  %v1043 = vunpack.c.h.b16 %v264
  %v1044 = vunpack.c.l.b16 %v265
  %v1045 = vunpack.c.h.b16 %v265
  %v1046 = vunpack.c.l.b16 %v266
  %v1047 = vunpack.c.h.b16 %v266
  %v1048 = vunpack.c.l.b16 %v267
  %v1049 = vunpack.c.h.b16 %v267
  %v1050 = vunpack.c.l.b16 %v268
  %v1051 = vunpack.c.h.b16 %v268
  %v1052 = vunpack.c.l.b16 %v269
  %v1053 = vunpack.c.h.b16 %v269
  %v1054 = vunpack.c.l.b16 %v270
  %v1055 = vunpack.c.h.b16 %v270
  %v1056 = vpack.c.b16 %v560, %v544
  %v1057 = vpack.c.b16 %v561, %v545
  %v1058 = vpack.c.b16 %v562, %v546
  %v1059 = vpack.c.b16 %v563, %v547
  %v1060 = vpack.c.b16 %v564, %v548
  %v1061 = vpack.c.b16 %v565, %v549
  %v1062 = vpack.c.b16 %v566, %v550
  %v1063 = vpack.c.b16 %v567, %v551
  %v1064 = vpack.c.b16 %v568, %v552
  %v1065 = vpack.c.b16 %v569, %v553
  %v1066 = vpack.c.b16 %v570, %v554
  %v1067 = vpack.c.b16 %v571, %v555
  %v1068 = vpack.c.b16 %v572, %v556
  %v1069 = vpack.c.b16 %v573, %v557
  %v1070 = vpack.c.b16 %v574, %v558
  %v1071 = vpack.c.b16 %v575, %v559
  %v1072 = vpack.c.b16 %v592, %v576
  %v1073 = vpack.c.b16 %v593, %v577
  %v1074 = vpack.c.b16 %v594, %v578
  %v1075 = vpack.c.b16 %v595, %v579
  %v1076 = vpack.c.b16 %v596, %v580
  %v1077 = vpack.c.b16 %v597, %v581
  %v1078 = vpack.c.b16 %v598, %v582
  %v1079 = vpack.c.b16 %v599, %v583
  %v1080 = vpack.c.b16 %v600, %v584
  %v1081 = vpack.c.b16 %v601, %v585
  %v1082 = vpack.c.b16 %v602, %v586
  %v1083 = vpack.c.b16 %v603, %v587
  %v1084 = vpack.c.b16 %v604, %v588
  %v1085 = vpack.c.b16 %v605, %v589
  %v1086 = vpack.c.b16 %v606, %v590
  %v1087 = vpack.c.b16 %v607, %v591
  %v1088 = vpack.c.b16 %v624, %v608
  %v1089 = vpack.c.b16 %v625, %v609
  %v1090 = vpack.c.b16 %v626, %v610
  %v1091 = vpack.c.b16 %v627, %v611
  %v1092 = vpack.c.b16 %v628, %v612
  %v1093 = vpack.c.b16 %v629, %v613
  %v1094 = vpack.c.b16 %v630, %v614
  %v1095 = vpack.c.b16 %v631, %v615
  %v1096 = vpack.c.b16 %v632, %v616
  %v1097 = vpack.c.b16 %v633, %v617
  %v1098 = vpack.c.b16 %v634, %v618
  %v1099 = vpack.c.b16 %v635, %v619
  %v1100 = vpack.c.b16 %v636, %v620
  %v1101 = vpack.c.b16 %v637, %v621
  %v1102 = vpack.c.b16 %v638, %v622
  %v1103 = vpack.c.b16 %v639, %v623
  %v1104 = vpack.c.b16 %v656, %v640
  %v1105 = vpack.c.b16 %v657, %v641
  %v1106 = vpack.c.b16 %v658, %v642
  %v1107 = vpack.c.b16 %v659, %v643
  %v1108 = vpack.c.b16 %v660, %v644
  %v1109 = vpack.c.b16 %v661, %v645
  %v1110 = vpack.c.b16 %v662, %v646
  %v1111 = vpack.c.b16 %v663, %v647
  %v1112 = vpack.c.b16 %v664, %v648
  %v1113 = vpack.c.b16 %v665, %v649
  %v1114 = vpack.c.b16 %v666, %v650
  %v1115 = vpack.c.b16 %v667, %v651
  %v1116 = vpack.c.b16 %v668, %v652
  %v1117 = vpack.c.b16 %v669, %v653
  %v1118 = vpack.c.b16 %v670, %v654
  %v1119 = vpack.c.b16 %v671, %v655
  %v1120 = vpack.c.b16 %v688, %v672
  %v1121 = vpack.c.b16 %v689, %v673
  %v1122 = vpack.c.b16 %v690, %v674
  %v1123 = vpack.c.b16 %v691, %v675
  %v1124 = vpack.c.b16 %v692, %v676
  %v1125 = vpack.c.b16 %v693, %v677
  %v1126 = vpack.c.b16 %v694, %v678
  %v1127 = vpack.c.b16 %v695, %v679
  %v1128 = vpack.c.b16 %v696, %v680
  %v1129 = vpack.c.b16 %v697, %v681
  %v1130 = vpack.c.b16 %v698, %v682
  %v1131 = vpack.c.b16 %v699, %v683
  %v1132 = vpack.c.b16 %v700, %v684
  %v1133 = vpack.c.b16 %v701, %v685
  %v1134 = vpack.c.b16 %v702, %v686
  %v1135 = vpack.c.b16 %v703, %v687
  %v1136 = vpack.c.b16 %v720, %v704
  %v1137 = vpack.c.b16 %v721, %v705
  %v1138 = vpack.c.b16 %v722, %v706
  %v1139 = vpack.c.b16 %v723, %v707
  %v1140 = vpack.c.b16 %v724, %v708
  %v1141 = vpack.c.b16 %v725, %v709
  %v1142 = vpack.c.b16 %v726, %v710
  %v1143 = vpack.c.b16 %v727, %v711
  %v1144 = vpack.c.b16 %v728, %v712
  %v1145 = vpack.c.b16 %v729, %v713
  %v1146 = vpack.c.b16 %v730, %v714
  %v1147 = vpack.c.b16 %v731, %v715
  %v1148 = vpack.c.b16 %v732, %v716
  %v1149 = vpack.c.b16 %v733, %v717
  %v1150 = vpack.c.b16 %v734, %v718
  %v1151 = vpack.c.b16 %v735, %v719
  %v1152 = vpack.c.b16 %v752, %v736
  %v1153 = vpack.c.b16 %v753, %v737
  %v1154 = vpack.c.b16 %v754, %v738
  %v1155 = vpack.c.b16 %v755, %v739
  %v1156 = vpack.c.b16 %v756, %v740
  %v1157 = vpack.c.b16 %v757, %v741
  %v1158 = vpack.c.b16 %v758, %v742
  %v1159 = vpack.c.b16 %v759, %v743
  %v1160 = vpack.c.b16 %v760, %v744
  %v1161 = vpack.c.b16 %v761, %v745
  %v1162 = vpack.c.b16 %v762, %v746
  %v1163 = vpack.c.b16 %v763, %v747
  %v1164 = vpack.c.b16 %v764, %v748
  %v1165 = vpack.c.b16 %v765, %v749
  %v1166 = vpack.c.b16 %v766, %v750
  %v1167 = vpack.c.b16 %v767, %v751
  %v1168 = vpack.c.b16 %v784, %v768
  %v1169 = vpack.c.b16 %v785, %v769
  %v1170 = vpack.c.b16 %v786, %v770
  %v1171 = vpack.c.b16 %v787, %v771
  %v1172 = vpack.c.b16 %v788, %v772
  %v1173 = vpack.c.b16 %v789, %v773
  %v1174 = vpack.c.b16 %v790, %v774
  %v1175 = vpack.c.b16 %v791, %v775
  %v1176 = vpack.c.b16 %v792, %v776
  %v1177 = vpack.c.b16 %v793, %v777
  %v1178 = vpack.c.b16 %v794, %v778
  %v1179 = vpack.c.b16 %v795, %v779
  %v1180 = vpack.c.b16 %v796, %v780
  %v1181 = vpack.c.b16 %v797, %v781
  %v1182 = vpack.c.b16 %v798, %v782
  %v1183 = vpack.c.b16 %v799, %v783
  %v1184 = vpack.c.b16 %v816, %v800
  %v1185 = vpack.c.b16 %v817, %v801
  %v1186 = vpack.c.b16 %v818, %v802
  %v1187 = vpack.c.b16 %v819, %v803
  %v1188 = vpack.c.b16 %v820, %v804
  %v1189 = vpack.c.b16 %v821, %v805
  %v1190 = vpack.c.b16 %v822, %v806
  %v1191 = vpack.c.b16 %v823, %v807
  %v1192 = vpack.c.b16 %v824, %v808
  %v1193 = vpack.c.b16 %v825, %v809
  %v1194 = vpack.c.b16 %v826, %v810
  %v1195 = vpack.c.b16 %v827, %v811
  %v1196 = vpack.c.b16 %v828, %v812
  %v1197 = vpack.c.b16 %v829, %v813
  %v1198 = vpack.c.b16 %v830, %v814
  %v1199 = vpack.c.b16 %v831, %v815
  %v1200 = vpack.c.b16 %v848, %v832
  %v1201 = vpack.c.b16 %v849, %v833
  %v1202 = vpack.c.b16 %v850, %v834
  %v1203 = vpack.c.b16 %v851, %v835
  %v1204 = vpack.c.b16 %v852, %v836
  %v1205 = vpack.c.b16 %v853, %v837
  %v1206 = vpack.c.b16 %v854, %v838
  %v1207 = vpack.c.b16 %v855, %v839
  %v1208 = vpack.c.b16 %v856, %v840
  %v1209 = vpack.c.b16 %v857, %v841
  %v1210 = vpack.c.b16 %v858, %v842
  %v1211 = vpack.c.b16 %v859, %v843
  %v1212 = vpack.c.b16 %v860, %v844
  %v1213 = vpack.c.b16 %v861, %v845
  %v1214 = vpack.c.b16 %v862, %v846
  %v1215 = vpack.c.b16 %v863, %v847
  %v1216 = vpack.c.b16 %v880, %v864
  %v1217 = vpack.c.b16 %v881, %v865
  %v1218 = vpack.c.b16 %v882, %v866
  %v1219 = vpack.c.b16 %v883, %v867
  %v1220 = vpack.c.b16 %v884, %v868
  %v1221 = vpack.c.b16 %v885, %v869
  %v1222 = vpack.c.b16 %v886, %v870
  %v1223 = vpack.c.b16 %v887, %v871
  %v1224 = vpack.c.b16 %v888, %v872
  %v1225 = vpack.c.b16 %v889, %v873
  %v1226 = vpack.c.b16 %v890, %v874
  %v1227 = vpack.c.b16 %v891, %v875
  %v1228 = vpack.c.b16 %v892, %v876
  %v1229 = vpack.c.b16 %v893, %v877
  %v1230 = vpack.c.b16 %v894, %v878
  %v1231 = vpack.c.b16 %v895, %v879
  %v1232 = vpack.c.b16 %v912, %v896
  %v1233 = vpack.c.b16 %v913, %v897
  %v1234 = vpack.c.b16 %v914, %v898
  %v1235 = vpack.c.b16 %v915, %v899
  %v1236 = vpack.c.b16 %v916, %v900
  %v1237 = vpack.c.b16 %v917, %v901
  %v1238 = vpack.c.b16 %v918, %v902
  %v1239 = vpack.c.b16 %v919, %v903
  %v1240 = vpack.c.b16 %v920, %v904
  %v1241 = vpack.c.b16 %v921, %v905
  %v1242 = vpack.c.b16 %v922, %v906
  %v1243 = vpack.c.b16 %v923, %v907
  %v1244 = vpack.c.b16 %v924, %v908
  %v1245 = vpack.c.b16 %v925, %v909
  %v1246 = vpack.c.b16 %v926, %v910
  %v1247 = vpack.c.b16 %v927, %v911
  %v1248 = vpack.c.b16 %v944, %v928
  %v1249 = vpack.c.b16 %v945, %v929
  %v1250 = vpack.c.b16 %v946, %v930
  %v1251 = vpack.c.b16 %v947, %v931
  %v1252 = vpack.c.b16 %v948, %v932
  %v1253 = vpack.c.b16 %v949, %v933
  %v1254 = vpack.c.b16 %v950, %v934
  %v1255 = vpack.c.b16 %v951, %v935
  %v1256 = vpack.c.b16 %v952, %v936
  %v1257 = vpack.c.b16 %v953, %v937
  %v1258 = vpack.c.b16 %v954, %v938
  %v1259 = vpack.c.b16 %v955, %v939
  %v1260 = vpack.c.b16 %v956, %v940
  %v1261 = vpack.c.b16 %v957, %v941
  %v1262 = vpack.c.b16 %v958, %v942
  %v1263 = vpack.c.b16 %v959, %v943
  %v1264 = vpack.c.b16 %v976, %v960
  %v1265 = vpack.c.b16 %v977, %v961
  %v1266 = vpack.c.b16 %v978, %v962
  %v1267 = vpack.c.b16 %v979, %v963
  %v1268 = vpack.c.b16 %v980, %v964
  %v1269 = vpack.c.b16 %v981, %v965
  %v1270 = vpack.c.b16 %v982, %v966
  %v1271 = vpack.c.b16 %v983, %v967
  %v1272 = vpack.c.b16 %v984, %v968
  %v1273 = vpack.c.b16 %v985, %v969
  %v1274 = vpack.c.b16 %v986, %v970
  %v1275 = vpack.c.b16 %v987, %v971
  %v1276 = vpack.c.b16 %v988, %v972
  %v1277 = vpack.c.b16 %v989, %v973
  %v1278 = vpack.c.b16 %v990, %v974
  %v1279 = vpack.c.b16 %v991, %v975
  %v1280 = vpack.c.b16 %v1008, %v992
  %v1281 = vpack.c.b16 %v1009, %v993
  %v1282 = vpack.c.b16 %v1010, %v994
  %v1283 = vpack.c.b16 %v1011, %v995
  %v1284 = vpack.c.b16 %v1012, %v996
  %v1285 = vpack.c.b16 %v1013, %v997
  %v1286 = vpack.c.b16 %v1014, %v998
  %v1287 = vpack.c.b16 %v1015, %v999
  %v1288 = vpack.c.b16 %v1016, %v1000
  %v1289 = vpack.c.b16 %v1017, %v1001
  %v1290 = vpack.c.b16 %v1018, %v1002
  %v1291 = vpack.c.b16 %v1019, %v1003
  %v1292 = vpack.c.b16 %v1020, %v1004
  %v1293 = vpack.c.b16 %v1021, %v1005
  %v1294 = vpack.c.b16 %v1022, %v1006
  %v1295 = vpack.c.b16 %v1023, %v1007
  %v1296 = vpack.c.b16 %v1040, %v1024
  %v1297 = vpack.c.b16 %v1041, %v1025
  %v1298 = vpack.c.b16 %v1042, %v1026
  %v1299 = vpack.c.b16 %v1043, %v1027
  %v1300 = vpack.c.b16 %v1044, %v1028
  %v1301 = vpack.c.b16 %v1045, %v1029
  %v1302 = vpack.c.b16 %v1046, %v1030
  %v1303 = vpack.c.b16 %v1047, %v1031
  %v1304 = vpack.c.b16 %v1048, %v1032
  %v1305 = vpack.c.b16 %v1049, %v1033
  %v1306 = vpack.c.b16 %v1050, %v1034
  %v1307 = vpack.c.b16 %v1051, %v1035
  %v1308 = vpack.c.b16 %v1052, %v1036
  %v1309 = vpack.c.b16 %v1053, %v1037
  %v1310 = vpack.c.b16 %v1054, %v1038
  %v1311 = vpack.c.b16 %v1055, %v1039
  %1568 = vmatprep.subr.bf16.mxu0 %v1057
  %1569 = vmatpush1.bf16.msra.mxu0 %v1056
  %1570 = vmatprep.subr.bf16.mxu0 %v1073
  %1571 = vmatpush1.bf16.msra.mxu0 %v1072
  %1572 = vmatprep.subr.bf16.mxu0 %v1089
  %1573 = vmatpush1.bf16.msra.mxu0 %v1088
  %1574 = vmatprep.subr.bf16.mxu0 %v1105
  %1575 = vmatpush1.bf16.msra.mxu0 %v1104
  %1576 = vmatprep.subr.bf16.mxu0 %v1121
  %1577 = vmatpush1.bf16.msra.mxu0 %v1120
  %1578 = vmatprep.subr.bf16.mxu0 %v1137
  %1579 = vmatpush1.bf16.msra.mxu0 %v1136
  %1580 = vmatprep.subr.bf16.mxu0 %v1153
  %1581 = vmatpush1.bf16.msra.mxu0 %v1152
  %1582 = vmatprep.subr.bf16.mxu0 %v1169
  %1583 = vmatpush1.bf16.msra.mxu0 %v1168
  %1584 = vmatprep.subr.bf16.mxu0 %v1185
  %1585 = vmatpush1.bf16.msra.mxu0 %v1184
  %1586 = vmatprep.subr.bf16.mxu0 %v1201
  %1587 = vmatpush1.bf16.msra.mxu0 %v1200
  %1588 = vmatprep.subr.bf16.mxu0 %v1217
  %1589 = vmatpush1.bf16.msra.mxu0 %v1216
  %1590 = vmatprep.subr.bf16.mxu0 %v1233
  %1591 = vmatpush1.bf16.msra.mxu0 %v1232
  %1592 = vmatprep.subr.bf16.mxu0 %v1249
  %1593 = vmatpush1.bf16.msra.mxu0 %v1248
  %1594 = vmatprep.subr.bf16.mxu0 %v1265
  %1595 = vmatpush1.bf16.msra.mxu0 %v1264
  %1596 = vmatprep.subr.bf16.mxu0 %v1281
  %1597 = vmatpush1.bf16.msra.mxu0 %v1280
  %1598 = vmatprep.subr.bf16.mxu0 %v1297
  %1599 = vmatpush1.bf16.msra.mxu0 %v1296
  %1600 = vmatprep.mubr.bf16.mxu0 %v285
  %1601 = vmatmul.mubr.bf16.gmra.mrb[0].mxu0 %v284
  %v1602 = vpop.f32.mrb[0].mxu0
  %v1603 = vadd.f32 %v275, %v1602
  %v1604 = vpop.f32.mrb[0].mxu0
  %v1605 = vadd.f32 %v275, %v1604
  %v1606 = vpop.f32.mrb[0].mxu0
  %v1607 = vpop.f32.mrb[0].mxu0
  %1608 = vdwg.mxu0
  %1609 = vmatprep.subr.bf16.mxu0 %v1059
  %1610 = vmatpush1.bf16.msra.mxu0 %v1058
  %1611 = vmatprep.subr.bf16.mxu0 %v1075
  %1612 = vmatpush1.bf16.msra.mxu0 %v1074
  %1613 = vmatprep.subr.bf16.mxu0 %v1091
  %1614 = vmatpush1.bf16.msra.mxu0 %v1090
  %1615 = vmatprep.subr.bf16.mxu0 %v1107
  %1616 = vmatpush1.bf16.msra.mxu0 %v1106
  %1617 = vmatprep.subr.bf16.mxu0 %v1123
  %1618 = vmatpush1.bf16.msra.mxu0 %v1122
  %1619 = vmatprep.subr.bf16.mxu0 %v1139
  %1620 = vmatpush1.bf16.msra.mxu0 %v1138
  %1621 = vmatprep.subr.bf16.mxu0 %v1155
  %1622 = vmatpush1.bf16.msra.mxu0 %v1154
  %1623 = vmatprep.subr.bf16.mxu0 %v1171
  %1624 = vmatpush1.bf16.msra.mxu0 %v1170
  %1625 = vmatprep.subr.bf16.mxu0 %v1187
  %1626 = vmatpush1.bf16.msra.mxu0 %v1186
  %1627 = vmatprep.subr.bf16.mxu0 %v1203
  %1628 = vmatpush1.bf16.msra.mxu0 %v1202
  %1629 = vmatprep.subr.bf16.mxu0 %v1219
  %1630 = vmatpush1.bf16.msra.mxu0 %v1218
  %1631 = vmatprep.subr.bf16.mxu0 %v1235
  %1632 = vmatpush1.bf16.msra.mxu0 %v1234
  %1633 = vmatprep.subr.bf16.mxu0 %v1251
  %1634 = vmatpush1.bf16.msra.mxu0 %v1250
  %1635 = vmatprep.subr.bf16.mxu0 %v1267
  %1636 = vmatpush1.bf16.msra.mxu0 %v1266
  %1637 = vmatprep.subr.bf16.mxu0 %v1283
  %1638 = vmatpush1.bf16.msra.mxu0 %v1282
  %1639 = vmatprep.subr.bf16.mxu0 %v1299
  %1640 = vmatpush1.bf16.msra.mxu0 %v1298
  %1641 = vmatprep.mubr.bf16.mxu0 %v285
  %1642 = vmatmul.mubr.bf16.gmra.mrb[0].mxu0 %v284
  %v1643 = vpop.f32.mrb[0].mxu0
  %v1644 = vadd.f32 %v275, %v1643
  %v1645 = vpop.f32.mrb[0].mxu0
  %v1646 = vadd.f32 %v275, %v1645
  %v1647 = vpop.f32.mrb[0].mxu0
  %v1648 = vpop.f32.mrb[0].mxu0
  %1649 = vdwg.mxu0
  %1650 = vmatprep.subr.bf16.mxu0 %v1061
  %1651 = vmatpush1.bf16.msra.mxu0 %v1060
  %1652 = vmatprep.subr.bf16.mxu0 %v1077
  %1653 = vmatpush1.bf16.msra.mxu0 %v1076
  %1654 = vmatprep.subr.bf16.mxu0 %v1093
  %1655 = vmatpush1.bf16.msra.mxu0 %v1092
  %1656 = vmatprep.subr.bf16.mxu0 %v1109
  %1657 = vmatpush1.bf16.msra.mxu0 %v1108
  %1658 = vmatprep.subr.bf16.mxu0 %v1125
  %1659 = vmatpush1.bf16.msra.mxu0 %v1124
  %1660 = vmatprep.subr.bf16.mxu0 %v1141
  %1661 = vmatpush1.bf16.msra.mxu0 %v1140
  %1662 = vmatprep.subr.bf16.mxu0 %v1157
  %1663 = vmatpush1.bf16.msra.mxu0 %v1156
  %1664 = vmatprep.subr.bf16.mxu0 %v1173
  %1665 = vmatpush1.bf16.msra.mxu0 %v1172
  %1666 = vmatprep.subr.bf16.mxu0 %v1189
  %1667 = vmatpush1.bf16.msra.mxu0 %v1188
  %1668 = vmatprep.subr.bf16.mxu0 %v1205
  %1669 = vmatpush1.bf16.msra.mxu0 %v1204
  %1670 = vmatprep.subr.bf16.mxu0 %v1221
  %1671 = vmatpush1.bf16.msra.mxu0 %v1220
  %1672 = vmatprep.subr.bf16.mxu0 %v1237
  %1673 = vmatpush1.bf16.msra.mxu0 %v1236
  %1674 = vmatprep.subr.bf16.mxu0 %v1253
  %1675 = vmatpush1.bf16.msra.mxu0 %v1252
  %1676 = vmatprep.subr.bf16.mxu0 %v1269
  %1677 = vmatpush1.bf16.msra.mxu0 %v1268
  %1678 = vmatprep.subr.bf16.mxu0 %v1285
  %1679 = vmatpush1.bf16.msra.mxu0 %v1284
  %1680 = vmatprep.subr.bf16.mxu0 %v1301
  %1681 = vmatpush1.bf16.msra.mxu0 %v1300
  %1682 = vmatprep.mubr.bf16.mxu0 %v285
  %1683 = vmatmul.mubr.bf16.gmra.mrb[0].mxu0 %v284
  %v1684 = vpop.f32.mrb[0].mxu0
  %v1685 = vadd.f32 %v275, %v1684
  %v1686 = vpop.f32.mrb[0].mxu0
  %v1687 = vadd.f32 %v275, %v1686
  %v1688 = vpop.f32.mrb[0].mxu0
  %v1689 = vpop.f32.mrb[0].mxu0
  %1690 = vdwg.mxu0
  %1691 = vmatprep.subr.bf16.mxu0 %v1063
  %1692 = vmatpush1.bf16.msra.mxu0 %v1062
  %1693 = vmatprep.subr.bf16.mxu0 %v1079
  %1694 = vmatpush1.bf16.msra.mxu0 %v1078
  %1695 = vmatprep.subr.bf16.mxu0 %v1095
  %1696 = vmatpush1.bf16.msra.mxu0 %v1094
  %1697 = vmatprep.subr.bf16.mxu0 %v1111
  %1698 = vmatpush1.bf16.msra.mxu0 %v1110
  %1699 = vmatprep.subr.bf16.mxu0 %v1127
  %1700 = vmatpush1.bf16.msra.mxu0 %v1126
  %1701 = vmatprep.subr.bf16.mxu0 %v1143
  %1702 = vmatpush1.bf16.msra.mxu0 %v1142
  %1703 = vmatprep.subr.bf16.mxu0 %v1159
  %1704 = vmatpush1.bf16.msra.mxu0 %v1158
  %1705 = vmatprep.subr.bf16.mxu0 %v1175
  %1706 = vmatpush1.bf16.msra.mxu0 %v1174
  %1707 = vmatprep.subr.bf16.mxu0 %v1191
  %1708 = vmatpush1.bf16.msra.mxu0 %v1190
  %1709 = vmatprep.subr.bf16.mxu0 %v1207
  %1710 = vmatpush1.bf16.msra.mxu0 %v1206
  %1711 = vmatprep.subr.bf16.mxu0 %v1223
  %1712 = vmatpush1.bf16.msra.mxu0 %v1222
  %1713 = vmatprep.subr.bf16.mxu0 %v1239
  %1714 = vmatpush1.bf16.msra.mxu0 %v1238
  %1715 = vmatprep.subr.bf16.mxu0 %v1255
  %1716 = vmatpush1.bf16.msra.mxu0 %v1254
  %1717 = vmatprep.subr.bf16.mxu0 %v1271
  %1718 = vmatpush1.bf16.msra.mxu0 %v1270
  %1719 = vmatprep.subr.bf16.mxu0 %v1287
  %1720 = vmatpush1.bf16.msra.mxu0 %v1286
  %1721 = vmatprep.subr.bf16.mxu0 %v1303
  %1722 = vmatpush1.bf16.msra.mxu0 %v1302
  %1723 = vmatprep.mubr.bf16.mxu0 %v285
  %1724 = vmatmul.mubr.bf16.gmra.mrb[0].mxu0 %v284
  %v1725 = vpop.f32.mrb[0].mxu0
  %v1726 = vadd.f32 %v275, %v1725
  %v1727 = vpop.f32.mrb[0].mxu0
  %v1728 = vadd.f32 %v275, %v1727
  %v1729 = vpop.f32.mrb[0].mxu0
  %v1730 = vpop.f32.mrb[0].mxu0
  %1731 = vdwg.mxu0
  %1732 = vmatprep.subr.bf16.mxu0 %v1065
  %1733 = vmatpush1.bf16.msra.mxu0 %v1064
  %1734 = vmatprep.subr.bf16.mxu0 %v1081
  %1735 = vmatpush1.bf16.msra.mxu0 %v1080
  %1736 = vmatprep.subr.bf16.mxu0 %v1097
  %1737 = vmatpush1.bf16.msra.mxu0 %v1096
  %1738 = vmatprep.subr.bf16.mxu0 %v1113
  %1739 = vmatpush1.bf16.msra.mxu0 %v1112
  %1740 = vmatprep.subr.bf16.mxu0 %v1129
  %1741 = vmatpush1.bf16.msra.mxu0 %v1128
  %1742 = vmatprep.subr.bf16.mxu0 %v1145
  %1743 = vmatpush1.bf16.msra.mxu0 %v1144
  %1744 = vmatprep.subr.bf16.mxu0 %v1161
  %1745 = vmatpush1.bf16.msra.mxu0 %v1160
  %1746 = vmatprep.subr.bf16.mxu0 %v1177
  %1747 = vmatpush1.bf16.msra.mxu0 %v1176
  %1748 = vmatprep.subr.bf16.mxu0 %v1193
  %1749 = vmatpush1.bf16.msra.mxu0 %v1192
  %1750 = vmatprep.subr.bf16.mxu0 %v1209
  %1751 = vmatpush1.bf16.msra.mxu0 %v1208
  %1752 = vmatprep.subr.bf16.mxu0 %v1225
  %1753 = vmatpush1.bf16.msra.mxu0 %v1224
  %1754 = vmatprep.subr.bf16.mxu0 %v1241
  %1755 = vmatpush1.bf16.msra.mxu0 %v1240
  %1756 = vmatprep.subr.bf16.mxu0 %v1257
  %1757 = vmatpush1.bf16.msra.mxu0 %v1256
  %1758 = vmatprep.subr.bf16.mxu0 %v1273
  %1759 = vmatpush1.bf16.msra.mxu0 %v1272
  %1760 = vmatprep.subr.bf16.mxu0 %v1289
  %1761 = vmatpush1.bf16.msra.mxu0 %v1288
  %1762 = vmatprep.subr.bf16.mxu0 %v1305
  %1763 = vmatpush1.bf16.msra.mxu0 %v1304
  %1764 = vmatprep.mubr.bf16.mxu0 %v285
  %1765 = vmatmul.mubr.bf16.gmra.mrb[0].mxu0 %v284
  %v1766 = vpop.f32.mrb[0].mxu0
  %v1767 = vadd.f32 %v275, %v1766
  %v1768 = vpop.f32.mrb[0].mxu0
  %v1769 = vadd.f32 %v275, %v1768
  %v1770 = vpop.f32.mrb[0].mxu0
  %v1771 = vpop.f32.mrb[0].mxu0
  %1772 = vdwg.mxu0
  %1773 = vmatprep.subr.bf16.mxu0 %v1067
  %1774 = vmatpush1.bf16.msra.mxu0 %v1066
  %1775 = vmatprep.subr.bf16.mxu0 %v1083
  %1776 = vmatpush1.bf16.msra.mxu0 %v1082
  %1777 = vmatprep.subr.bf16.mxu0 %v1099
  %1778 = vmatpush1.bf16.msra.mxu0 %v1098
  %1779 = vmatprep.subr.bf16.mxu0 %v1115
  %1780 = vmatpush1.bf16.msra.mxu0 %v1114
  %1781 = vmatprep.subr.bf16.mxu0 %v1131
  %1782 = vmatpush1.bf16.msra.mxu0 %v1130
  %1783 = vmatprep.subr.bf16.mxu0 %v1147
  %1784 = vmatpush1.bf16.msra.mxu0 %v1146
  %1785 = vmatprep.subr.bf16.mxu0 %v1163
  %1786 = vmatpush1.bf16.msra.mxu0 %v1162
  %1787 = vmatprep.subr.bf16.mxu0 %v1179
  %1788 = vmatpush1.bf16.msra.mxu0 %v1178
  %1789 = vmatprep.subr.bf16.mxu0 %v1195
  %1790 = vmatpush1.bf16.msra.mxu0 %v1194
  %1791 = vmatprep.subr.bf16.mxu0 %v1211
  %1792 = vmatpush1.bf16.msra.mxu0 %v1210
  %1793 = vmatprep.subr.bf16.mxu0 %v1227
  %1794 = vmatpush1.bf16.msra.mxu0 %v1226
  %1795 = vmatprep.subr.bf16.mxu0 %v1243
  %1796 = vmatpush1.bf16.msra.mxu0 %v1242
  %1797 = vmatprep.subr.bf16.mxu0 %v1259
  %1798 = vmatpush1.bf16.msra.mxu0 %v1258
  %1799 = vmatprep.subr.bf16.mxu0 %v1275
  %1800 = vmatpush1.bf16.msra.mxu0 %v1274
  %1801 = vmatprep.subr.bf16.mxu0 %v1291
  %1802 = vmatpush1.bf16.msra.mxu0 %v1290
  %1803 = vmatprep.subr.bf16.mxu0 %v1307
  %1804 = vmatpush1.bf16.msra.mxu0 %v1306
  %1805 = vmatprep.mubr.bf16.mxu0 %v285
  %1806 = vmatmul.mubr.bf16.gmra.mrb[0].mxu0 %v284
  %v1807 = vpop.f32.mrb[0].mxu0
  %v1808 = vadd.f32 %v275, %v1807
  %v1809 = vpop.f32.mrb[0].mxu0
  %v1810 = vadd.f32 %v275, %v1809
  %v1811 = vpop.f32.mrb[0].mxu0
  %v1812 = vpop.f32.mrb[0].mxu0
  %1813 = vdwg.mxu0
  %1814 = vmatprep.subr.bf16.mxu0 %v1069
  %1815 = vmatpush1.bf16.msra.mxu0 %v1068
  %1816 = vmatprep.subr.bf16.mxu0 %v1085
  %1817 = vmatpush1.bf16.msra.mxu0 %v1084
  %1818 = vmatprep.subr.bf16.mxu0 %v1101
  %1819 = vmatpush1.bf16.msra.mxu0 %v1100
  %1820 = vmatprep.subr.bf16.mxu0 %v1117
  %1821 = vmatpush1.bf16.msra.mxu0 %v1116
  %1822 = vmatprep.subr.bf16.mxu0 %v1133
  %1823 = vmatpush1.bf16.msra.mxu0 %v1132
  %1824 = vmatprep.subr.bf16.mxu0 %v1149
  %1825 = vmatpush1.bf16.msra.mxu0 %v1148
  %1826 = vmatprep.subr.bf16.mxu0 %v1165
  %1827 = vmatpush1.bf16.msra.mxu0 %v1164
  %1828 = vmatprep.subr.bf16.mxu0 %v1181
  %1829 = vmatpush1.bf16.msra.mxu0 %v1180
  %1830 = vmatprep.subr.bf16.mxu0 %v1197
  %1831 = vmatpush1.bf16.msra.mxu0 %v1196
  %1832 = vmatprep.subr.bf16.mxu0 %v1213
  %1833 = vmatpush1.bf16.msra.mxu0 %v1212
  %1834 = vmatprep.subr.bf16.mxu0 %v1229
  %1835 = vmatpush1.bf16.msra.mxu0 %v1228
  %1836 = vmatprep.subr.bf16.mxu0 %v1245
  %1837 = vmatpush1.bf16.msra.mxu0 %v1244
  %1838 = vmatprep.subr.bf16.mxu0 %v1261
  %1839 = vmatpush1.bf16.msra.mxu0 %v1260
  %1840 = vmatprep.subr.bf16.mxu0 %v1277
  %1841 = vmatpush1.bf16.msra.mxu0 %v1276
  %1842 = vmatprep.subr.bf16.mxu0 %v1293
  %1843 = vmatpush1.bf16.msra.mxu0 %v1292
  %1844 = vmatprep.subr.bf16.mxu0 %v1309
  %1845 = vmatpush1.bf16.msra.mxu0 %v1308
  %1846 = vmatprep.mubr.bf16.mxu0 %v285
  %1847 = vmatmul.mubr.bf16.gmra.mrb[0].mxu0 %v284
  %v1848 = vpop.f32.mrb[0].mxu0
  %v1849 = vadd.f32 %v275, %v1848
  %v1850 = vpop.f32.mrb[0].mxu0
  %v1851 = vadd.f32 %v275, %v1850
  %v1852 = vpop.f32.mrb[0].mxu0
  %v1853 = vpop.f32.mrb[0].mxu0
  %1854 = vdwg.mxu0
  %1855 = vmatprep.subr.bf16.mxu0 %v1071
  %1856 = vmatpush1.bf16.msra.mxu0 %v1070
  %1857 = vmatprep.subr.bf16.mxu0 %v1087
  %1858 = vmatpush1.bf16.msra.mxu0 %v1086
  %1859 = vmatprep.subr.bf16.mxu0 %v1103
  %1860 = vmatpush1.bf16.msra.mxu0 %v1102
  %1861 = vmatprep.subr.bf16.mxu0 %v1119
  %1862 = vmatpush1.bf16.msra.mxu0 %v1118
  %1863 = vmatprep.subr.bf16.mxu0 %v1135
  %1864 = vmatpush1.bf16.msra.mxu0 %v1134
  %1865 = vmatprep.subr.bf16.mxu0 %v1151
  %1866 = vmatpush1.bf16.msra.mxu0 %v1150
  %1867 = vmatprep.subr.bf16.mxu0 %v1167
  %1868 = vmatpush1.bf16.msra.mxu0 %v1166
  %1869 = vmatprep.subr.bf16.mxu0 %v1183
  %1870 = vmatpush1.bf16.msra.mxu0 %v1182
  %1871 = vmatprep.subr.bf16.mxu0 %v1199
  %1872 = vmatpush1.bf16.msra.mxu0 %v1198
  %1873 = vmatprep.subr.bf16.mxu0 %v1215
  %1874 = vmatpush1.bf16.msra.mxu0 %v1214
  %1875 = vmatprep.subr.bf16.mxu0 %v1231
  %1876 = vmatpush1.bf16.msra.mxu0 %v1230
  %1877 = vmatprep.subr.bf16.mxu0 %v1247
  %1878 = vmatpush1.bf16.msra.mxu0 %v1246
  %1879 = vmatprep.subr.bf16.mxu0 %v1263
  %1880 = vmatpush1.bf16.msra.mxu0 %v1262
  %1881 = vmatprep.subr.bf16.mxu0 %v1279
  %1882 = vmatpush1.bf16.msra.mxu0 %v1278
  %1883 = vmatprep.subr.bf16.mxu0 %v1295
  %1884 = vmatpush1.bf16.msra.mxu0 %v1294
  %1885 = vmatprep.subr.bf16.mxu0 %v1311
  %1886 = vmatpush1.bf16.msra.mxu0 %v1310
  %1887 = vmatprep.mubr.bf16.mxu0 %v285
  %1888 = vmatmul.mubr.bf16.gmra.mrb[0].mxu0 %v284
  %v1889 = vpop.f32.mrb[0].mxu0
  %v1890 = vadd.f32 %v275, %v1889
  %v1891 = vpop.f32.mrb[0].mxu0
  %v1892 = vadd.f32 %v275, %v1891
  %v1893 = vpop.f32.mrb[0].mxu0
  %v1894 = vpop.f32.mrb[0].mxu0
  %1895 = vdwg.mxu0
  %v1896 = vtanh.pop %v1603
  %v1897 = vtanh.pop %v1605
  %v1898 = vtanh.pop %v1644
  %v1899 = vtanh.pop %v1646
  %v1900 = vtanh.pop %v1685
  %v1901 = vtanh.pop %v1687
  %v1902 = vtanh.pop %v1726
  %v1903 = vtanh.pop %v1728
  %v1904 = vtanh.pop %v1767
  %v1905 = vtanh.pop %v1769
  %v1906 = vtanh.pop %v1808
  %v1907 = vtanh.pop %v1810
  %v1908 = vtanh.pop %v1849
  %v1909 = vtanh.pop %v1851
  %v1910 = vtanh.pop %v1890
  %v1911 = vtanh.pop %v1892
  %v1928 = vcombine.low %v1896, %v1897
  %v1929 = vcombine.low %v1898, %v1899
  %v1930 = vcombine.low %v1900, %v1901
  %v1931 = vcombine.low %v1902, %v1903
  %v1932 = vcombine.low %v1904, %v1905
  %v1933 = vcombine.low %v1906, %v1907
  %v1934 = vcombine.low %v1908, %v1909
  %v1935 = vcombine.low %v1910, %v1911
  %1944 = vst [vmem:[%s3] sm:$0x77] %v1928
  %1945 = vst [vmem:[%s3 + $0x8] sm:$0x77] %v1929
  %1946 = vst [vmem:[%s3 + $0x10] sm:$0x77] %v1930
  %1947 = vst [vmem:[%s3 + $0x18] sm:$0x77] %v1931
  %1948 = vst [vmem:[%s3 + $0x20] sm:$0x77] %v1932
  %1949 = vst [vmem:[%s3 + $0x28] sm:$0x77] %v1933
  %1950 = vst [vmem:[%s3 + $0x30] sm:$0x77] %v1934
  %1951 = vst [vmem:[%s3 + $0x38] sm:$0x77] %v1935
  // Predicated region
  $region14: #{vq_cvae_forward.15} parent=0 // pred_check
    _
  $region15: #{vq_cvae_forward.15} parent=0 // pred_check_branch
    %1953 = sbr.rel (0) target = $region17
  $region16: #{vq_cvae_forward.15} parent=0 // pred_region
    _
  $region17: #{vq_cvae_forward.15} parent=0 // pred_fallthru
    _
  // Predicated region
  $region18: #{vq_cvae_forward.15} parent=0 // pred_check
    _
  $region19: #{vq_cvae_forward.15} parent=0 // pred_check_branch
    %1955 = sbr.rel (0) target = $region21
  $region20: #{vq_cvae_forward.15} parent=0 // pred_region
    _
  $region21: #{vq_cvae_forward.15} parent=0 // pred_fallthru
    _

</llo_original>
